<compile_context>
chip_gen: v6e
topology: v6e:2x2x1
jax: 0.10.0
libtpu: 0.0.40
codegen_flags: <defaults>
</compile_context>

<pallas_src>
import math

import jax
import jax.numpy as jnp
from jax import lax
from jax.experimental import pallas as pl
from jax.experimental.pallas import tpu as pltpu


def _erf(z):
    # Abramowitz & Stegun 7.1.26 rational approximation (max abs err ~1.5e-7),
    # built only from ops with guaranteed VPU/EUP lowerings.
    a1, a2, a3, a4, a5 = (0.254829592, -0.284496736, 1.421413741,
                          -1.453152027, 1.061405429)
    p = 0.3275911
    az = jnp.abs(z)
    t = 1.0 / (1.0 + p * az)
    poly = ((((a5 * t + a4) * t + a3) * t + a2) * t + a1) * t
    y = 1.0 - poly * jnp.exp(-az * az)
    return jnp.where(z >= 0.0, y, -y)


def _gelu_exact(x):
    # nn.GELU() default in PyTorch is the exact (erf-based) GELU.
    return 0.5 * x * (1.0 + _erf(x * 0.7071067811865476))


def cab_kernel(x_ref, w1_ref, b1_ref, w2_ref, b2_ref,
               wa1t_ref, ba1_ref, wa2_ref, ba2_ref,
               o_ref, hpad_ref):
    # x_ref: (B, H+2, W+2, C) -- already zero-padded in the wrapper.
    B, H, W, C = o_ref.shape
    C1 = w1_ref.shape[3]
    Csq = wa2_ref.shape[0]
    HW = H * W
    M = B * HW

    # ---- conv1: 3x3, stride 1, pad 1 -> nine shifted matmuls on the MXU ----
    acc1 = jnp.broadcast_to(b1_ref[...], (M, C1))          # bias-initialized accumulator
    for dy in range(3):
        for dx in range(3):
            patch = x_ref[:, dy:dy + H, dx:dx + W, :].reshape(M, C)
            acc1 = acc1 + jnp.dot(patch, w1_ref[dy, dx, :, :],
                                  preferred_element_type=jnp.float32)
    h = _gelu_exact(acc1)                                   # (M, C1)

    # ---- stash hidden activation in a padded scratch (border-only zeroing) ----
    zrow = jnp.zeros((B, 1, W + 2, C1), jnp.float32)
    hpad_ref[:, 0:1, :, :] = zrow
    hpad_ref[:, H + 1:H + 2, :, :] = zrow
    zcol = jnp.zeros((B, H, 1, C1), jnp.float32)
    hpad_ref[:, 1:H + 1, 0:1, :] = zcol
    hpad_ref[:, 1:H + 1, W + 1:W + 2, :] = zcol
    hpad_ref[:, 1:H + 1, 1:W + 1, :] = h.reshape(B, H, W, C1)

    # ---- conv2: 3x3, stride 1, pad 1 ----
    acc2 = jnp.broadcast_to(b2_ref[...], (M, C))
    for dy in range(3):
        for dx in range(3):
            patch = hpad_ref[:, dy:dy + H, dx:dx + W, :].reshape(M, C1)
            acc2 = acc2 + jnp.dot(patch, w2_ref[dy, dx, :, :],
                                  preferred_element_type=jnp.float32)

    # ---- ChannelAttention: GAP -> 1x1 -> ReLU -> 1x1 -> sigmoid (VPU only) ----
    inv_hw = 1.0 / float(HW)
    ba2 = ba2_ref[...]                                      # (1, C)
    for b in range(B):                                      # B is small (<= a few)
        yb = acc2[b * HW:(b + 1) * HW, :]                   # (HW, C), 8-aligned slice
        pooled = jnp.sum(yb, axis=0, keepdims=True) * inv_hw   # (1, C)
        s = ba2
        for d in range(Csq):                                # Csq is tiny (e.g. 2)
            a_d = jnp.sum(pooled * wa1t_ref[d:d + 1, :], axis=-1, keepdims=True)
            a_d = jnp.maximum(a_d + ba1_ref[0:1, d:d + 1], 0.0)   # (1, 1)
            s = s + a_d * wa2_ref[d:d + 1, :]               # (1, C)
        scale = 1.0 / (1.0 + jnp.exp(-s))                   # sigmoid, (1, C)
        o_ref[b:b + 1, :, :, :] = (yb * scale).reshape(1, H, W, C)


def cab_forward(x, params):
    """x: (N, H, W, C) float32; params as produced in __main__ (HWIO conv weights)."""
    w1, b1, w2, b2, wa1, ba1, wa2, ba2 = params
    N, H, W, C = x.shape
    C1 = w1.shape[3]
    Csq = wa1.shape[1]

    # Batch-block size: aim for ~256 matmul rows per grid step (fills the MXU and
    # amortizes per-step overhead) while staying a divisor of N and within VMEM.
    target = max(1, 256 // (H * W))
    B = 1
    for b in range(1, N + 1):
        if N % b == 0 and b <= target:
            bytes_est = 4 * b * (2 * (H + 2) * (W + 2) * C
                                 + (H + 2) * (W + 2) * C1
                                 + 2 * H * W * C)
            if bytes_est <= (24 << 20):
                B = b

    # Pre-pad the input once in the wrapper; pass the attention fc1 weight transposed
    # so its rows are lane-aligned (1, C) slices inside the kernel.
    xp = jnp.pad(x, ((0, 0), (1, 1), (1, 1), (0, 0)))
    wa1_t = jnp.transpose(wa1)                              # (Csq, C)

    def const(shape):
        zeros = (0,) * len(shape)
        return pl.BlockSpec(shape, lambda n, _z=zeros: _z)

    grid_spec = pltpu.PrefetchScalarGridSpec(
        num_scalar_prefetch=0,
        grid=(N // B,),
        in_specs=[
            pl.BlockSpec((B, H + 2, W + 2, C), lambda n: (n, 0, 0, 0)),  # padded x
            const((3, 3, C, C1)), const((1, C1)),                        # conv1 w, b
            const((3, 3, C1, C)), const((1, C)),                         # conv2 w, b
            const((Csq, C)), const((1, Csq)),                            # attn fc1 (w^T, b)
            const((Csq, C)), const((1, C)),                              # attn fc2 (w, b)
        ],
        out_specs=pl.BlockSpec((B, H, W, C), lambda n: (n, 0, 0, 0)),
        scratch_shapes=[
            pltpu.VMEM((B, H + 2, W + 2, C1), jnp.float32),   # zero-bordered hidden
        ],
    )
    return pl.pallas_call(
        cab_kernel,
        out_shape=jax.ShapeDtypeStruct((N, H, W, C), jnp.float32),
        grid_spec=grid_spec,
        compiler_params=pltpu.CompilerParams(
            dimension_semantics=("parallel",)),   # no cross-step state -> shardable
    )(xp, w1, b1, w2, b2, wa1_t, ba1, wa2, ba2)


def cab_reference(x, params):
    """Pure-JAX reference matching the PyTorch CAB forward (in NHWC), full f32."""
    w1, b1, w2, b2, wa1, ba1, wa2, ba2 = params
    dn = ('NHWC', 'HWIO', 'NHWC')
    hp = lax.Precision.HIGHEST
    y = lax.conv_general_dilated(x, w1, (1, 1), 'SAME', dimension_numbers=dn,
                                 precision=hp) + b1.reshape(1, 1, 1, -1)
    y = jax.nn.gelu(y, approximate=False)
    y = lax.conv_general_dilated(y, w2, (1, 1), 'SAME', dimension_numbers=dn,
                                 precision=hp) + b2.reshape(1, 1, 1, -1)
    pooled = jnp.mean(y, axis=(1, 2), keepdims=True)                    # (N,1,1,C)
    a = jnp.maximum(jnp.einsum('nhwc,cd->nhwd', pooled, wa1, precision=hp)
                    + ba1.reshape(1, 1, 1, -1), 0.0)
    s = jax.nn.sigmoid(jnp.einsum('nhwd,dc->nhwc', a, wa2, precision=hp)
                       + ba2.reshape(1, 1, 1, -1))
    return y * s


if __name__ == "__main__":
    # Small shapes consistent with CAB defaults (compress_ratio=3, squeeze_factor=30).
    N, H, W = 2, 8, 8
    num_feat, compress_ratio, squeeze_factor = 60, 3, 30
    C = num_feat
    C1 = num_feat // compress_ratio       # 20
    Csq = num_feat // squeeze_factor      # 2

    key = jax.random.PRNGKey(0)
    kx, k1, k2, k3, k4, k5, k6, k7, k8 = jax.random.split(key, 9)

    def u(k, shape, fan_in):
        bound = 1.0 / math.sqrt(fan_in)
        return jax.random.uniform(k, shape, jnp.float32, -bound, bound)

    # Deterministic parameter init (PyTorch-style uniform(-1/sqrt(fan_in), ...)).
    params = (
        u(k1, (3, 3, C, C1), 9 * C),   u(k2, (1, C1), 9 * C),    # conv1 w, b
        u(k3, (3, 3, C1, C), 9 * C1),  u(k4, (1, C), 9 * C1),    # conv2 w, b
        u(k5, (C, Csq), C),            u(k6, (1, Csq), C),       # attn 1x1 #1
        u(k7, (Csq, C), Csq),          u(k8, (1, C), Csq),       # attn 1x1 #2
    )
    x = jax.random.normal(kx, (N, H, W, C), jnp.float32)

    out = cab_forward(x, params)
    jax.block_until_ready(out)

    ref = cab_reference(x, params)
    assert out.shape == (N, H, W, C)
    err = float(jnp.max(jnp.abs(out - ref)))
    assert err < 5e-3, f"max abs err {err}"
    print("KERNEL_OK")
</pallas_src>

<mosaic_0001>
module attributes {stable_mosaic.version = 11 : i64} {
  func.func @cab_kernel(%arg0: i32, %arg1: memref<2x10x10x60xf32, #tpu.memory_space<vmem>>, %arg2: memref<3x3x60x20xf32, #tpu.memory_space<vmem>>, %arg3: memref<1x20xf32, #tpu.memory_space<vmem>>, %arg4: memref<3x3x20x60xf32, #tpu.memory_space<vmem>>, %arg5: memref<1x60xf32, #tpu.memory_space<vmem>>, %arg6: memref<2x60xf32, #tpu.memory_space<vmem>>, %arg7: memref<1x2xf32, #tpu.memory_space<vmem>>, %arg8: memref<2x60xf32, #tpu.memory_space<vmem>>, %arg9: memref<1x60xf32, #tpu.memory_space<vmem>>, %arg10: memref<2x8x8x60xf32, #tpu.memory_space<vmem>>, %arg11: memref<2x10x10x20xf32, #tpu.memory_space<vmem>>) attributes {dimension_semantics = [#tpu.dimension_semantics<parallel>], iteration_bounds = array<i64: 1>, scalar_prefetch = 0 : i64, scratch_operands = 1 : i64, tpu.core_type = #tpu.core_type<tc>, window_params = [{transform_indices = @transform_0, window_bounds = array<i64: 2, 10, 10, 60>}, {pipeline_mode = #tpu.pipeline_mode<synchronous>, transform_indices = @transform_1, window_bounds = array<i64: 3, 3, 60, 20>}, {pipeline_mode = #tpu.pipeline_mode<synchronous>, transform_indices = @transform_2, window_bounds = array<i64: 1, 20>}, {pipeline_mode = #tpu.pipeline_mode<synchronous>, transform_indices = @transform_3, window_bounds = array<i64: 3, 3, 20, 60>}, {pipeline_mode = #tpu.pipeline_mode<synchronous>, transform_indices = @transform_4, window_bounds = array<i64: 1, 60>}, {pipeline_mode = #tpu.pipeline_mode<synchronous>, transform_indices = @transform_5, window_bounds = array<i64: 2, 60>}, {pipeline_mode = #tpu.pipeline_mode<synchronous>, transform_indices = @transform_6, window_bounds = array<i64: 1, 2>}, {pipeline_mode = #tpu.pipeline_mode<synchronous>, transform_indices = @transform_7, window_bounds = array<i64: 2, 60>}, {pipeline_mode = #tpu.pipeline_mode<synchronous>, transform_indices = @transform_8, window_bounds = array<i64: 1, 60>}, {transform_indices = @transform_9, window_bounds = array<i64: 2, 8, 8, 60>}]} {
    %c0 = arith.constant 0 : index
    %c0_0 = arith.constant 0 : index
    %0 = vector.load %arg3[%c0, %c0_0] : memref<1x20xf32, #tpu.memory_space<vmem>>, vector<1x20xf32>
    %1 = vector.shape_cast %0 : vector<1x20xf32> to vector<1x20xf32>
    %2 = vector.broadcast %1 : vector<1x20xf32> to vector<128x20xf32>
    %c0_1 = arith.constant 0 : index
    %c0_2 = arith.constant 0 : index
    %c0_3 = arith.constant 0 : index
    %c0_4 = arith.constant 0 : index
    %3 = vector.load %arg1[%c0_1, %c0_2, %c0_3, %c0_4] : memref<2x10x10x60xf32, #tpu.memory_space<vmem>>, vector<2x8x8x60xf32>
    %4 = vector.shape_cast %3 : vector<2x8x8x60xf32> to vector<128x60xf32>
    %c0_5 = arith.constant 0 : index
    %c0_6 = arith.constant 0 : index
    %c0_7 = arith.constant 0 : index
    %c0_8 = arith.constant 0 : index
    %5 = vector.load %arg2[%c0_5, %c0_6, %c0_7, %c0_8] : memref<3x3x60x20xf32, #tpu.memory_space<vmem>>, vector<1x1x60x20xf32>
    %6 = vector.shape_cast %5 : vector<1x1x60x20xf32> to vector<60x20xf32>
    %cst = arith.constant dense<0.000000e+00> : vector<128x20xf32>
    %7 = tpu.matmul %4, %6, %cst {dimension_numbers = #tpu.dot_dimension_numbers<[1], [0], [0], [1], [0, 0, 1, 1], [], []>} : vector<128x60xf32>, vector<60x20xf32>, vector<128x20xf32> -> vector<128x20xf32>
    %8 = arith.addf %2, %7 : vector<128x20xf32>
    %c0_9 = arith.constant 0 : index
    %c0_10 = arith.constant 0 : index
    %c1 = arith.constant 1 : index
    %c0_11 = arith.constant 0 : index
    %9 = vector.load %arg1[%c0_9, %c0_10, %c1, %c0_11] : memref<2x10x10x60xf32, #tpu.memory_space<vmem>>, vector<2x8x8x60xf32>
    %10 = vector.shape_cast %9 : vector<2x8x8x60xf32> to vector<128x60xf32>
    %c0_12 = arith.constant 0 : index
    %c1_13 = arith.constant 1 : index
    %c0_14 = arith.constant 0 : index
    %c0_15 = arith.constant 0 : index
    %11 = vector.load %arg2[%c0_12, %c1_13, %c0_14, %c0_15] : memref<3x3x60x20xf32, #tpu.memory_space<vmem>>, vector<1x1x60x20xf32>
    %12 = vector.shape_cast %11 : vector<1x1x60x20xf32> to vector<60x20xf32>
    %cst_16 = arith.constant dense<0.000000e+00> : vector<128x20xf32>
    %13 = tpu.matmul %10, %12, %cst_16 {dimension_numbers = #tpu.dot_dimension_numbers<[1], [0], [0], [1], [0, 0, 1, 1], [], []>} : vector<128x60xf32>, vector<60x20xf32>, vector<128x20xf32> -> vector<128x20xf32>
    %14 = arith.addf %8, %13 : vector<128x20xf32>
    %c0_17 = arith.constant 0 : index
    %c0_18 = arith.constant 0 : index
    %c2 = arith.constant 2 : index
    %c0_19 = arith.constant 0 : index
    %15 = vector.load %arg1[%c0_17, %c0_18, %c2, %c0_19] : memref<2x10x10x60xf32, #tpu.memory_space<vmem>>, vector<2x8x8x60xf32>
    %16 = vector.shape_cast %15 : vector<2x8x8x60xf32> to vector<128x60xf32>
    %c0_20 = arith.constant 0 : index
    %c2_21 = arith.constant 2 : index
    %c0_22 = arith.constant 0 : index
    %c0_23 = arith.constant 0 : index
    %17 = vector.load %arg2[%c0_20, %c2_21, %c0_22, %c0_23] : memref<3x3x60x20xf32, #tpu.memory_space<vmem>>, vector<1x1x60x20xf32>
    %18 = vector.shape_cast %17 : vector<1x1x60x20xf32> to vector<60x20xf32>
    %cst_24 = arith.constant dense<0.000000e+00> : vector<128x20xf32>
    %19 = tpu.matmul %16, %18, %cst_24 {dimension_numbers = #tpu.dot_dimension_numbers<[1], [0], [0], [1], [0, 0, 1, 1], [], []>} : vector<128x60xf32>, vector<60x20xf32>, vector<128x20xf32> -> vector<128x20xf32>
    %20 = arith.addf %14, %19 : vector<128x20xf32>
    %c0_25 = arith.constant 0 : index
    %c1_26 = arith.constant 1 : index
    %c0_27 = arith.constant 0 : index
    %c0_28 = arith.constant 0 : index
    %21 = vector.load %arg1[%c0_25, %c1_26, %c0_27, %c0_28] : memref<2x10x10x60xf32, #tpu.memory_space<vmem>>, vector<2x8x8x60xf32>
    %22 = vector.shape_cast %21 : vector<2x8x8x60xf32> to vector<128x60xf32>
    %c1_29 = arith.constant 1 : index
    %c0_30 = arith.constant 0 : index
    %c0_31 = arith.constant 0 : index
    %c0_32 = arith.constant 0 : index
    %23 = vector.load %arg2[%c1_29, %c0_30, %c0_31, %c0_32] : memref<3x3x60x20xf32, #tpu.memory_space<vmem>>, vector<1x1x60x20xf32>
    %24 = vector.shape_cast %23 : vector<1x1x60x20xf32> to vector<60x20xf32>
    %cst_33 = arith.constant dense<0.000000e+00> : vector<128x20xf32>
    %25 = tpu.matmul %22, %24, %cst_33 {dimension_numbers = #tpu.dot_dimension_numbers<[1], [0], [0], [1], [0, 0, 1, 1], [], []>} : vector<128x60xf32>, vector<60x20xf32>, vector<128x20xf32> -> vector<128x20xf32>
    %26 = arith.addf %20, %25 : vector<128x20xf32>
    %c0_34 = arith.constant 0 : index
    %c1_35 = arith.constant 1 : index
    %c1_36 = arith.constant 1 : index
    %c0_37 = arith.constant 0 : index
    %27 = vector.load %arg1[%c0_34, %c1_35, %c1_36, %c0_37] : memref<2x10x10x60xf32, #tpu.memory_space<vmem>>, vector<2x8x8x60xf32>
    %28 = vector.shape_cast %27 : vector<2x8x8x60xf32> to vector<128x60xf32>
    %c1_38 = arith.constant 1 : index
    %c1_39 = arith.constant 1 : index
    %c0_40 = arith.constant 0 : index
    %c0_41 = arith.constant 0 : index
    %29 = vector.load %arg2[%c1_38, %c1_39, %c0_40, %c0_41] : memref<3x3x60x20xf32, #tpu.memory_space<vmem>>, vector<1x1x60x20xf32>
    %30 = vector.shape_cast %29 : vector<1x1x60x20xf32> to vector<60x20xf32>
    %cst_42 = arith.constant dense<0.000000e+00> : vector<128x20xf32>
    %31 = tpu.matmul %28, %30, %cst_42 {dimension_numbers = #tpu.dot_dimension_numbers<[1], [0], [0], [1], [0, 0, 1, 1], [], []>} : vector<128x60xf32>, vector<60x20xf32>, vector<128x20xf32> -> vector<128x20xf32>
    %32 = arith.addf %26, %31 : vector<128x20xf32>
    %c0_43 = arith.constant 0 : index
    %c1_44 = arith.constant 1 : index
    %c2_45 = arith.constant 2 : index
    %c0_46 = arith.constant 0 : index
    %33 = vector.load %arg1[%c0_43, %c1_44, %c2_45, %c0_46] : memref<2x10x10x60xf32, #tpu.memory_space<vmem>>, vector<2x8x8x60xf32>
    %34 = vector.shape_cast %33 : vector<2x8x8x60xf32> to vector<128x60xf32>
    %c1_47 = arith.constant 1 : index
    %c2_48 = arith.constant 2 : index
    %c0_49 = arith.constant 0 : index
    %c0_50 = arith.constant 0 : index
    %35 = vector.load %arg2[%c1_47, %c2_48, %c0_49, %c0_50] : memref<3x3x60x20xf32, #tpu.memory_space<vmem>>, vector<1x1x60x20xf32>
    %36 = vector.shape_cast %35 : vector<1x1x60x20xf32> to vector<60x20xf32>
    %cst_51 = arith.constant dense<0.000000e+00> : vector<128x20xf32>
    %37 = tpu.matmul %34, %36, %cst_51 {dimension_numbers = #tpu.dot_dimension_numbers<[1], [0], [0], [1], [0, 0, 1, 1], [], []>} : vector<128x60xf32>, vector<60x20xf32>, vector<128x20xf32> -> vector<128x20xf32>
    %38 = arith.addf %32, %37 : vector<128x20xf32>
    %c0_52 = arith.constant 0 : index
    %c2_53 = arith.constant 2 : index
    %c0_54 = arith.constant 0 : index
    %c0_55 = arith.constant 0 : index
    %39 = vector.load %arg1[%c0_52, %c2_53, %c0_54, %c0_55] : memref<2x10x10x60xf32, #tpu.memory_space<vmem>>, vector<2x8x8x60xf32>
    %40 = vector.shape_cast %39 : vector<2x8x8x60xf32> to vector<128x60xf32>
    %c2_56 = arith.constant 2 : index
    %c0_57 = arith.constant 0 : index
    %c0_58 = arith.constant 0 : index
    %c0_59 = arith.constant 0 : index
    %41 = vector.load %arg2[%c2_56, %c0_57, %c0_58, %c0_59] : memref<3x3x60x20xf32, #tpu.memory_space<vmem>>, vector<1x1x60x20xf32>
    %42 = vector.shape_cast %41 : vector<1x1x60x20xf32> to vector<60x20xf32>
    %cst_60 = arith.constant dense<0.000000e+00> : vector<128x20xf32>
    %43 = tpu.matmul %40, %42, %cst_60 {dimension_numbers = #tpu.dot_dimension_numbers<[1], [0], [0], [1], [0, 0, 1, 1], [], []>} : vector<128x60xf32>, vector<60x20xf32>, vector<128x20xf32> -> vector<128x20xf32>
    %44 = arith.addf %38, %43 : vector<128x20xf32>
    %c0_61 = arith.constant 0 : index
    %c2_62 = arith.constant 2 : index
    %c1_63 = arith.constant 1 : index
    %c0_64 = arith.constant 0 : index
    %45 = vector.load %arg1[%c0_61, %c2_62, %c1_63, %c0_64] : memref<2x10x10x60xf32, #tpu.memory_space<vmem>>, vector<2x8x8x60xf32>
    %46 = vector.shape_cast %45 : vector<2x8x8x60xf32> to vector<128x60xf32>
    %c2_65 = arith.constant 2 : index
    %c1_66 = arith.constant 1 : index
    %c0_67 = arith.constant 0 : index
    %c0_68 = arith.constant 0 : index
    %47 = vector.load %arg2[%c2_65, %c1_66, %c0_67, %c0_68] : memref<3x3x60x20xf32, #tpu.memory_space<vmem>>, vector<1x1x60x20xf32>
    %48 = vector.shape_cast %47 : vector<1x1x60x20xf32> to vector<60x20xf32>
    %cst_69 = arith.constant dense<0.000000e+00> : vector<128x20xf32>
    %49 = tpu.matmul %46, %48, %cst_69 {dimension_numbers = #tpu.dot_dimension_numbers<[1], [0], [0], [1], [0, 0, 1, 1], [], []>} : vector<128x60xf32>, vector<60x20xf32>, vector<128x20xf32> -> vector<128x20xf32>
    %50 = arith.addf %44, %49 : vector<128x20xf32>
    %c0_70 = arith.constant 0 : index
    %c2_71 = arith.constant 2 : index
    %c2_72 = arith.constant 2 : index
    %c0_73 = arith.constant 0 : index
    %51 = vector.load %arg1[%c0_70, %c2_71, %c2_72, %c0_73] : memref<2x10x10x60xf32, #tpu.memory_space<vmem>>, vector<2x8x8x60xf32>
    %52 = vector.shape_cast %51 : vector<2x8x8x60xf32> to vector<128x60xf32>
    %c2_74 = arith.constant 2 : index
    %c2_75 = arith.constant 2 : index
    %c0_76 = arith.constant 0 : index
    %c0_77 = arith.constant 0 : index
    %53 = vector.load %arg2[%c2_74, %c2_75, %c0_76, %c0_77] : memref<3x3x60x20xf32, #tpu.memory_space<vmem>>, vector<1x1x60x20xf32>
    %54 = vector.shape_cast %53 : vector<1x1x60x20xf32> to vector<60x20xf32>
    %cst_78 = arith.constant dense<0.000000e+00> : vector<128x20xf32>
    %55 = tpu.matmul %52, %54, %cst_78 {dimension_numbers = #tpu.dot_dimension_numbers<[1], [0], [0], [1], [0, 0, 1, 1], [], []>} : vector<128x60xf32>, vector<60x20xf32>, vector<128x20xf32> -> vector<128x20xf32>
    %56 = arith.addf %50, %55 : vector<128x20xf32>
    %cst_79 = arith.constant 5.000000e-01 : f32
    %57 = vector.broadcast %cst_79 : f32 to vector<128x20xf32>
    %58 = arith.mulf %57, %56 : vector<128x20xf32>
    %cst_80 = arith.constant 0.707106769 : f32
    %59 = vector.broadcast %cst_80 : f32 to vector<128x20xf32>
    %60 = arith.mulf %56, %59 : vector<128x20xf32>
    %61 = math.absf %60 : vector<128x20xf32>
    %cst_81 = arith.constant 0.327591091 : f32
    %62 = vector.broadcast %cst_81 : f32 to vector<128x20xf32>
    %63 = arith.mulf %62, %61 : vector<128x20xf32>
    %cst_82 = arith.constant 1.000000e+00 : f32
    %64 = vector.broadcast %cst_82 : f32 to vector<128x20xf32>
    %65 = arith.addf %64, %63 : vector<128x20xf32>
    %cst_83 = arith.constant 1.000000e+00 : f32
    %66 = vector.broadcast %cst_83 : f32 to vector<128x20xf32>
    %67 = arith.divf %66, %65 : vector<128x20xf32>
    %cst_84 = arith.constant 1.06140542 : f32
    %68 = vector.broadcast %cst_84 : f32 to vector<128x20xf32>
    %69 = arith.mulf %68, %67 : vector<128x20xf32>
    %cst_85 = arith.constant -1.45315206 : f32
    %70 = vector.broadcast %cst_85 : f32 to vector<128x20xf32>
    %71 = arith.addf %69, %70 : vector<128x20xf32>
    %72 = arith.mulf %71, %67 : vector<128x20xf32>
    %cst_86 = arith.constant 1.42141378 : f32
    %73 = vector.broadcast %cst_86 : f32 to vector<128x20xf32>
    %74 = arith.addf %72, %73 : vector<128x20xf32>
    %75 = arith.mulf %74, %67 : vector<128x20xf32>
    %cst_87 = arith.constant -0.284496725 : f32
    %76 = vector.broadcast %cst_87 : f32 to vector<128x20xf32>
    %77 = arith.addf %75, %76 : vector<128x20xf32>
    %78 = arith.mulf %77, %67 : vector<128x20xf32>
    %cst_88 = arith.constant 0.254829586 : f32
    %79 = vector.broadcast %cst_88 : f32 to vector<128x20xf32>
    %80 = arith.addf %78, %79 : vector<128x20xf32>
    %81 = arith.mulf %80, %67 : vector<128x20xf32>
    %cst_89 = arith.constant 0.000000e+00 : f32
    %82 = vector.broadcast %cst_89 : f32 to vector<128x20xf32>
    %83 = arith.subf %82, %61 : vector<128x20xf32>
    %84 = arith.mulf %83, %61 : vector<128x20xf32>
    %85 = math.exp %84 : vector<128x20xf32>
    %86 = arith.mulf %81, %85 : vector<128x20xf32>
    %cst_90 = arith.constant 1.000000e+00 : f32
    %87 = vector.broadcast %cst_90 : f32 to vector<128x20xf32>
    %88 = arith.subf %87, %86 : vector<128x20xf32>
    %cst_91 = arith.constant 0.000000e+00 : f32
    %89 = vector.broadcast %cst_91 : f32 to vector<128x20xf32>
    %90 = arith.cmpf oge, %60, %89 : vector<128x20xf32>
    %cst_92 = arith.constant 0.000000e+00 : f32
    %91 = vector.broadcast %cst_92 : f32 to vector<128x20xf32>
    %92 = arith.subf %91, %88 : vector<128x20xf32>
    %93 = arith.select %90, %88, %92 : vector<128x20xi1>, vector<128x20xf32>
    %cst_93 = arith.constant 1.000000e+00 : f32
    %94 = vector.broadcast %cst_93 : f32 to vector<128x20xf32>
    %95 = arith.addf %94, %93 : vector<128x20xf32>
    %96 = arith.mulf %58, %95 : vector<128x20xf32>
    %cst_94 = arith.constant 0.000000e+00 : f32
    %97 = vector.broadcast %cst_94 : f32 to vector<2x1x10x20xf32>
    %c0_95 = arith.constant 0 : index
    %c0_96 = arith.constant 0 : index
    %c0_97 = arith.constant 0 : index
    %c0_98 = arith.constant 0 : index
    %98 = vector.load %arg11[%c0_95, %c0_96, %c0_97, %c0_98] : memref<2x10x10x20xf32, #tpu.memory_space<vmem>>, vector<2x1x10x20xf32>
    tpu.vector_store %arg11[%c0_95, %c0_96, %c0_97, %c0_98], %97 {strides = array<i32>} : memref<2x10x10x20xf32, #tpu.memory_space<vmem>>, vector<2x1x10x20xf32>,
    %c0_99 = arith.constant 0 : index
    %c9 = arith.constant 9 : index
    %c0_100 = arith.constant 0 : index
    %c0_101 = arith.constant 0 : index
    %99 = vector.load %arg11[%c0_99, %c9, %c0_100, %c0_101] : memref<2x10x10x20xf32, #tpu.memory_space<vmem>>, vector<2x1x10x20xf32>
    tpu.vector_store %arg11[%c0_99, %c9, %c0_100, %c0_101], %97 {strides = array<i32>} : memref<2x10x10x20xf32, #tpu.memory_space<vmem>>, vector<2x1x10x20xf32>,
    %cst_102 = arith.constant 0.000000e+00 : f32
    %100 = vector.broadcast %cst_102 : f32 to vector<2x8x1x20xf32>
    %c0_103 = arith.constant 0 : index
    %c1_104 = arith.constant 1 : index
    %c0_105 = arith.constant 0 : index
    %c0_106 = arith.constant 0 : index
    %101 = vector.load %arg11[%c0_103, %c1_104, %c0_105, %c0_106] : memref<2x10x10x20xf32, #tpu.memory_space<vmem>>, vector<2x8x1x20xf32>
    tpu.vector_store %arg11[%c0_103, %c1_104, %c0_105, %c0_106], %100 {strides = array<i32>} : memref<2x10x10x20xf32, #tpu.memory_space<vmem>>, vector<2x8x1x20xf32>,
    %c0_107 = arith.constant 0 : index
    %c1_108 = arith.constant 1 : index
    %c9_109 = arith.constant 9 : index
    %c0_110 = arith.constant 0 : index
    %102 = vector.load %arg11[%c0_107, %c1_108, %c9_109, %c0_110] : memref<2x10x10x20xf32, #tpu.memory_space<vmem>>, vector<2x8x1x20xf32>
    tpu.vector_store %arg11[%c0_107, %c1_108, %c9_109, %c0_110], %100 {strides = array<i32>} : memref<2x10x10x20xf32, #tpu.memory_space<vmem>>, vector<2x8x1x20xf32>,
    %103 = vector.shape_cast %96 : vector<128x20xf32> to vector<2x8x8x20xf32>
    %c0_111 = arith.constant 0 : index
    %c1_112 = arith.constant 1 : index
    %c1_113 = arith.constant 1 : index
    %c0_114 = arith.constant 0 : index
    %104 = vector.load %arg11[%c0_111, %c1_112, %c1_113, %c0_114] : memref<2x10x10x20xf32, #tpu.memory_space<vmem>>, vector<2x8x8x20xf32>
    tpu.vector_store %arg11[%c0_111, %c1_112, %c1_113, %c0_114], %103 {strides = array<i32>} : memref<2x10x10x20xf32, #tpu.memory_space<vmem>>, vector<2x8x8x20xf32>,
    %c0_115 = arith.constant 0 : index
    %c0_116 = arith.constant 0 : index
    %105 = vector.load %arg5[%c0_115, %c0_116] : memref<1x60xf32, #tpu.memory_space<vmem>>, vector<1x60xf32>
    %106 = vector.shape_cast %105 : vector<1x60xf32> to vector<1x60xf32>
    %107 = vector.broadcast %106 : vector<1x60xf32> to vector<128x60xf32>
    %c0_117 = arith.constant 0 : index
    %c0_118 = arith.constant 0 : index
    %c0_119 = arith.constant 0 : index
    %c0_120 = arith.constant 0 : index
    %108 = vector.load %arg11[%c0_117, %c0_118, %c0_119, %c0_120] : memref<2x10x10x20xf32, #tpu.memory_space<vmem>>, vector<2x8x8x20xf32>
    %109 = vector.shape_cast %108 : vector<2x8x8x20xf32> to vector<128x20xf32>
    %c0_121 = arith.constant 0 : index
    %c0_122 = arith.constant 0 : index
    %c0_123 = arith.constant 0 : index
    %c0_124 = arith.constant 0 : index
    %110 = vector.load %arg4[%c0_121, %c0_122, %c0_123, %c0_124] : memref<3x3x20x60xf32, #tpu.memory_space<vmem>>, vector<1x1x20x60xf32>
    %111 = vector.shape_cast %110 : vector<1x1x20x60xf32> to vector<20x60xf32>
    %cst_125 = arith.constant dense<0.000000e+00> : vector<128x60xf32>
    %112 = tpu.matmul %109, %111, %cst_125 {dimension_numbers = #tpu.dot_dimension_numbers<[1], [0], [0], [1], [0, 0, 1, 1], [], []>} : vector<128x20xf32>, vector<20x60xf32>, vector<128x60xf32> -> vector<128x60xf32>
    %113 = arith.addf %107, %112 : vector<128x60xf32>
    %c0_126 = arith.constant 0 : index
    %c0_127 = arith.constant 0 : index
    %c1_128 = arith.constant 1 : index
    %c0_129 = arith.constant 0 : index
    %114 = vector.load %arg11[%c0_126, %c0_127, %c1_128, %c0_129] : memref<2x10x10x20xf32, #tpu.memory_space<vmem>>, vector<2x8x8x20xf32>
    %115 = vector.shape_cast %114 : vector<2x8x8x20xf32> to vector<128x20xf32>
    %c0_130 = arith.constant 0 : index
    %c1_131 = arith.constant 1 : index
    %c0_132 = arith.constant 0 : index
    %c0_133 = arith.constant 0 : index
    %116 = vector.load %arg4[%c0_130, %c1_131, %c0_132, %c0_133] : memref<3x3x20x60xf32, #tpu.memory_space<vmem>>, vector<1x1x20x60xf32>
    %117 = vector.shape_cast %116 : vector<1x1x20x60xf32> to vector<20x60xf32>
    %cst_134 = arith.constant dense<0.000000e+00> : vector<128x60xf32>
    %118 = tpu.matmul %115, %117, %cst_134 {dimension_numbers = #tpu.dot_dimension_numbers<[1], [0], [0], [1], [0, 0, 1, 1], [], []>} : vector<128x20xf32>, vector<20x60xf32>, vector<128x60xf32> -> vector<128x60xf32>
    %119 = arith.addf %113, %118 : vector<128x60xf32>
    %c0_135 = arith.constant 0 : index
    %c0_136 = arith.constant 0 : index
    %c2_137 = arith.constant 2 : index
    %c0_138 = arith.constant 0 : index
    %120 = vector.load %arg11[%c0_135, %c0_136, %c2_137, %c0_138] : memref<2x10x10x20xf32, #tpu.memory_space<vmem>>, vector<2x8x8x20xf32>
    %121 = vector.shape_cast %120 : vector<2x8x8x20xf32> to vector<128x20xf32>
    %c0_139 = arith.constant 0 : index
    %c2_140 = arith.constant 2 : index
    %c0_141 = arith.constant 0 : index
    %c0_142 = arith.constant 0 : index
    %122 = vector.load %arg4[%c0_139, %c2_140, %c0_141, %c0_142] : memref<3x3x20x60xf32, #tpu.memory_space<vmem>>, vector<1x1x20x60xf32>
    %123 = vector.shape_cast %122 : vector<1x1x20x60xf32> to vector<20x60xf32>
    %cst_143 = arith.constant dense<0.000000e+00> : vector<128x60xf32>
    %124 = tpu.matmul %121, %123, %cst_143 {dimension_numbers = #tpu.dot_dimension_numbers<[1], [0], [0], [1], [0, 0, 1, 1], [], []>} : vector<128x20xf32>, vector<20x60xf32>, vector<128x60xf32> -> vector<128x60xf32>
    %125 = arith.addf %119, %124 : vector<128x60xf32>
    %c0_144 = arith.constant 0 : index
    %c1_145 = arith.constant 1 : index
    %c0_146 = arith.constant 0 : index
    %c0_147 = arith.constant 0 : index
    %126 = vector.load %arg11[%c0_144, %c1_145, %c0_146, %c0_147] : memref<2x10x10x20xf32, #tpu.memory_space<vmem>>, vector<2x8x8x20xf32>
    %127 = vector.shape_cast %126 : vector<2x8x8x20xf32> to vector<128x20xf32>
    %c1_148 = arith.constant 1 : index
    %c0_149 = arith.constant 0 : index
    %c0_150 = arith.constant 0 : index
    %c0_151 = arith.constant 0 : index
    %128 = vector.load %arg4[%c1_148, %c0_149, %c0_150, %c0_151] : memref<3x3x20x60xf32, #tpu.memory_space<vmem>>, vector<1x1x20x60xf32>
    %129 = vector.shape_cast %128 : vector<1x1x20x60xf32> to vector<20x60xf32>
    %cst_152 = arith.constant dense<0.000000e+00> : vector<128x60xf32>
    %130 = tpu.matmul %127, %129, %cst_152 {dimension_numbers = #tpu.dot_dimension_numbers<[1], [0], [0], [1], [0, 0, 1, 1], [], []>} : vector<128x20xf32>, vector<20x60xf32>, vector<128x60xf32> -> vector<128x60xf32>
    %131 = arith.addf %125, %130 : vector<128x60xf32>
    %c0_153 = arith.constant 0 : index
    %c1_154 = arith.constant 1 : index
    %c1_155 = arith.constant 1 : index
    %c0_156 = arith.constant 0 : index
    %132 = vector.load %arg11[%c0_153, %c1_154, %c1_155, %c0_156] : memref<2x10x10x20xf32, #tpu.memory_space<vmem>>, vector<2x8x8x20xf32>
    %133 = vector.shape_cast %132 : vector<2x8x8x20xf32> to vector<128x20xf32>
    %c1_157 = arith.constant 1 : index
    %c1_158 = arith.constant 1 : index
    %c0_159 = arith.constant 0 : index
    %c0_160 = arith.constant 0 : index
    %134 = vector.load %arg4[%c1_157, %c1_158, %c0_159, %c0_160] : memref<3x3x20x60xf32, #tpu.memory_space<vmem>>, vector<1x1x20x60xf32>
    %135 = vector.shape_cast %134 : vector<1x1x20x60xf32> to vector<20x60xf32>
    %cst_161 = arith.constant dense<0.000000e+00> : vector<128x60xf32>
    %136 = tpu.matmul %133, %135, %cst_161 {dimension_numbers = #tpu.dot_dimension_numbers<[1], [0], [0], [1], [0, 0, 1, 1], [], []>} : vector<128x20xf32>, vector<20x60xf32>, vector<128x60xf32> -> vector<128x60xf32>
    %137 = arith.addf %131, %136 : vector<128x60xf32>
    %c0_162 = arith.constant 0 : index
    %c1_163 = arith.constant 1 : index
    %c2_164 = arith.constant 2 : index
    %c0_165 = arith.constant 0 : index
    %138 = vector.load %arg11[%c0_162, %c1_163, %c2_164, %c0_165] : memref<2x10x10x20xf32, #tpu.memory_space<vmem>>, vector<2x8x8x20xf32>
    %139 = vector.shape_cast %138 : vector<2x8x8x20xf32> to vector<128x20xf32>
    %c1_166 = arith.constant 1 : index
    %c2_167 = arith.constant 2 : index
    %c0_168 = arith.constant 0 : index
    %c0_169 = arith.constant 0 : index
    %140 = vector.load %arg4[%c1_166, %c2_167, %c0_168, %c0_169] : memref<3x3x20x60xf32, #tpu.memory_space<vmem>>, vector<1x1x20x60xf32>
    %141 = vector.shape_cast %140 : vector<1x1x20x60xf32> to vector<20x60xf32>
    %cst_170 = arith.constant dense<0.000000e+00> : vector<128x60xf32>
    %142 = tpu.matmul %139, %141, %cst_170 {dimension_numbers = #tpu.dot_dimension_numbers<[1], [0], [0], [1], [0, 0, 1, 1], [], []>} : vector<128x20xf32>, vector<20x60xf32>, vector<128x60xf32> -> vector<128x60xf32>
    %143 = arith.addf %137, %142 : vector<128x60xf32>
    %c0_171 = arith.constant 0 : index
    %c2_172 = arith.constant 2 : index
    %c0_173 = arith.constant 0 : index
    %c0_174 = arith.constant 0 : index
    %144 = vector.load %arg11[%c0_171, %c2_172, %c0_173, %c0_174] : memref<2x10x10x20xf32, #tpu.memory_space<vmem>>, vector<2x8x8x20xf32>
    %145 = vector.shape_cast %144 : vector<2x8x8x20xf32> to vector<128x20xf32>
    %c2_175 = arith.constant 2 : index
    %c0_176 = arith.constant 0 : index
    %c0_177 = arith.constant 0 : index
    %c0_178 = arith.constant 0 : index
    %146 = vector.load %arg4[%c2_175, %c0_176, %c0_177, %c0_178] : memref<3x3x20x60xf32, #tpu.memory_space<vmem>>, vector<1x1x20x60xf32>
    %147 = vector.shape_cast %146 : vector<1x1x20x60xf32> to vector<20x60xf32>
    %cst_179 = arith.constant dense<0.000000e+00> : vector<128x60xf32>
    %148 = tpu.matmul %145, %147, %cst_179 {dimension_numbers = #tpu.dot_dimension_numbers<[1], [0], [0], [1], [0, 0, 1, 1], [], []>} : vector<128x20xf32>, vector<20x60xf32>, vector<128x60xf32> -> vector<128x60xf32>
    %149 = arith.addf %143, %148 : vector<128x60xf32>
    %c0_180 = arith.constant 0 : index
    %c2_181 = arith.constant 2 : index
    %c1_182 = arith.constant 1 : index
    %c0_183 = arith.constant 0 : index
    %150 = vector.load %arg11[%c0_180, %c2_181, %c1_182, %c0_183] : memref<2x10x10x20xf32, #tpu.memory_space<vmem>>, vector<2x8x8x20xf32>
    %151 = vector.shape_cast %150 : vector<2x8x8x20xf32> to vector<128x20xf32>
    %c2_184 = arith.constant 2 : index
    %c1_185 = arith.constant 1 : index
    %c0_186 = arith.constant 0 : index
    %c0_187 = arith.constant 0 : index
    %152 = vector.load %arg4[%c2_184, %c1_185, %c0_186, %c0_187] : memref<3x3x20x60xf32, #tpu.memory_space<vmem>>, vector<1x1x20x60xf32>
    %153 = vector.shape_cast %152 : vector<1x1x20x60xf32> to vector<20x60xf32>
    %cst_188 = arith.constant dense<0.000000e+00> : vector<128x60xf32>
    %154 = tpu.matmul %151, %153, %cst_188 {dimension_numbers = #tpu.dot_dimension_numbers<[1], [0], [0], [1], [0, 0, 1, 1], [], []>} : vector<128x20xf32>, vector<20x60xf32>, vector<128x60xf32> -> vector<128x60xf32>
    %155 = arith.addf %149, %154 : vector<128x60xf32>
    %c0_189 = arith.constant 0 : index
    %c2_190 = arith.constant 2 : index
    %c2_191 = arith.constant 2 : index
    %c0_192 = arith.constant 0 : index
    %156 = vector.load %arg11[%c0_189, %c2_190, %c2_191, %c0_192] : memref<2x10x10x20xf32, #tpu.memory_space<vmem>>, vector<2x8x8x20xf32>
    %157 = vector.shape_cast %156 : vector<2x8x8x20xf32> to vector<128x20xf32>
    %c2_193 = arith.constant 2 : index
    %c2_194 = arith.constant 2 : index
    %c0_195 = arith.constant 0 : index
    %c0_196 = arith.constant 0 : index
    %158 = vector.load %arg4[%c2_193, %c2_194, %c0_195, %c0_196] : memref<3x3x20x60xf32, #tpu.memory_space<vmem>>, vector<1x1x20x60xf32>
    %159 = vector.shape_cast %158 : vector<1x1x20x60xf32> to vector<20x60xf32>
    %cst_197 = arith.constant dense<0.000000e+00> : vector<128x60xf32>
    %160 = tpu.matmul %157, %159, %cst_197 {dimension_numbers = #tpu.dot_dimension_numbers<[1], [0], [0], [1], [0, 0, 1, 1], [], []>} : vector<128x20xf32>, vector<20x60xf32>, vector<128x60xf32> -> vector<128x60xf32>
    %161 = arith.addf %155, %160 : vector<128x60xf32>
    %c0_198 = arith.constant 0 : index
    %c0_199 = arith.constant 0 : index
    %162 = vector.load %arg9[%c0_198, %c0_199] : memref<1x60xf32, #tpu.memory_space<vmem>>, vector<1x60xf32>
    %163 = vector.extract_strided_slice %161 {offsets = [0, 0], sizes = [64, 60], strides = [1, 1]} : vector<128x60xf32> to vector<64x60xf32>
    %cst_200 = arith.constant dense<0.000000e+00> : vector<60xf32>
    %164 = vector.multi_reduction <add>, %163, %cst_200 [0] : vector<64x60xf32> to vector<60xf32>
    %165 = vector.shape_cast %164 : vector<60xf32> to vector<1x60xf32>
    %cst_201 = arith.constant 1.562500e-02 : f32
    %166 = vector.broadcast %cst_201 : f32 to vector<1x60xf32>
    %167 = arith.mulf %165, %166 : vector<1x60xf32>
    %c0_202 = arith.constant 0 : index
    %c0_203 = arith.constant 0 : index
    %168 = vector.load %arg6[%c0_202, %c0_203] : memref<2x60xf32, #tpu.memory_space<vmem>>, vector<1x60xf32>
    %169 = arith.mulf %167, %168 : vector<1x60xf32>
    %cst_204 = arith.constant dense<0.000000e+00> : vector<1xf32>
    %170 = vector.multi_reduction <add>, %169, %cst_204 [1] : vector<1x60xf32> to vector<1xf32>
    %171 = vector.shape_cast %170 : vector<1xf32> to vector<1x1xf32>
    %c0_205 = arith.constant 0 : index
    %c0_206 = arith.constant 0 : index
    %172 = vector.load %arg7[%c0_205, %c0_206] : memref<1x2xf32, #tpu.memory_space<vmem>>, vector<1x1xf32>
    %173 = arith.addf %171, %172 : vector<1x1xf32>
    %cst_207 = arith.constant 0.000000e+00 : f32
    %174 = vector.broadcast %cst_207 : f32 to vector<1x1xf32>
    %175 = arith.maximumf %173, %174 : vector<1x1xf32>
    %c0_208 = arith.constant 0 : index
    %c0_209 = arith.constant 0 : index
    %176 = vector.load %arg8[%c0_208, %c0_209] : memref<2x60xf32, #tpu.memory_space<vmem>>, vector<1x60xf32>
    %177 = vector.broadcast %175 : vector<1x1xf32> to vector<1x60xf32>
    %178 = arith.mulf %177, %176 : vector<1x60xf32>
    %179 = arith.addf %162, %178 : vector<1x60xf32>
    %c1_210 = arith.constant 1 : index
    %c0_211 = arith.constant 0 : index
    %180 = vector.load %arg6[%c1_210, %c0_211] : memref<2x60xf32, #tpu.memory_space<vmem>>, vector<1x60xf32>
    %181 = arith.mulf %167, %180 : vector<1x60xf32>
    %cst_212 = arith.constant dense<0.000000e+00> : vector<1xf32>
    %182 = vector.multi_reduction <add>, %181, %cst_212 [1] : vector<1x60xf32> to vector<1xf32>
    %183 = vector.shape_cast %182 : vector<1xf32> to vector<1x1xf32>
    %c0_213 = arith.constant 0 : index
    %c1_214 = arith.constant 1 : index
    %184 = vector.load %arg7[%c0_213, %c1_214] : memref<1x2xf32, #tpu.memory_space<vmem>>, vector<1x1xf32>
    %185 = arith.addf %183, %184 : vector<1x1xf32>
    %cst_215 = arith.constant 0.000000e+00 : f32
    %186 = vector.broadcast %cst_215 : f32 to vector<1x1xf32>
    %187 = arith.maximumf %185, %186 : vector<1x1xf32>
    %c1_216 = arith.constant 1 : index
    %c0_217 = arith.constant 0 : index
    %188 = vector.load %arg8[%c1_216, %c0_217] : memref<2x60xf32, #tpu.memory_space<vmem>>, vector<1x60xf32>
    %189 = vector.broadcast %187 : vector<1x1xf32> to vector<1x60xf32>
    %190 = arith.mulf %189, %188 : vector<1x60xf32>
    %191 = arith.addf %179, %190 : vector<1x60xf32>
    %cst_218 = arith.constant 0.000000e+00 : f32
    %192 = vector.broadcast %cst_218 : f32 to vector<1x60xf32>
    %193 = arith.subf %192, %191 : vector<1x60xf32>
    %194 = math.exp %193 : vector<1x60xf32>
    %cst_219 = arith.constant 1.000000e+00 : f32
    %195 = vector.broadcast %cst_219 : f32 to vector<1x60xf32>
    %196 = arith.addf %195, %194 : vector<1x60xf32>
    %cst_220 = arith.constant 1.000000e+00 : f32
    %197 = vector.broadcast %cst_220 : f32 to vector<1x60xf32>
    %198 = arith.divf %197, %196 : vector<1x60xf32>
    %199 = vector.broadcast %198 : vector<1x60xf32> to vector<64x60xf32>
    %200 = arith.mulf %163, %199 : vector<64x60xf32>
    %201 = vector.shape_cast %200 : vector<64x60xf32> to vector<1x8x8x60xf32>
    %c0_221 = arith.constant 0 : index
    %c0_222 = arith.constant 0 : index
    %c0_223 = arith.constant 0 : index
    %c0_224 = arith.constant 0 : index
    %202 = vector.load %arg10[%c0_221, %c0_222, %c0_223, %c0_224] : memref<2x8x8x60xf32, #tpu.memory_space<vmem>>, vector<1x8x8x60xf32>
    tpu.vector_store %arg10[%c0_221, %c0_222, %c0_223, %c0_224], %201 {strides = array<i32>} : memref<2x8x8x60xf32, #tpu.memory_space<vmem>>, vector<1x8x8x60xf32>,
    %203 = vector.extract_strided_slice %161 {offsets = [64, 0], sizes = [64, 60], strides = [1, 1]} : vector<128x60xf32> to vector<64x60xf32>
    %cst_225 = arith.constant dense<0.000000e+00> : vector<60xf32>
    %204 = vector.multi_reduction <add>, %203, %cst_225 [0] : vector<64x60xf32> to vector<60xf32>
    %205 = vector.shape_cast %204 : vector<60xf32> to vector<1x60xf32>
    %cst_226 = arith.constant 1.562500e-02 : f32
    %206 = vector.broadcast %cst_226 : f32 to vector<1x60xf32>
    %207 = arith.mulf %205, %206 : vector<1x60xf32>
    %c0_227 = arith.constant 0 : index
    %c0_228 = arith.constant 0 : index
    %208 = vector.load %arg6[%c0_227, %c0_228] : memref<2x60xf32, #tpu.memory_space<vmem>>, vector<1x60xf32>
    %209 = arith.mulf %207, %208 : vector<1x60xf32>
    %cst_229 = arith.constant dense<0.000000e+00> : vector<1xf32>
    %210 = vector.multi_reduction <add>, %209, %cst_229 [1] : vector<1x60xf32> to vector<1xf32>
    %211 = vector.shape_cast %210 : vector<1xf32> to vector<1x1xf32>
    %c0_230 = arith.constant 0 : index
    %c0_231 = arith.constant 0 : index
    %212 = vector.load %arg7[%c0_230, %c0_231] : memref<1x2xf32, #tpu.memory_space<vmem>>, vector<1x1xf32>
    %213 = arith.addf %211, %212 : vector<1x1xf32>
    %cst_232 = arith.constant 0.000000e+00 : f32
    %214 = vector.broadcast %cst_232 : f32 to vector<1x1xf32>
    %215 = arith.maximumf %213, %214 : vector<1x1xf32>
    %c0_233 = arith.constant 0 : index
    %c0_234 = arith.constant 0 : index
    %216 = vector.load %arg8[%c0_233, %c0_234] : memref<2x60xf32, #tpu.memory_space<vmem>>, vector<1x60xf32>
    %217 = vector.broadcast %215 : vector<1x1xf32> to vector<1x60xf32>
    %218 = arith.mulf %217, %216 : vector<1x60xf32>
    %219 = arith.addf %162, %218 : vector<1x60xf32>
    %c1_235 = arith.constant 1 : index
    %c0_236 = arith.constant 0 : index
    %220 = vector.load %arg6[%c1_235, %c0_236] : memref<2x60xf32, #tpu.memory_space<vmem>>, vector<1x60xf32>
    %221 = arith.mulf %207, %220 : vector<1x60xf32>
    %cst_237 = arith.constant dense<0.000000e+00> : vector<1xf32>
    %222 = vector.multi_reduction <add>, %221, %cst_237 [1] : vector<1x60xf32> to vector<1xf32>
    %223 = vector.shape_cast %222 : vector<1xf32> to vector<1x1xf32>
    %c0_238 = arith.constant 0 : index
    %c1_239 = arith.constant 1 : index
    %224 = vector.load %arg7[%c0_238, %c1_239] : memref<1x2xf32, #tpu.memory_space<vmem>>, vector<1x1xf32>
    %225 = arith.addf %223, %224 : vector<1x1xf32>
    %cst_240 = arith.constant 0.000000e+00 : f32
    %226 = vector.broadcast %cst_240 : f32 to vector<1x1xf32>
    %227 = arith.maximumf %225, %226 : vector<1x1xf32>
    %c1_241 = arith.constant 1 : index
    %c0_242 = arith.constant 0 : index
    %228 = vector.load %arg8[%c1_241, %c0_242] : memref<2x60xf32, #tpu.memory_space<vmem>>, vector<1x60xf32>
    %229 = vector.broadcast %227 : vector<1x1xf32> to vector<1x60xf32>
    %230 = arith.mulf %229, %228 : vector<1x60xf32>
    %231 = arith.addf %219, %230 : vector<1x60xf32>
    %cst_243 = arith.constant 0.000000e+00 : f32
    %232 = vector.broadcast %cst_243 : f32 to vector<1x60xf32>
    %233 = arith.subf %232, %231 : vector<1x60xf32>
    %234 = math.exp %233 : vector<1x60xf32>
    %cst_244 = arith.constant 1.000000e+00 : f32
    %235 = vector.broadcast %cst_244 : f32 to vector<1x60xf32>
    %236 = arith.addf %235, %234 : vector<1x60xf32>
    %cst_245 = arith.constant 1.000000e+00 : f32
    %237 = vector.broadcast %cst_245 : f32 to vector<1x60xf32>
    %238 = arith.divf %237, %236 : vector<1x60xf32>
    %239 = vector.broadcast %238 : vector<1x60xf32> to vector<64x60xf32>
    %240 = arith.mulf %203, %239 : vector<64x60xf32>
    %241 = vector.shape_cast %240 : vector<64x60xf32> to vector<1x8x8x60xf32>
    %c1_246 = arith.constant 1 : index
    %c0_247 = arith.constant 0 : index
    %c0_248 = arith.constant 0 : index
    %c0_249 = arith.constant 0 : index
    %242 = vector.load %arg10[%c1_246, %c0_247, %c0_248, %c0_249] : memref<2x8x8x60xf32, #tpu.memory_space<vmem>>, vector<1x8x8x60xf32>
    tpu.vector_store %arg10[%c1_246, %c0_247, %c0_248, %c0_249], %241 {strides = array<i32>} : memref<2x8x8x60xf32, #tpu.memory_space<vmem>>, vector<1x8x8x60xf32>,
    return
  }
  func.func @transform_0(%arg0: i32) -> (i32, i32, i32, i32) {
    %c0_i32 = arith.constant 0 : i32
    %c0_i32_0 = arith.constant 0 : i32
    %c0_i32_1 = arith.constant 0 : i32
    %c0_i32_2 = arith.constant 0 : i32
    return %arg0, %c0_i32, %c0_i32_0, %c0_i32_1 : i32, i32, i32, i32
  }
  func.func @transform_1(%arg0: i32) -> (i32, i32, i32, i32) {
    %c0_i32 = arith.constant 0 : i32
    %c0_i32_0 = arith.constant 0 : i32
    %c0_i32_1 = arith.constant 0 : i32
    %c0_i32_2 = arith.constant 0 : i32
    %c0_i32_3 = arith.constant 0 : i32
    return %c0_i32, %c0_i32_0, %c0_i32_1, %c0_i32_2 : i32, i32, i32, i32
  }
  func.func @transform_2(%arg0: i32) -> (i32, i32) {
    %c0_i32 = arith.constant 0 : i32
    %c0_i32_0 = arith.constant 0 : i32
    %c0_i32_1 = arith.constant 0 : i32
    return %c0_i32, %c0_i32_0 : i32, i32
  }
  func.func @transform_3(%arg0: i32) -> (i32, i32, i32, i32) {
    %c0_i32 = arith.constant 0 : i32
    %c0_i32_0 = arith.constant 0 : i32
    %c0_i32_1 = arith.constant 0 : i32
    %c0_i32_2 = arith.constant 0 : i32
    %c0_i32_3 = arith.constant 0 : i32
    return %c0_i32, %c0_i32_0, %c0_i32_1, %c0_i32_2 : i32, i32, i32, i32
  }
  func.func @transform_4(%arg0: i32) -> (i32, i32) {
    %c0_i32 = arith.constant 0 : i32
    %c0_i32_0 = arith.constant 0 : i32
    %c0_i32_1 = arith.constant 0 : i32
    return %c0_i32, %c0_i32_0 : i32, i32
  }
  func.func @transform_5(%arg0: i32) -> (i32, i32) {
    %c0_i32 = arith.constant 0 : i32
    %c0_i32_0 = arith.constant 0 : i32
    %c0_i32_1 = arith.constant 0 : i32
    return %c0_i32, %c0_i32_0 : i32, i32
  }
  func.func @transform_6(%arg0: i32) -> (i32, i32) {
    %c0_i32 = arith.constant 0 : i32
    %c0_i32_0 = arith.constant 0 : i32
    %c0_i32_1 = arith.constant 0 : i32
    return %c0_i32, %c0_i32_0 : i32, i32
  }
  func.func @transform_7(%arg0: i32) -> (i32, i32) {
    %c0_i32 = arith.constant 0 : i32
    %c0_i32_0 = arith.constant 0 : i32
    %c0_i32_1 = arith.constant 0 : i32
    return %c0_i32, %c0_i32_0 : i32, i32
  }
  func.func @transform_8(%arg0: i32) -> (i32, i32) {
    %c0_i32 = arith.constant 0 : i32
    %c0_i32_0 = arith.constant 0 : i32
    %c0_i32_1 = arith.constant 0 : i32
    return %c0_i32, %c0_i32_0 : i32, i32
  }
  func.func @transform_9(%arg0: i32) -> (i32, i32, i32, i32) {
    %c0_i32 = arith.constant 0 : i32
    %c0_i32_0 = arith.constant 0 : i32
    %c0_i32_1 = arith.constant 0 : i32
    %c0_i32_2 = arith.constant 0 : i32
    return %arg0, %c0_i32, %c0_i32_0, %c0_i32_1 : i32, i32, i32, i32
  }
}

</mosaic_0001>

<llo_original>
// kernel: tpu_custom_call.1
$region0: #{tpu_custom_call.1}
  #allocation0 [shape = 'u32[]', space=smem, size = 0x4, offset = 0x4, fixed_abs, tag = 'smem constant byte address 0x4 - core index']
  #allocation1 [shape = 'u32[144,128]{1,0:T(1,128)}', space=vmem, size = 0x12000, scoped, tag = 'internal scratch']
  #allocation2 [shape = 'f32[2,10,10,20]{3,2,1,0:T(8,128)}', space=vmem, size = 0x28000, scoped, tag = 'scratch operand']
  %s0 = inlined_call_operand.vmem [shape: f32[2,10,10,60], index: 0, kind: input, shape index: {}]
  %s1 = inlined_call_operand.vmem [shape: f32[3,3,60,20], index: 1, kind: input, shape index: {}]
  %s2 = inlined_call_operand.vmem [shape: f32[1,20], index: 2, kind: input, shape index: {}]
  %s3 = inlined_call_operand.vmem [shape: f32[3,3,20,60], index: 3, kind: input, shape index: {}]
  %s4 = inlined_call_operand.vmem [shape: f32[1,60], index: 4, kind: input, shape index: {}]
  %s5 = inlined_call_operand.vmem [shape: f32[2,60], index: 5, kind: input, shape index: {}]
  %s6 = inlined_call_operand.vmem [shape: f32[1,2], index: 6, kind: input, shape index: {}]
  %s7 = inlined_call_operand.vmem [shape: f32[2,60], index: 7, kind: input, shape index: {}]
  %s8 = inlined_call_operand.vmem [shape: f32[1,60], index: 8, kind: input, shape index: {}]
  %s9 = inlined_call_operand.hbm [shape: f32[2,8,8,60], index: 9, kind: output, shape index: {}]
  %s10 = sld [smem:[#allocation0]]
  $region46: #{tpu_custom_call.1} parent=0
    _
  %s12 = ssub.s32 1, %s10
  %s13 = scalar_select 0, %s12, %s10
  $region1: #{tpu_custom_call.1} parent=0
    #allocation3 [shape = 'u8[65536]{0}', space=vmem, size = 0x10000, scoped, tag = 'output window, operand 0, single buffered']
    #allocation4 [shape = 's32[1]{0}', space=sflag, size = 0x4, scoped, tag = 'scoped memory for tpu_custom_call.1']
    %14 = vsyncpa [#allocation4], 0
    // Predicated region
    $region2: #{tpu_custom_call.1} parent=1 // pred_check
      _
    $region3: #{tpu_custom_call.1} parent=1 // pred_check_branch
      %16 = sbr.rel (0) target = $region5
    $region4: #{tpu_custom_call.1} parent=1 // pred_region
      _
    $region5: #{tpu_custom_call.1} parent=1 // pred_fallthru
      _
    // Predicated region
    $region6: #{tpu_custom_call.1} parent=1 // pred_check
      _
    $region7: #{tpu_custom_call.1} parent=1 // pred_check_branch
      %18 = sbr.rel (0) target = $region9
    $region8: #{tpu_custom_call.1} parent=1 // pred_region
      _
    $region9: #{tpu_custom_call.1} parent=1 // pred_fallthru
      _
    // Predicated region
    $region10: #{tpu_custom_call.1} parent=1 // pred_check
      _
    $region11: #{tpu_custom_call.1} parent=1 // pred_check_branch
      %20 = sbr.rel (0) target = $region13
    $region12: #{tpu_custom_call.1} parent=1 // pred_region
      _
    $region13: #{tpu_custom_call.1} parent=1 // pred_fallthru
      _
    // Predicated region
    $region14: #{tpu_custom_call.1} parent=1 // pred_check
      _
    $region15: #{tpu_custom_call.1} parent=1 // pred_check_branch
      %22 = sbr.rel (0) target = $region17
    $region16: #{tpu_custom_call.1} parent=1 // pred_region
      _
    $region17: #{tpu_custom_call.1} parent=1 // pred_fallthru
      _
    // Predicated region
    $region18: #{tpu_custom_call.1} parent=1 // pred_check
      _
    $region19: #{tpu_custom_call.1} parent=1 // pred_check_branch
      %24 = sbr.rel (0) target = $region21
    $region20: #{tpu_custom_call.1} parent=1 // pred_region
      _
    $region21: #{tpu_custom_call.1} parent=1 // pred_fallthru
      _
    // Predicated region
    $region22: #{tpu_custom_call.1} parent=1 // pred_check
      _
    $region23: #{tpu_custom_call.1} parent=1 // pred_check_branch
      %26 = sbr.rel (0) target = $region25
    $region24: #{tpu_custom_call.1} parent=1 // pred_region
      _
    $region25: #{tpu_custom_call.1} parent=1 // pred_fallthru
      _
    // Predicated region
    $region26: #{tpu_custom_call.1} parent=1 // pred_check
      _
    $region27: #{tpu_custom_call.1} parent=1 // pred_check_branch
      %28 = sbr.rel (0) target = $region29
    $region28: #{tpu_custom_call.1} parent=1 // pred_region
      _
    $region29: #{tpu_custom_call.1} parent=1 // pred_fallthru
      _
    // Predicated region
    $region30: #{tpu_custom_call.1} parent=1 // pred_check
      _
    $region31: #{tpu_custom_call.1} parent=1 // pred_check_branch
      %30 = sbr.rel (0) target = $region33
    $region32: #{tpu_custom_call.1} parent=1 // pred_region
      _
    $region33: #{tpu_custom_call.1} parent=1 // pred_fallthru
      _
    // Predicated region
    $region34: #{tpu_custom_call.1} parent=1 // pred_check
      _
    $region35: #{tpu_custom_call.1} parent=1 // pred_check_branch
      %32 = sbr.rel (0) target = $region37
    $region36: #{tpu_custom_call.1} parent=1 // pred_region
      _
    $region37: #{tpu_custom_call.1} parent=1 // pred_fallthru
      _
    %v33 = vld [vmem:[%s2] sm:$0x1]
    %v35 = vlaneseq
    %v36 = vshrl.u32 %v35, 7
    %v37 = vsub.s32 0, %v36
    %v38 = vrot.slane %v33, %v37
    %v40 = vld [vmem:[%s0] sm:$0xff]
    %v41 = vld [vmem:[%s0 + $0x10] sm:$0xff]
    %v42 = vld [vmem:[%s0 + $0x20] sm:$0xff]
    %v43 = vld [vmem:[%s0 + $0x30] sm:$0xff]
    %v44 = vld [vmem:[%s0 + $0x40] sm:$0xff]
    %v45 = vld [vmem:[%s0 + $0x50] sm:$0xff]
    %v46 = vld [vmem:[%s0 + $0x60] sm:$0xff]
    %v47 = vld [vmem:[%s0 + $0x70] sm:$0xff]
    %v48 = vld [vmem:[%s0 + $0xa0] sm:$0xff]
    %v49 = vld [vmem:[%s0 + $0xb0] sm:$0xff]
    %v50 = vld [vmem:[%s0 + $0xc0] sm:$0xff]
    %v51 = vld [vmem:[%s0 + $0xd0] sm:$0xff]
    %v52 = vld [vmem:[%s0 + $0xe0] sm:$0xff]
    %v53 = vld [vmem:[%s0 + $0xf0] sm:$0xff]
    %v54 = vld [vmem:[%s0 + $0x100] sm:$0xff]
    %v55 = vld [vmem:[%s0 + $0x110] sm:$0xff]
    %v56 = vld [vmem:[%s1] sm:$0xff]
    %v57 = vld [vmem:[%s1 + $0x8] sm:$0xff]
    %v58 = vld [vmem:[%s1 + $0x10] sm:$0xff]
    %v59 = vld [vmem:[%s1 + $0x18] sm:$0xff]
    %v60 = vld [vmem:[%s1 + $0x20] sm:$0xff]
    %v61 = vld [vmem:[%s1 + $0x28] sm:$0xff]
    %v62 = vld [vmem:[%s1 + $0x30] sm:$0xff]
    %v63 = vld [vmem:[%s1 + $0x38] sm:$0xf]
    %vm64 = vcmask 490496
    %v66 = vsel %vm64, %v40, 0
    %v69 = vsel %vm64, %v41, 0
    %v72 = vsel %vm64, %v42, 0
    %v75 = vsel %vm64, %v43, 0
    %v78 = vsel %vm64, %v44, 0
    %v81 = vsel %vm64, %v45, 0
    %v84 = vsel %vm64, %v46, 0
    %v87 = vsel %vm64, %v47, 0
    %v90 = vsel %vm64, %v48, 0
    %v93 = vsel %vm64, %v49, 0
    %v96 = vsel %vm64, %v50, 0
    %v99 = vsel %vm64, %v51, 0
    %v102 = vsel %vm64, %v52, 0
    %v105 = vsel %vm64, %v53, 0
    %v108 = vsel %vm64, %v54, 0
    %v111 = vsel %vm64, %v55, 0
    %vm113 = vcmask 1043456
    %v115 = vsel %vm113, %v63, 0
    %117 = vmatprep.subr.mxu0 0.0
    %118 = vmatpush1.msra.mxu0 0.0
    %119 = vmatprep.subr.mxu0 0.0
    %120 = vmatpush1.msra.mxu0 0.0
    %121 = vmatprep.subr.mxu0 0.0
    %122 = vmatpush1.msra.mxu0 0.0
    %123 = vmatprep.subr.mxu0 0.0
    %124 = vmatpush1.msra.mxu0 0.0
    %125 = vmatprep.subr.mxu0 0.0
    %126 = vmatpush1.msra.mxu0 0.0
    %127 = vmatprep.subr.mxu0 0.0
    %128 = vmatpush1.msra.mxu0 0.0
    %129 = vmatprep.subr.mxu0 0.0
    %130 = vmatpush1.msra.mxu0 0.0
    %131 = vmatprep.subr.mxu0 0.0
    %132 = vmatpush1.msra.mxu0 0.0
    %133 = vmatprep.subr.mxu0 0.0
    %134 = vmatpush1.msra.mxu0 %v115
    %135 = vmatprep.subr.mxu0 0.0
    %136 = vmatpush1.msra.mxu0 %v62
    %137 = vmatprep.subr.mxu0 0.0
    %138 = vmatpush1.msra.mxu0 %v61
    %139 = vmatprep.subr.mxu0 0.0
    %140 = vmatpush1.msra.mxu0 %v60
    %141 = vmatprep.subr.mxu0 0.0
    %142 = vmatpush1.msra.mxu0 %v59
    %143 = vmatprep.subr.mxu0 0.0
    %144 = vmatpush1.msra.mxu0 %v58
    %145 = vmatprep.subr.mxu0 0.0
    %146 = vmatpush1.msra.mxu0 %v57
    %147 = vmatprep.subr.mxu0 0.0
    %148 = vmatpush1.msra.mxu0 %v56
    %149 = vmatprep.subr.mxu0 0.0
    %150 = vmatpush2.msra.mxu0 0.0
    %151 = vmatprep.subr.mxu0 0.0
    %152 = vmatpush2.msra.mxu0 0.0
    %153 = vmatprep.subr.mxu0 0.0
    %154 = vmatpush2.msra.mxu0 0.0
    %155 = vmatprep.subr.mxu0 0.0
    %156 = vmatpush2.msra.mxu0 0.0
    %157 = vmatprep.subr.mxu0 0.0
    %158 = vmatpush2.msra.mxu0 0.0
    %159 = vmatprep.subr.mxu0 0.0
    %160 = vmatpush2.msra.mxu0 0.0
    %161 = vmatprep.subr.mxu0 0.0
    %162 = vmatpush2.msra.mxu0 0.0
    %163 = vmatprep.subr.mxu0 0.0
    %164 = vmatpush2.msra.mxu0 0.0
    %165 = vmatprep.subr.mxu0 0.0
    %166 = vmatpush2.msra.mxu0 0.0
    %167 = vmatprep.subr.mxu0 0.0
    %168 = vmatpush2.msra.mxu0 0.0
    %169 = vmatprep.subr.mxu0 0.0
    %170 = vmatpush2.msra.mxu0 0.0
    %171 = vmatprep.subr.mxu0 0.0
    %172 = vmatpush2.msra.mxu0 0.0
    %173 = vmatprep.subr.mxu0 0.0
    %174 = vmatpush2.msra.mxu0 0.0
    %175 = vmatprep.subr.mxu0 0.0
    %176 = vmatpush2.msra.mxu0 0.0
    %177 = vmatprep.subr.mxu0 0.0
    %178 = vmatpush2.msra.mxu0 0.0
    %179 = vmatprep.subr.mxu0 0.0
    %180 = vmatpush2.msra.mxu0 0.0
    %181 = vmatprep.mubr.f32.mxu0 0.0
    %182 = vmatmul.mubr.f32.gmra.mxu0 %v66
    %v183 = vpop.f32.mrf.mxu0
    %v184 = vadd.f32 0.0, %v183
    %v185 = vpop.f32.mrf.mxu0
    %186 = vmatprep.mubr.f32.mxu0 0.0
    %187 = vmatmul.mubr.f32.gmra.mxu0 %v69
    %v188 = vpop.f32.mrf.mxu0
    %v189 = vadd.f32 0.0, %v188
    %v190 = vpop.f32.mrf.mxu0
    %191 = vmatprep.mubr.f32.mxu0 0.0
    %192 = vmatmul.mubr.f32.gmra.mxu0 %v72
    %v193 = vpop.f32.mrf.mxu0
    %v194 = vadd.f32 0.0, %v193
    %v195 = vpop.f32.mrf.mxu0
    %196 = vmatprep.mubr.f32.mxu0 0.0
    %197 = vmatmul.mubr.f32.gmra.mxu0 %v75
    %v198 = vpop.f32.mrf.mxu0
    %v199 = vadd.f32 0.0, %v198
    %v200 = vpop.f32.mrf.mxu0
    %201 = vmatprep.mubr.f32.mxu0 0.0
    %202 = vmatmul.mubr.f32.gmra.mxu0 %v78
    %v203 = vpop.f32.mrf.mxu0
    %v204 = vadd.f32 0.0, %v203
    %v205 = vpop.f32.mrf.mxu0
    %206 = vmatprep.mubr.f32.mxu0 0.0
    %207 = vmatmul.mubr.f32.gmra.mxu0 %v81
    %v208 = vpop.f32.mrf.mxu0
    %v209 = vadd.f32 0.0, %v208
    %v210 = vpop.f32.mrf.mxu0
    %211 = vmatprep.mubr.f32.mxu0 0.0
    %212 = vmatmul.mubr.f32.gmra.mxu0 %v84
    %v213 = vpop.f32.mrf.mxu0
    %v214 = vadd.f32 0.0, %v213
    %v215 = vpop.f32.mrf.mxu0
    %216 = vmatprep.mubr.f32.mxu0 0.0
    %217 = vmatmul.mubr.f32.gmra.mxu0 %v87
    %v218 = vpop.f32.mrf.mxu0
    %v219 = vadd.f32 0.0, %v218
    %v220 = vpop.f32.mrf.mxu0
    %221 = vmatprep.mubr.f32.mxu0 0.0
    %222 = vmatmul.mubr.f32.gmra.mxu0 %v90
    %v223 = vpop.f32.mrf.mxu0
    %v224 = vadd.f32 0.0, %v223
    %v225 = vpop.f32.mrf.mxu0
    %226 = vmatprep.mubr.f32.mxu0 0.0
    %227 = vmatmul.mubr.f32.gmra.mxu0 %v93
    %v228 = vpop.f32.mrf.mxu0
    %v229 = vadd.f32 0.0, %v228
    %v230 = vpop.f32.mrf.mxu0
    %231 = vmatprep.mubr.f32.mxu0 0.0
    %232 = vmatmul.mubr.f32.gmra.mxu0 %v96
    %v233 = vpop.f32.mrf.mxu0
    %v234 = vadd.f32 0.0, %v233
    %v235 = vpop.f32.mrf.mxu0
    %236 = vmatprep.mubr.f32.mxu0 0.0
    %237 = vmatmul.mubr.f32.gmra.mxu0 %v99
    %v238 = vpop.f32.mrf.mxu0
    %v239 = vadd.f32 0.0, %v238
    %v240 = vpop.f32.mrf.mxu0
    %241 = vmatprep.mubr.f32.mxu0 0.0
    %242 = vmatmul.mubr.f32.gmra.mxu0 %v102
    %v243 = vpop.f32.mrf.mxu0
    %v244 = vadd.f32 0.0, %v243
    %v245 = vpop.f32.mrf.mxu0
    %246 = vmatprep.mubr.f32.mxu0 0.0
    %247 = vmatmul.mubr.f32.gmra.mxu0 %v105
    %v248 = vpop.f32.mrf.mxu0
    %v249 = vadd.f32 0.0, %v248
    %v250 = vpop.f32.mrf.mxu0
    %251 = vmatprep.mubr.f32.mxu0 0.0
    %252 = vmatmul.mubr.f32.gmra.mxu0 %v108
    %v253 = vpop.f32.mrf.mxu0
    %v254 = vadd.f32 0.0, %v253
    %v255 = vpop.f32.mrf.mxu0
    %256 = vmatprep.mubr.f32.mxu0 0.0
    %257 = vmatmul.mubr.f32.gmra.mxu0 %v111
    %v258 = vpop.f32.mrf.mxu0
    %v259 = vadd.f32 0.0, %v258
    %v260 = vpop.f32.mrf.mxu0
    %261 = vdwg.mxu0
    %v262 = vadd.f32 %v38, %v184
    %v263 = vadd.f32 %v38, %v189
    %v264 = vadd.f32 %v38, %v194
    %v265 = vadd.f32 %v38, %v199
    %v266 = vadd.f32 %v38, %v204
    %v267 = vadd.f32 %v38, %v209
    %v268 = vadd.f32 %v38, %v214
    %v269 = vadd.f32 %v38, %v219
    %v270 = vadd.f32 %v38, %v224
    %v271 = vadd.f32 %v38, %v229
    %v272 = vadd.f32 %v38, %v234
    %v273 = vadd.f32 %v38, %v239
    %v274 = vadd.f32 %v38, %v244
    %v275 = vadd.f32 %v38, %v249
    %v276 = vadd.f32 %v38, %v254
    %v277 = vadd.f32 %v38, %v259
    %v278 = vld [vmem:[%s0 + $0x1] sm:$0xff]
    %v279 = vld [vmem:[%s0 + $0x11] sm:$0xff]
    %v280 = vld [vmem:[%s0 + $0x21] sm:$0xff]
    %v281 = vld [vmem:[%s0 + $0x31] sm:$0xff]
    %v282 = vld [vmem:[%s0 + $0x41] sm:$0xff]
    %v283 = vld [vmem:[%s0 + $0x51] sm:$0xff]
    %v284 = vld [vmem:[%s0 + $0x61] sm:$0xff]
    %v285 = vld [vmem:[%s0 + $0x71] sm:$0xff]
    %v286 = vld [vmem:[%s0 + $0xa1] sm:$0xff]
    %v287 = vld [vmem:[%s0 + $0xb1] sm:$0xff]
    %v288 = vld [vmem:[%s0 + $0xc1] sm:$0xff]
    %v289 = vld [vmem:[%s0 + $0xd1] sm:$0xff]
    %v290 = vld [vmem:[%s0 + $0xe1] sm:$0xff]
    %v291 = vld [vmem:[%s0 + $0xf1] sm:$0xff]
    %v292 = vld [vmem:[%s0 + $0x101] sm:$0xff]
    %v293 = vld [vmem:[%s0 + $0x111] sm:$0xff]
    %s294 = scalar_lea.vmem %s1, 64
    %v295 = vld [vmem:[%s294] sm:$0xff]
    %v296 = vld [vmem:[%s294 + $0x8] sm:$0xff]
    %v297 = vld [vmem:[%s294 + $0x10] sm:$0xff]
    %v298 = vld [vmem:[%s294 + $0x18] sm:$0xff]
    %v299 = vld [vmem:[%s294 + $0x20] sm:$0xff]
    %v300 = vld [vmem:[%s294 + $0x28] sm:$0xff]
    %v301 = vld [vmem:[%s294 + $0x30] sm:$0xff]
    %v302 = vld [vmem:[%s294 + $0x38] sm:$0xf]
    %v304 = vsel %vm64, %v278, 0
    %v307 = vsel %vm64, %v279, 0
    %v310 = vsel %vm64, %v280, 0
    %v313 = vsel %vm64, %v281, 0
    %v316 = vsel %vm64, %v282, 0
    %v319 = vsel %vm64, %v283, 0
    %v322 = vsel %vm64, %v284, 0
    %v325 = vsel %vm64, %v285, 0
    %v328 = vsel %vm64, %v286, 0
    %v331 = vsel %vm64, %v287, 0
    %v334 = vsel %vm64, %v288, 0
    %v337 = vsel %vm64, %v289, 0
    %v340 = vsel %vm64, %v290, 0
    %v343 = vsel %vm64, %v291, 0
    %v346 = vsel %vm64, %v292, 0
    %v349 = vsel %vm64, %v293, 0
    %v352 = vsel %vm113, %v302, 0
    %354 = vmatprep.subr.mxu0 0.0
    %355 = vmatpush1.msra.mxu0 0.0
    %356 = vmatprep.subr.mxu0 0.0
    %357 = vmatpush1.msra.mxu0 0.0
    %358 = vmatprep.subr.mxu0 0.0
    %359 = vmatpush1.msra.mxu0 0.0
    %360 = vmatprep.subr.mxu0 0.0
    %361 = vmatpush1.msra.mxu0 0.0
    %362 = vmatprep.subr.mxu0 0.0
    %363 = vmatpush1.msra.mxu0 0.0
    %364 = vmatprep.subr.mxu0 0.0
    %365 = vmatpush1.msra.mxu0 0.0
    %366 = vmatprep.subr.mxu0 0.0
    %367 = vmatpush1.msra.mxu0 0.0
    %368 = vmatprep.subr.mxu0 0.0
    %369 = vmatpush1.msra.mxu0 0.0
    %370 = vmatprep.subr.mxu0 0.0
    %371 = vmatpush1.msra.mxu0 %v352
    %372 = vmatprep.subr.mxu0 0.0
    %373 = vmatpush1.msra.mxu0 %v301
    %374 = vmatprep.subr.mxu0 0.0
    %375 = vmatpush1.msra.mxu0 %v300
    %376 = vmatprep.subr.mxu0 0.0
    %377 = vmatpush1.msra.mxu0 %v299
    %378 = vmatprep.subr.mxu0 0.0
    %379 = vmatpush1.msra.mxu0 %v298
    %380 = vmatprep.subr.mxu0 0.0
    %381 = vmatpush1.msra.mxu0 %v297
    %382 = vmatprep.subr.mxu0 0.0
    %383 = vmatpush1.msra.mxu0 %v296
    %384 = vmatprep.subr.mxu0 0.0
    %385 = vmatpush1.msra.mxu0 %v295
    %386 = vmatprep.subr.mxu0 0.0
    %387 = vmatpush2.msra.mxu0 0.0
    %388 = vmatprep.subr.mxu0 0.0
    %389 = vmatpush2.msra.mxu0 0.0
    %390 = vmatprep.subr.mxu0 0.0
    %391 = vmatpush2.msra.mxu0 0.0
    %392 = vmatprep.subr.mxu0 0.0
    %393 = vmatpush2.msra.mxu0 0.0
    %394 = vmatprep.subr.mxu0 0.0
    %395 = vmatpush2.msra.mxu0 0.0
    %396 = vmatprep.subr.mxu0 0.0
    %397 = vmatpush2.msra.mxu0 0.0
    %398 = vmatprep.subr.mxu0 0.0
    %399 = vmatpush2.msra.mxu0 0.0
    %400 = vmatprep.subr.mxu0 0.0
    %401 = vmatpush2.msra.mxu0 0.0
    %402 = vmatprep.subr.mxu0 0.0
    %403 = vmatpush2.msra.mxu0 0.0
    %404 = vmatprep.subr.mxu0 0.0
    %405 = vmatpush2.msra.mxu0 0.0
    %406 = vmatprep.subr.mxu0 0.0
    %407 = vmatpush2.msra.mxu0 0.0
    %408 = vmatprep.subr.mxu0 0.0
    %409 = vmatpush2.msra.mxu0 0.0
    %410 = vmatprep.subr.mxu0 0.0
    %411 = vmatpush2.msra.mxu0 0.0
    %412 = vmatprep.subr.mxu0 0.0
    %413 = vmatpush2.msra.mxu0 0.0
    %414 = vmatprep.subr.mxu0 0.0
    %415 = vmatpush2.msra.mxu0 0.0
    %416 = vmatprep.subr.mxu0 0.0
    %417 = vmatpush2.msra.mxu0 0.0
    %418 = vmatprep.mubr.f32.mxu0 0.0
    %419 = vmatmul.mubr.f32.gmra.mxu0 %v304
    %v420 = vpop.f32.mrf.mxu0
    %v421 = vadd.f32 0.0, %v420
    %v422 = vpop.f32.mrf.mxu0
    %423 = vmatprep.mubr.f32.mxu0 0.0
    %424 = vmatmul.mubr.f32.gmra.mxu0 %v307
    %v425 = vpop.f32.mrf.mxu0
    %v426 = vadd.f32 0.0, %v425
    %v427 = vpop.f32.mrf.mxu0
    %428 = vmatprep.mubr.f32.mxu0 0.0
    %429 = vmatmul.mubr.f32.gmra.mxu0 %v310
    %v430 = vpop.f32.mrf.mxu0
    %v431 = vadd.f32 0.0, %v430
    %v432 = vpop.f32.mrf.mxu0
    %433 = vmatprep.mubr.f32.mxu0 0.0
    %434 = vmatmul.mubr.f32.gmra.mxu0 %v313
    %v435 = vpop.f32.mrf.mxu0
    %v436 = vadd.f32 0.0, %v435
    %v437 = vpop.f32.mrf.mxu0
    %438 = vmatprep.mubr.f32.mxu0 0.0
    %439 = vmatmul.mubr.f32.gmra.mxu0 %v316
    %v440 = vpop.f32.mrf.mxu0
    %v441 = vadd.f32 0.0, %v440
    %v442 = vpop.f32.mrf.mxu0
    %443 = vmatprep.mubr.f32.mxu0 0.0
    %444 = vmatmul.mubr.f32.gmra.mxu0 %v319
    %v445 = vpop.f32.mrf.mxu0
    %v446 = vadd.f32 0.0, %v445
    %v447 = vpop.f32.mrf.mxu0
    %448 = vmatprep.mubr.f32.mxu0 0.0
    %449 = vmatmul.mubr.f32.gmra.mxu0 %v322
    %v450 = vpop.f32.mrf.mxu0
    %v451 = vadd.f32 0.0, %v450
    %v452 = vpop.f32.mrf.mxu0
    %453 = vmatprep.mubr.f32.mxu0 0.0
    %454 = vmatmul.mubr.f32.gmra.mxu0 %v325
    %v455 = vpop.f32.mrf.mxu0
    %v456 = vadd.f32 0.0, %v455
    %v457 = vpop.f32.mrf.mxu0
    %458 = vmatprep.mubr.f32.mxu0 0.0
    %459 = vmatmul.mubr.f32.gmra.mxu0 %v328
    %v460 = vpop.f32.mrf.mxu0
    %v461 = vadd.f32 0.0, %v460
    %v462 = vpop.f32.mrf.mxu0
    %463 = vmatprep.mubr.f32.mxu0 0.0
    %464 = vmatmul.mubr.f32.gmra.mxu0 %v331
    %v465 = vpop.f32.mrf.mxu0
    %v466 = vadd.f32 0.0, %v465
    %v467 = vpop.f32.mrf.mxu0
    %468 = vmatprep.mubr.f32.mxu0 0.0
    %469 = vmatmul.mubr.f32.gmra.mxu0 %v334
    %v470 = vpop.f32.mrf.mxu0
    %v471 = vadd.f32 0.0, %v470
    %v472 = vpop.f32.mrf.mxu0
    %473 = vmatprep.mubr.f32.mxu0 0.0
    %474 = vmatmul.mubr.f32.gmra.mxu0 %v337
    %v475 = vpop.f32.mrf.mxu0
    %v476 = vadd.f32 0.0, %v475
    %v477 = vpop.f32.mrf.mxu0
    %478 = vmatprep.mubr.f32.mxu0 0.0
    %479 = vmatmul.mubr.f32.gmra.mxu0 %v340
    %v480 = vpop.f32.mrf.mxu0
    %v481 = vadd.f32 0.0, %v480
    %v482 = vpop.f32.mrf.mxu0
    %483 = vmatprep.mubr.f32.mxu0 0.0
    %484 = vmatmul.mubr.f32.gmra.mxu0 %v343
    %v485 = vpop.f32.mrf.mxu0
    %v486 = vadd.f32 0.0, %v485
    %v487 = vpop.f32.mrf.mxu0
    %488 = vmatprep.mubr.f32.mxu0 0.0
    %489 = vmatmul.mubr.f32.gmra.mxu0 %v346
    %v490 = vpop.f32.mrf.mxu0
    %v491 = vadd.f32 0.0, %v490
    %v492 = vpop.f32.mrf.mxu0
    %493 = vmatprep.mubr.f32.mxu0 0.0
    %494 = vmatmul.mubr.f32.gmra.mxu0 %v349
    %v495 = vpop.f32.mrf.mxu0
    %v496 = vadd.f32 0.0, %v495
    %v497 = vpop.f32.mrf.mxu0
    %498 = vdwg.mxu0
    %v499 = vadd.f32 %v262, %v421
    %v500 = vadd.f32 %v263, %v426
    %v501 = vadd.f32 %v264, %v431
    %v502 = vadd.f32 %v265, %v436
    %v503 = vadd.f32 %v266, %v441
    %v504 = vadd.f32 %v267, %v446
    %v505 = vadd.f32 %v268, %v451
    %v506 = vadd.f32 %v269, %v456
    %v507 = vadd.f32 %v270, %v461
    %v508 = vadd.f32 %v271, %v466
    %v509 = vadd.f32 %v272, %v471
    %v510 = vadd.f32 %v273, %v476
    %v511 = vadd.f32 %v274, %v481
    %v512 = vadd.f32 %v275, %v486
    %v513 = vadd.f32 %v276, %v491
    %v514 = vadd.f32 %v277, %v496
    %v515 = vld [vmem:[%s0 + $0x2] sm:$0xff]
    %v516 = vld [vmem:[%s0 + $0x12] sm:$0xff]
    %v517 = vld [vmem:[%s0 + $0x22] sm:$0xff]
    %v518 = vld [vmem:[%s0 + $0x32] sm:$0xff]
    %v519 = vld [vmem:[%s0 + $0x42] sm:$0xff]
    %v520 = vld [vmem:[%s0 + $0x52] sm:$0xff]
    %v521 = vld [vmem:[%s0 + $0x62] sm:$0xff]
    %v522 = vld [vmem:[%s0 + $0x72] sm:$0xff]
    %v523 = vld [vmem:[%s0 + $0xa2] sm:$0xff]
    %v524 = vld [vmem:[%s0 + $0xb2] sm:$0xff]
    %v525 = vld [vmem:[%s0 + $0xc2] sm:$0xff]
    %v526 = vld [vmem:[%s0 + $0xd2] sm:$0xff]
    %v527 = vld [vmem:[%s0 + $0xe2] sm:$0xff]
    %v528 = vld [vmem:[%s0 + $0xf2] sm:$0xff]
    %v529 = vld [vmem:[%s0 + $0x102] sm:$0xff]
    %v530 = vld [vmem:[%s0 + $0x112] sm:$0xff]
    %s531 = scalar_lea.vmem %s1, 128
    %v532 = vld [vmem:[%s531] sm:$0xff]
    %v533 = vld [vmem:[%s531 + $0x8] sm:$0xff]
    %v534 = vld [vmem:[%s531 + $0x10] sm:$0xff]
    %v535 = vld [vmem:[%s531 + $0x18] sm:$0xff]
    %v536 = vld [vmem:[%s531 + $0x20] sm:$0xff]
    %v537 = vld [vmem:[%s531 + $0x28] sm:$0xff]
    %v538 = vld [vmem:[%s531 + $0x30] sm:$0xff]
    %v539 = vld [vmem:[%s531 + $0x38] sm:$0xf]
    %v541 = vsel %vm64, %v515, 0
    %v544 = vsel %vm64, %v516, 0
    %v547 = vsel %vm64, %v517, 0
    %v550 = vsel %vm64, %v518, 0
    %v553 = vsel %vm64, %v519, 0
    %v556 = vsel %vm64, %v520, 0
    %v559 = vsel %vm64, %v521, 0
    %v562 = vsel %vm64, %v522, 0
    %v565 = vsel %vm64, %v523, 0
    %v568 = vsel %vm64, %v524, 0
    %v571 = vsel %vm64, %v525, 0
    %v574 = vsel %vm64, %v526, 0
    %v577 = vsel %vm64, %v527, 0
    %v580 = vsel %vm64, %v528, 0
    %v583 = vsel %vm64, %v529, 0
    %v586 = vsel %vm64, %v530, 0
    %v589 = vsel %vm113, %v539, 0
    %591 = vmatprep.subr.mxu0 0.0
    %592 = vmatpush1.msra.mxu0 0.0
    %593 = vmatprep.subr.mxu0 0.0
    %594 = vmatpush1.msra.mxu0 0.0
    %595 = vmatprep.subr.mxu0 0.0
    %596 = vmatpush1.msra.mxu0 0.0
    %597 = vmatprep.subr.mxu0 0.0
    %598 = vmatpush1.msra.mxu0 0.0
    %599 = vmatprep.subr.mxu0 0.0
    %600 = vmatpush1.msra.mxu0 0.0
    %601 = vmatprep.subr.mxu0 0.0
    %602 = vmatpush1.msra.mxu0 0.0
    %603 = vmatprep.subr.mxu0 0.0
    %604 = vmatpush1.msra.mxu0 0.0
    %605 = vmatprep.subr.mxu0 0.0
    %606 = vmatpush1.msra.mxu0 0.0
    %607 = vmatprep.subr.mxu0 0.0
    %608 = vmatpush1.msra.mxu0 %v589
    %609 = vmatprep.subr.mxu0 0.0
    %610 = vmatpush1.msra.mxu0 %v538
    %611 = vmatprep.subr.mxu0 0.0
    %612 = vmatpush1.msra.mxu0 %v537
    %613 = vmatprep.subr.mxu0 0.0
    %614 = vmatpush1.msra.mxu0 %v536
    %615 = vmatprep.subr.mxu0 0.0
    %616 = vmatpush1.msra.mxu0 %v535
    %617 = vmatprep.subr.mxu0 0.0
    %618 = vmatpush1.msra.mxu0 %v534
    %619 = vmatprep.subr.mxu0 0.0
    %620 = vmatpush1.msra.mxu0 %v533
    %621 = vmatprep.subr.mxu0 0.0
    %622 = vmatpush1.msra.mxu0 %v532
    %623 = vmatprep.subr.mxu0 0.0
    %624 = vmatpush2.msra.mxu0 0.0
    %625 = vmatprep.subr.mxu0 0.0
    %626 = vmatpush2.msra.mxu0 0.0
    %627 = vmatprep.subr.mxu0 0.0
    %628 = vmatpush2.msra.mxu0 0.0
    %629 = vmatprep.subr.mxu0 0.0
    %630 = vmatpush2.msra.mxu0 0.0
    %631 = vmatprep.subr.mxu0 0.0
    %632 = vmatpush2.msra.mxu0 0.0
    %633 = vmatprep.subr.mxu0 0.0
    %634 = vmatpush2.msra.mxu0 0.0
    %635 = vmatprep.subr.mxu0 0.0
    %636 = vmatpush2.msra.mxu0 0.0
    %637 = vmatprep.subr.mxu0 0.0
    %638 = vmatpush2.msra.mxu0 0.0
    %639 = vmatprep.subr.mxu0 0.0
    %640 = vmatpush2.msra.mxu0 0.0
    %641 = vmatprep.subr.mxu0 0.0
    %642 = vmatpush2.msra.mxu0 0.0
    %643 = vmatprep.subr.mxu0 0.0
    %644 = vmatpush2.msra.mxu0 0.0
    %645 = vmatprep.subr.mxu0 0.0
    %646 = vmatpush2.msra.mxu0 0.0
    %647 = vmatprep.subr.mxu0 0.0
    %648 = vmatpush2.msra.mxu0 0.0
    %649 = vmatprep.subr.mxu0 0.0
    %650 = vmatpush2.msra.mxu0 0.0
    %651 = vmatprep.subr.mxu0 0.0
    %652 = vmatpush2.msra.mxu0 0.0
    %653 = vmatprep.subr.mxu0 0.0
    %654 = vmatpush2.msra.mxu0 0.0
    %655 = vmatprep.mubr.f32.mxu0 0.0
    %656 = vmatmul.mubr.f32.gmra.mxu0 %v541
    %v657 = vpop.f32.mrf.mxu0
    %v658 = vadd.f32 0.0, %v657
    %v659 = vpop.f32.mrf.mxu0
    %660 = vmatprep.mubr.f32.mxu0 0.0
    %661 = vmatmul.mubr.f32.gmra.mxu0 %v544
    %v662 = vpop.f32.mrf.mxu0
    %v663 = vadd.f32 0.0, %v662
    %v664 = vpop.f32.mrf.mxu0
    %665 = vmatprep.mubr.f32.mxu0 0.0
    %666 = vmatmul.mubr.f32.gmra.mxu0 %v547
    %v667 = vpop.f32.mrf.mxu0
    %v668 = vadd.f32 0.0, %v667
    %v669 = vpop.f32.mrf.mxu0
    %670 = vmatprep.mubr.f32.mxu0 0.0
    %671 = vmatmul.mubr.f32.gmra.mxu0 %v550
    %v672 = vpop.f32.mrf.mxu0
    %v673 = vadd.f32 0.0, %v672
    %v674 = vpop.f32.mrf.mxu0
    %675 = vmatprep.mubr.f32.mxu0 0.0
    %676 = vmatmul.mubr.f32.gmra.mxu0 %v553
    %v677 = vpop.f32.mrf.mxu0
    %v678 = vadd.f32 0.0, %v677
    %v679 = vpop.f32.mrf.mxu0
    %680 = vmatprep.mubr.f32.mxu0 0.0
    %681 = vmatmul.mubr.f32.gmra.mxu0 %v556
    %v682 = vpop.f32.mrf.mxu0
    %v683 = vadd.f32 0.0, %v682
    %v684 = vpop.f32.mrf.mxu0
    %685 = vmatprep.mubr.f32.mxu0 0.0
    %686 = vmatmul.mubr.f32.gmra.mxu0 %v559
    %v687 = vpop.f32.mrf.mxu0
    %v688 = vadd.f32 0.0, %v687
    %v689 = vpop.f32.mrf.mxu0
    %690 = vmatprep.mubr.f32.mxu0 0.0
    %691 = vmatmul.mubr.f32.gmra.mxu0 %v562
    %v692 = vpop.f32.mrf.mxu0
    %v693 = vadd.f32 0.0, %v692
    %v694 = vpop.f32.mrf.mxu0
    %695 = vmatprep.mubr.f32.mxu0 0.0
    %696 = vmatmul.mubr.f32.gmra.mxu0 %v565
    %v697 = vpop.f32.mrf.mxu0
    %v698 = vadd.f32 0.0, %v697
    %v699 = vpop.f32.mrf.mxu0
    %700 = vmatprep.mubr.f32.mxu0 0.0
    %701 = vmatmul.mubr.f32.gmra.mxu0 %v568
    %v702 = vpop.f32.mrf.mxu0
    %v703 = vadd.f32 0.0, %v702
    %v704 = vpop.f32.mrf.mxu0
    %705 = vmatprep.mubr.f32.mxu0 0.0
    %706 = vmatmul.mubr.f32.gmra.mxu0 %v571
    %v707 = vpop.f32.mrf.mxu0
    %v708 = vadd.f32 0.0, %v707
    %v709 = vpop.f32.mrf.mxu0
    %710 = vmatprep.mubr.f32.mxu0 0.0
    %711 = vmatmul.mubr.f32.gmra.mxu0 %v574
    %v712 = vpop.f32.mrf.mxu0
    %v713 = vadd.f32 0.0, %v712
    %v714 = vpop.f32.mrf.mxu0
    %715 = vmatprep.mubr.f32.mxu0 0.0
    %716 = vmatmul.mubr.f32.gmra.mxu0 %v577
    %v717 = vpop.f32.mrf.mxu0
    %v718 = vadd.f32 0.0, %v717
    %v719 = vpop.f32.mrf.mxu0
    %720 = vmatprep.mubr.f32.mxu0 0.0
    %721 = vmatmul.mubr.f32.gmra.mxu0 %v580
    %v722 = vpop.f32.mrf.mxu0
    %v723 = vadd.f32 0.0, %v722
    %v724 = vpop.f32.mrf.mxu0
    %725 = vmatprep.mubr.f32.mxu0 0.0
    %726 = vmatmul.mubr.f32.gmra.mxu0 %v583
    %v727 = vpop.f32.mrf.mxu0
    %v728 = vadd.f32 0.0, %v727
    %v729 = vpop.f32.mrf.mxu0
    %730 = vmatprep.mubr.f32.mxu0 0.0
    %731 = vmatmul.mubr.f32.gmra.mxu0 %v586
    %v732 = vpop.f32.mrf.mxu0
    %v733 = vadd.f32 0.0, %v732
    %v734 = vpop.f32.mrf.mxu0
    %735 = vdwg.mxu0
    %v736 = vadd.f32 %v499, %v658
    %v737 = vadd.f32 %v500, %v663
    %v738 = vadd.f32 %v501, %v668
    %v739 = vadd.f32 %v502, %v673
    %v740 = vadd.f32 %v503, %v678
    %v741 = vadd.f32 %v504, %v683
    %v742 = vadd.f32 %v505, %v688
    %v743 = vadd.f32 %v506, %v693
    %v744 = vadd.f32 %v507, %v698
    %v745 = vadd.f32 %v508, %v703
    %v746 = vadd.f32 %v509, %v708
    %v747 = vadd.f32 %v510, %v713
    %v748 = vadd.f32 %v511, %v718
    %v749 = vadd.f32 %v512, %v723
    %v750 = vadd.f32 %v513, %v728
    %v751 = vadd.f32 %v514, %v733
    %s752 = scalar_lea.vmem %s0, 16
    %v753 = vld [vmem:[%s752] sm:$0xff]
    %v754 = vld [vmem:[%s752 + $0x10] sm:$0xff]
    %v755 = vld [vmem:[%s752 + $0x20] sm:$0xff]
    %v756 = vld [vmem:[%s752 + $0x30] sm:$0xff]
    %v757 = vld [vmem:[%s752 + $0x40] sm:$0xff]
    %v758 = vld [vmem:[%s752 + $0x50] sm:$0xff]
    %v759 = vld [vmem:[%s752 + $0x60] sm:$0xff]
    %v760 = vld [vmem:[%s752 + $0x70] sm:$0xff]
    %v761 = vld [vmem:[%s752 + $0xa0] sm:$0xff]
    %v762 = vld [vmem:[%s752 + $0xb0] sm:$0xff]
    %v763 = vld [vmem:[%s752 + $0xc0] sm:$0xff]
    %v764 = vld [vmem:[%s752 + $0xd0] sm:$0xff]
    %v765 = vld [vmem:[%s752 + $0xe0] sm:$0xff]
    %v766 = vld [vmem:[%s752 + $0xf0] sm:$0xff]
    %v767 = vld [vmem:[%s752 + $0x100] sm:$0xff]
    %v768 = vld [vmem:[%s752 + $0x110] sm:$0xff]
    %s769 = scalar_lea.vmem %s1, 192
    %v770 = vld [vmem:[%s769] sm:$0xff]
    %v771 = vld [vmem:[%s769 + $0x8] sm:$0xff]
    %v772 = vld [vmem:[%s769 + $0x10] sm:$0xff]
    %v773 = vld [vmem:[%s769 + $0x18] sm:$0xff]
    %v774 = vld [vmem:[%s769 + $0x20] sm:$0xff]
    %v775 = vld [vmem:[%s769 + $0x28] sm:$0xff]
    %v776 = vld [vmem:[%s769 + $0x30] sm:$0xff]
    %v777 = vld [vmem:[%s769 + $0x38] sm:$0xf]
    %v779 = vsel %vm64, %v753, 0
    %v782 = vsel %vm64, %v754, 0
    %v785 = vsel %vm64, %v755, 0
    %v788 = vsel %vm64, %v756, 0
    %v791 = vsel %vm64, %v757, 0
    %v794 = vsel %vm64, %v758, 0
    %v797 = vsel %vm64, %v759, 0
    %v800 = vsel %vm64, %v760, 0
    %v803 = vsel %vm64, %v761, 0
    %v806 = vsel %vm64, %v762, 0
    %v809 = vsel %vm64, %v763, 0
    %v812 = vsel %vm64, %v764, 0
    %v815 = vsel %vm64, %v765, 0
    %v818 = vsel %vm64, %v766, 0
    %v821 = vsel %vm64, %v767, 0
    %v824 = vsel %vm64, %v768, 0
    %v827 = vsel %vm113, %v777, 0
    %829 = vmatprep.subr.mxu0 0.0
    %830 = vmatpush1.msra.mxu0 0.0
    %831 = vmatprep.subr.mxu0 0.0
    %832 = vmatpush1.msra.mxu0 0.0
    %833 = vmatprep.subr.mxu0 0.0
    %834 = vmatpush1.msra.mxu0 0.0
    %835 = vmatprep.subr.mxu0 0.0
    %836 = vmatpush1.msra.mxu0 0.0
    %837 = vmatprep.subr.mxu0 0.0
    %838 = vmatpush1.msra.mxu0 0.0
    %839 = vmatprep.subr.mxu0 0.0
    %840 = vmatpush1.msra.mxu0 0.0
    %841 = vmatprep.subr.mxu0 0.0
    %842 = vmatpush1.msra.mxu0 0.0
    %843 = vmatprep.subr.mxu0 0.0
    %844 = vmatpush1.msra.mxu0 0.0
    %845 = vmatprep.subr.mxu0 0.0
    %846 = vmatpush1.msra.mxu0 %v827
    %847 = vmatprep.subr.mxu0 0.0
    %848 = vmatpush1.msra.mxu0 %v776
    %849 = vmatprep.subr.mxu0 0.0
    %850 = vmatpush1.msra.mxu0 %v775
    %851 = vmatprep.subr.mxu0 0.0
    %852 = vmatpush1.msra.mxu0 %v774
    %853 = vmatprep.subr.mxu0 0.0
    %854 = vmatpush1.msra.mxu0 %v773
    %855 = vmatprep.subr.mxu0 0.0
    %856 = vmatpush1.msra.mxu0 %v772
    %857 = vmatprep.subr.mxu0 0.0
    %858 = vmatpush1.msra.mxu0 %v771
    %859 = vmatprep.subr.mxu0 0.0
    %860 = vmatpush1.msra.mxu0 %v770
    %861 = vmatprep.subr.mxu0 0.0
    %862 = vmatpush2.msra.mxu0 0.0
    %863 = vmatprep.subr.mxu0 0.0
    %864 = vmatpush2.msra.mxu0 0.0
    %865 = vmatprep.subr.mxu0 0.0
    %866 = vmatpush2.msra.mxu0 0.0
    %867 = vmatprep.subr.mxu0 0.0
    %868 = vmatpush2.msra.mxu0 0.0
    %869 = vmatprep.subr.mxu0 0.0
    %870 = vmatpush2.msra.mxu0 0.0
    %871 = vmatprep.subr.mxu0 0.0
    %872 = vmatpush2.msra.mxu0 0.0
    %873 = vmatprep.subr.mxu0 0.0
    %874 = vmatpush2.msra.mxu0 0.0
    %875 = vmatprep.subr.mxu0 0.0
    %876 = vmatpush2.msra.mxu0 0.0
    %877 = vmatprep.subr.mxu0 0.0
    %878 = vmatpush2.msra.mxu0 0.0
    %879 = vmatprep.subr.mxu0 0.0
    %880 = vmatpush2.msra.mxu0 0.0
    %881 = vmatprep.subr.mxu0 0.0
    %882 = vmatpush2.msra.mxu0 0.0
    %883 = vmatprep.subr.mxu0 0.0
    %884 = vmatpush2.msra.mxu0 0.0
    %885 = vmatprep.subr.mxu0 0.0
    %886 = vmatpush2.msra.mxu0 0.0
    %887 = vmatprep.subr.mxu0 0.0
    %888 = vmatpush2.msra.mxu0 0.0
    %889 = vmatprep.subr.mxu0 0.0
    %890 = vmatpush2.msra.mxu0 0.0
    %891 = vmatprep.subr.mxu0 0.0
    %892 = vmatpush2.msra.mxu0 0.0
    %893 = vmatprep.mubr.f32.mxu0 0.0
    %894 = vmatmul.mubr.f32.gmra.mxu0 %v779
    %v895 = vpop.f32.mrf.mxu0
    %v896 = vadd.f32 0.0, %v895
    %v897 = vpop.f32.mrf.mxu0
    %898 = vmatprep.mubr.f32.mxu0 0.0
    %899 = vmatmul.mubr.f32.gmra.mxu0 %v782
    %v900 = vpop.f32.mrf.mxu0
    %v901 = vadd.f32 0.0, %v900
    %v902 = vpop.f32.mrf.mxu0
    %903 = vmatprep.mubr.f32.mxu0 0.0
    %904 = vmatmul.mubr.f32.gmra.mxu0 %v785
    %v905 = vpop.f32.mrf.mxu0
    %v906 = vadd.f32 0.0, %v905
    %v907 = vpop.f32.mrf.mxu0
    %908 = vmatprep.mubr.f32.mxu0 0.0
    %909 = vmatmul.mubr.f32.gmra.mxu0 %v788
    %v910 = vpop.f32.mrf.mxu0
    %v911 = vadd.f32 0.0, %v910
    %v912 = vpop.f32.mrf.mxu0
    %913 = vmatprep.mubr.f32.mxu0 0.0
    %914 = vmatmul.mubr.f32.gmra.mxu0 %v791
    %v915 = vpop.f32.mrf.mxu0
    %v916 = vadd.f32 0.0, %v915
    %v917 = vpop.f32.mrf.mxu0
    %918 = vmatprep.mubr.f32.mxu0 0.0
    %919 = vmatmul.mubr.f32.gmra.mxu0 %v794
    %v920 = vpop.f32.mrf.mxu0
    %v921 = vadd.f32 0.0, %v920
    %v922 = vpop.f32.mrf.mxu0
    %923 = vmatprep.mubr.f32.mxu0 0.0
    %924 = vmatmul.mubr.f32.gmra.mxu0 %v797
    %v925 = vpop.f32.mrf.mxu0
    %v926 = vadd.f32 0.0, %v925
    %v927 = vpop.f32.mrf.mxu0
    %928 = vmatprep.mubr.f32.mxu0 0.0
    %929 = vmatmul.mubr.f32.gmra.mxu0 %v800
    %v930 = vpop.f32.mrf.mxu0
    %v931 = vadd.f32 0.0, %v930
    %v932 = vpop.f32.mrf.mxu0
    %933 = vmatprep.mubr.f32.mxu0 0.0
    %934 = vmatmul.mubr.f32.gmra.mxu0 %v803
    %v935 = vpop.f32.mrf.mxu0
    %v936 = vadd.f32 0.0, %v935
    %v937 = vpop.f32.mrf.mxu0
    %938 = vmatprep.mubr.f32.mxu0 0.0
    %939 = vmatmul.mubr.f32.gmra.mxu0 %v806
    %v940 = vpop.f32.mrf.mxu0
    %v941 = vadd.f32 0.0, %v940
    %v942 = vpop.f32.mrf.mxu0
    %943 = vmatprep.mubr.f32.mxu0 0.0
    %944 = vmatmul.mubr.f32.gmra.mxu0 %v809
    %v945 = vpop.f32.mrf.mxu0
    %v946 = vadd.f32 0.0, %v945
    %v947 = vpop.f32.mrf.mxu0
    %948 = vmatprep.mubr.f32.mxu0 0.0
    %949 = vmatmul.mubr.f32.gmra.mxu0 %v812
    %v950 = vpop.f32.mrf.mxu0
    %v951 = vadd.f32 0.0, %v950
    %v952 = vpop.f32.mrf.mxu0
    %953 = vmatprep.mubr.f32.mxu0 0.0
    %954 = vmatmul.mubr.f32.gmra.mxu0 %v815
    %v955 = vpop.f32.mrf.mxu0
    %v956 = vadd.f32 0.0, %v955
    %v957 = vpop.f32.mrf.mxu0
    %958 = vmatprep.mubr.f32.mxu0 0.0
    %959 = vmatmul.mubr.f32.gmra.mxu0 %v818
    %v960 = vpop.f32.mrf.mxu0
    %v961 = vadd.f32 0.0, %v960
    %v962 = vpop.f32.mrf.mxu0
    %963 = vmatprep.mubr.f32.mxu0 0.0
    %964 = vmatmul.mubr.f32.gmra.mxu0 %v821
    %v965 = vpop.f32.mrf.mxu0
    %v966 = vadd.f32 0.0, %v965
    %v967 = vpop.f32.mrf.mxu0
    %968 = vmatprep.mubr.f32.mxu0 0.0
    %969 = vmatmul.mubr.f32.gmra.mxu0 %v824
    %v970 = vpop.f32.mrf.mxu0
    %v971 = vadd.f32 0.0, %v970
    %v972 = vpop.f32.mrf.mxu0
    %973 = vdwg.mxu0
    %v974 = vadd.f32 %v736, %v896
    %v975 = vadd.f32 %v737, %v901
    %v976 = vadd.f32 %v738, %v906
    %v977 = vadd.f32 %v739, %v911
    %v978 = vadd.f32 %v740, %v916
    %v979 = vadd.f32 %v741, %v921
    %v980 = vadd.f32 %v742, %v926
    %v981 = vadd.f32 %v743, %v931
    %v982 = vadd.f32 %v744, %v936
    %v983 = vadd.f32 %v745, %v941
    %v984 = vadd.f32 %v746, %v946
    %v985 = vadd.f32 %v747, %v951
    %v986 = vadd.f32 %v748, %v956
    %v987 = vadd.f32 %v749, %v961
    %v988 = vadd.f32 %v750, %v966
    %v989 = vadd.f32 %v751, %v971
    %v990 = vld [vmem:[%s752 + $0x1] sm:$0xff]
    %v991 = vld [vmem:[%s752 + $0x11] sm:$0xff]
    %v992 = vld [vmem:[%s752 + $0x21] sm:$0xff]
    %v993 = vld [vmem:[%s752 + $0x31] sm:$0xff]
    %v994 = vld [vmem:[%s752 + $0x41] sm:$0xff]
    %v995 = vld [vmem:[%s752 + $0x51] sm:$0xff]
    %v996 = vld [vmem:[%s752 + $0x61] sm:$0xff]
    %v997 = vld [vmem:[%s752 + $0x71] sm:$0xff]
    %v998 = vld [vmem:[%s752 + $0xa1] sm:$0xff]
    %v999 = vld [vmem:[%s752 + $0xb1] sm:$0xff]
    %v1000 = vld [vmem:[%s752 + $0xc1] sm:$0xff]
    %v1001 = vld [vmem:[%s752 + $0xd1] sm:$0xff]
    %v1002 = vld [vmem:[%s752 + $0xe1] sm:$0xff]
    %v1003 = vld [vmem:[%s752 + $0xf1] sm:$0xff]
    %v1004 = vld [vmem:[%s752 + $0x101] sm:$0xff]
    %v1005 = vld [vmem:[%s752 + $0x111] sm:$0xff]
    %s1006 = scalar_lea.vmem %s1, 256
    %v1007 = vld [vmem:[%s1006] sm:$0xff]
    %v1008 = vld [vmem:[%s1006 + $0x8] sm:$0xff]
    %v1009 = vld [vmem:[%s1006 + $0x10] sm:$0xff]
    %v1010 = vld [vmem:[%s1006 + $0x18] sm:$0xff]
    %v1011 = vld [vmem:[%s1006 + $0x20] sm:$0xff]
    %v1012 = vld [vmem:[%s1006 + $0x28] sm:$0xff]
    %v1013 = vld [vmem:[%s1006 + $0x30] sm:$0xff]
    %v1014 = vld [vmem:[%s1006 + $0x38] sm:$0xf]
    %v1016 = vsel %vm64, %v990, 0
    %v1019 = vsel %vm64, %v991, 0
    %v1022 = vsel %vm64, %v992, 0
    %v1025 = vsel %vm64, %v993, 0
    %v1028 = vsel %vm64, %v994, 0
    %v1031 = vsel %vm64, %v995, 0
    %v1034 = vsel %vm64, %v996, 0
    %v1037 = vsel %vm64, %v997, 0
    %v1040 = vsel %vm64, %v998, 0
    %v1043 = vsel %vm64, %v999, 0
    %v1046 = vsel %vm64, %v1000, 0
    %v1049 = vsel %vm64, %v1001, 0
    %v1052 = vsel %vm64, %v1002, 0
    %v1055 = vsel %vm64, %v1003, 0
    %v1058 = vsel %vm64, %v1004, 0
    %v1061 = vsel %vm64, %v1005, 0
    %v1064 = vsel %vm113, %v1014, 0
    %1066 = vmatprep.subr.mxu0 0.0
    %1067 = vmatpush1.msra.mxu0 0.0
    %1068 = vmatprep.subr.mxu0 0.0
    %1069 = vmatpush1.msra.mxu0 0.0
    %1070 = vmatprep.subr.mxu0 0.0
    %1071 = vmatpush1.msra.mxu0 0.0
    %1072 = vmatprep.subr.mxu0 0.0
    %1073 = vmatpush1.msra.mxu0 0.0
    %1074 = vmatprep.subr.mxu0 0.0
    %1075 = vmatpush1.msra.mxu0 0.0
    %1076 = vmatprep.subr.mxu0 0.0
    %1077 = vmatpush1.msra.mxu0 0.0
    %1078 = vmatprep.subr.mxu0 0.0
    %1079 = vmatpush1.msra.mxu0 0.0
    %1080 = vmatprep.subr.mxu0 0.0
    %1081 = vmatpush1.msra.mxu0 0.0
    %1082 = vmatprep.subr.mxu0 0.0
    %1083 = vmatpush1.msra.mxu0 %v1064
    %1084 = vmatprep.subr.mxu0 0.0
    %1085 = vmatpush1.msra.mxu0 %v1013
    %1086 = vmatprep.subr.mxu0 0.0
    %1087 = vmatpush1.msra.mxu0 %v1012
    %1088 = vmatprep.subr.mxu0 0.0
    %1089 = vmatpush1.msra.mxu0 %v1011
    %1090 = vmatprep.subr.mxu0 0.0
    %1091 = vmatpush1.msra.mxu0 %v1010
    %1092 = vmatprep.subr.mxu0 0.0
    %1093 = vmatpush1.msra.mxu0 %v1009
    %1094 = vmatprep.subr.mxu0 0.0
    %1095 = vmatpush1.msra.mxu0 %v1008
    %1096 = vmatprep.subr.mxu0 0.0
    %1097 = vmatpush1.msra.mxu0 %v1007
    %1098 = vmatprep.subr.mxu0 0.0
    %1099 = vmatpush2.msra.mxu0 0.0
    %1100 = vmatprep.subr.mxu0 0.0
    %1101 = vmatpush2.msra.mxu0 0.0
    %1102 = vmatprep.subr.mxu0 0.0
    %1103 = vmatpush2.msra.mxu0 0.0
    %1104 = vmatprep.subr.mxu0 0.0
    %1105 = vmatpush2.msra.mxu0 0.0
    %1106 = vmatprep.subr.mxu0 0.0
    %1107 = vmatpush2.msra.mxu0 0.0
    %1108 = vmatprep.subr.mxu0 0.0
    %1109 = vmatpush2.msra.mxu0 0.0
    %1110 = vmatprep.subr.mxu0 0.0
    %1111 = vmatpush2.msra.mxu0 0.0
    %1112 = vmatprep.subr.mxu0 0.0
    %1113 = vmatpush2.msra.mxu0 0.0
    %1114 = vmatprep.subr.mxu0 0.0
    %1115 = vmatpush2.msra.mxu0 0.0
    %1116 = vmatprep.subr.mxu0 0.0
    %1117 = vmatpush2.msra.mxu0 0.0
    %1118 = vmatprep.subr.mxu0 0.0
    %1119 = vmatpush2.msra.mxu0 0.0
    %1120 = vmatprep.subr.mxu0 0.0
    %1121 = vmatpush2.msra.mxu0 0.0
    %1122 = vmatprep.subr.mxu0 0.0
    %1123 = vmatpush2.msra.mxu0 0.0
    %1124 = vmatprep.subr.mxu0 0.0
    %1125 = vmatpush2.msra.mxu0 0.0
    %1126 = vmatprep.subr.mxu0 0.0
    %1127 = vmatpush2.msra.mxu0 0.0
    %1128 = vmatprep.subr.mxu0 0.0
    %1129 = vmatpush2.msra.mxu0 0.0
    %1130 = vmatprep.mubr.f32.mxu0 0.0
    %1131 = vmatmul.mubr.f32.gmra.mxu0 %v1016
    %v1132 = vpop.f32.mrf.mxu0
    %v1133 = vadd.f32 0.0, %v1132
    %v1134 = vpop.f32.mrf.mxu0
    %1135 = vmatprep.mubr.f32.mxu0 0.0
    %1136 = vmatmul.mubr.f32.gmra.mxu0 %v1019
    %v1137 = vpop.f32.mrf.mxu0
    %v1138 = vadd.f32 0.0, %v1137
    %v1139 = vpop.f32.mrf.mxu0
    %1140 = vmatprep.mubr.f32.mxu0 0.0
    %1141 = vmatmul.mubr.f32.gmra.mxu0 %v1022
    %v1142 = vpop.f32.mrf.mxu0
    %v1143 = vadd.f32 0.0, %v1142
    %v1144 = vpop.f32.mrf.mxu0
    %1145 = vmatprep.mubr.f32.mxu0 0.0
    %1146 = vmatmul.mubr.f32.gmra.mxu0 %v1025
    %v1147 = vpop.f32.mrf.mxu0
    %v1148 = vadd.f32 0.0, %v1147
    %v1149 = vpop.f32.mrf.mxu0
    %1150 = vmatprep.mubr.f32.mxu0 0.0
    %1151 = vmatmul.mubr.f32.gmra.mxu0 %v1028
    %v1152 = vpop.f32.mrf.mxu0
    %v1153 = vadd.f32 0.0, %v1152
    %v1154 = vpop.f32.mrf.mxu0
    %1155 = vmatprep.mubr.f32.mxu0 0.0
    %1156 = vmatmul.mubr.f32.gmra.mxu0 %v1031
    %v1157 = vpop.f32.mrf.mxu0
    %v1158 = vadd.f32 0.0, %v1157
    %v1159 = vpop.f32.mrf.mxu0
    %1160 = vmatprep.mubr.f32.mxu0 0.0
    %1161 = vmatmul.mubr.f32.gmra.mxu0 %v1034
    %v1162 = vpop.f32.mrf.mxu0
    %v1163 = vadd.f32 0.0, %v1162
    %v1164 = vpop.f32.mrf.mxu0
    %1165 = vmatprep.mubr.f32.mxu0 0.0
    %1166 = vmatmul.mubr.f32.gmra.mxu0 %v1037
    %v1167 = vpop.f32.mrf.mxu0
    %v1168 = vadd.f32 0.0, %v1167
    %v1169 = vpop.f32.mrf.mxu0
    %1170 = vmatprep.mubr.f32.mxu0 0.0
    %1171 = vmatmul.mubr.f32.gmra.mxu0 %v1040
    %v1172 = vpop.f32.mrf.mxu0
    %v1173 = vadd.f32 0.0, %v1172
    %v1174 = vpop.f32.mrf.mxu0
    %1175 = vmatprep.mubr.f32.mxu0 0.0
    %1176 = vmatmul.mubr.f32.gmra.mxu0 %v1043
    %v1177 = vpop.f32.mrf.mxu0
    %v1178 = vadd.f32 0.0, %v1177
    %v1179 = vpop.f32.mrf.mxu0
    %1180 = vmatprep.mubr.f32.mxu0 0.0
    %1181 = vmatmul.mubr.f32.gmra.mxu0 %v1046
    %v1182 = vpop.f32.mrf.mxu0
    %v1183 = vadd.f32 0.0, %v1182
    %v1184 = vpop.f32.mrf.mxu0
    %1185 = vmatprep.mubr.f32.mxu0 0.0
    %1186 = vmatmul.mubr.f32.gmra.mxu0 %v1049
    %v1187 = vpop.f32.mrf.mxu0
    %v1188 = vadd.f32 0.0, %v1187
    %v1189 = vpop.f32.mrf.mxu0
    %1190 = vmatprep.mubr.f32.mxu0 0.0
    %1191 = vmatmul.mubr.f32.gmra.mxu0 %v1052
    %v1192 = vpop.f32.mrf.mxu0
    %v1193 = vadd.f32 0.0, %v1192
    %v1194 = vpop.f32.mrf.mxu0
    %1195 = vmatprep.mubr.f32.mxu0 0.0
    %1196 = vmatmul.mubr.f32.gmra.mxu0 %v1055
    %v1197 = vpop.f32.mrf.mxu0
    %v1198 = vadd.f32 0.0, %v1197
    %v1199 = vpop.f32.mrf.mxu0
    %1200 = vmatprep.mubr.f32.mxu0 0.0
    %1201 = vmatmul.mubr.f32.gmra.mxu0 %v1058
    %v1202 = vpop.f32.mrf.mxu0
    %v1203 = vadd.f32 0.0, %v1202
    %v1204 = vpop.f32.mrf.mxu0
    %1205 = vmatprep.mubr.f32.mxu0 0.0
    %1206 = vmatmul.mubr.f32.gmra.mxu0 %v1061
    %v1207 = vpop.f32.mrf.mxu0
    %v1208 = vadd.f32 0.0, %v1207
    %v1209 = vpop.f32.mrf.mxu0
    %1210 = vdwg.mxu0
    %v1211 = vadd.f32 %v974, %v1133
    %v1212 = vadd.f32 %v975, %v1138
    %v1213 = vadd.f32 %v976, %v1143
    %v1214 = vadd.f32 %v977, %v1148
    %v1215 = vadd.f32 %v978, %v1153
    %v1216 = vadd.f32 %v979, %v1158
    %v1217 = vadd.f32 %v980, %v1163
    %v1218 = vadd.f32 %v981, %v1168
    %v1219 = vadd.f32 %v982, %v1173
    %v1220 = vadd.f32 %v983, %v1178
    %v1221 = vadd.f32 %v984, %v1183
    %v1222 = vadd.f32 %v985, %v1188
    %v1223 = vadd.f32 %v986, %v1193
    %v1224 = vadd.f32 %v987, %v1198
    %v1225 = vadd.f32 %v988, %v1203
    %v1226 = vadd.f32 %v989, %v1208
    %v1227 = vld [vmem:[%s752 + $0x2] sm:$0xff]
    %v1228 = vld [vmem:[%s752 + $0x12] sm:$0xff]
    %v1229 = vld [vmem:[%s752 + $0x22] sm:$0xff]
    %v1230 = vld [vmem:[%s752 + $0x32] sm:$0xff]
    %v1231 = vld [vmem:[%s752 + $0x42] sm:$0xff]
    %v1232 = vld [vmem:[%s752 + $0x52] sm:$0xff]
    %v1233 = vld [vmem:[%s752 + $0x62] sm:$0xff]
    %v1234 = vld [vmem:[%s752 + $0x72] sm:$0xff]
    %v1235 = vld [vmem:[%s752 + $0xa2] sm:$0xff]
    %v1236 = vld [vmem:[%s752 + $0xb2] sm:$0xff]
    %v1237 = vld [vmem:[%s752 + $0xc2] sm:$0xff]
    %v1238 = vld [vmem:[%s752 + $0xd2] sm:$0xff]
    %v1239 = vld [vmem:[%s752 + $0xe2] sm:$0xff]
    %v1240 = vld [vmem:[%s752 + $0xf2] sm:$0xff]
    %v1241 = vld [vmem:[%s752 + $0x102] sm:$0xff]
    %v1242 = vld [vmem:[%s752 + $0x112] sm:$0xff]
    %s1243 = scalar_lea.vmem %s1, 320
    %v1244 = vld [vmem:[%s1243] sm:$0xff]
    %v1245 = vld [vmem:[%s1243 + $0x8] sm:$0xff]
    %v1246 = vld [vmem:[%s1243 + $0x10] sm:$0xff]
    %v1247 = vld [vmem:[%s1243 + $0x18] sm:$0xff]
    %v1248 = vld [vmem:[%s1243 + $0x20] sm:$0xff]
    %v1249 = vld [vmem:[%s1243 + $0x28] sm:$0xff]
    %v1250 = vld [vmem:[%s1243 + $0x30] sm:$0xff]
    %v1251 = vld [vmem:[%s1243 + $0x38] sm:$0xf]
    %v1253 = vsel %vm64, %v1227, 0
    %v1256 = vsel %vm64, %v1228, 0
    %v1259 = vsel %vm64, %v1229, 0
    %v1262 = vsel %vm64, %v1230, 0
    %v1265 = vsel %vm64, %v1231, 0
    %v1268 = vsel %vm64, %v1232, 0
    %v1271 = vsel %vm64, %v1233, 0
    %v1274 = vsel %vm64, %v1234, 0
    %v1277 = vsel %vm64, %v1235, 0
    %v1280 = vsel %vm64, %v1236, 0
    %v1283 = vsel %vm64, %v1237, 0
    %v1286 = vsel %vm64, %v1238, 0
    %v1289 = vsel %vm64, %v1239, 0
    %v1292 = vsel %vm64, %v1240, 0
    %v1295 = vsel %vm64, %v1241, 0
    %v1298 = vsel %vm64, %v1242, 0
    %v1301 = vsel %vm113, %v1251, 0
    %1303 = vmatprep.subr.mxu0 0.0
    %1304 = vmatpush1.msra.mxu0 0.0
    %1305 = vmatprep.subr.mxu0 0.0
    %1306 = vmatpush1.msra.mxu0 0.0
    %1307 = vmatprep.subr.mxu0 0.0
    %1308 = vmatpush1.msra.mxu0 0.0
    %1309 = vmatprep.subr.mxu0 0.0
    %1310 = vmatpush1.msra.mxu0 0.0
    %1311 = vmatprep.subr.mxu0 0.0
    %1312 = vmatpush1.msra.mxu0 0.0
    %1313 = vmatprep.subr.mxu0 0.0
    %1314 = vmatpush1.msra.mxu0 0.0
    %1315 = vmatprep.subr.mxu0 0.0
    %1316 = vmatpush1.msra.mxu0 0.0
    %1317 = vmatprep.subr.mxu0 0.0
    %1318 = vmatpush1.msra.mxu0 0.0
    %1319 = vmatprep.subr.mxu0 0.0
    %1320 = vmatpush1.msra.mxu0 %v1301
    %1321 = vmatprep.subr.mxu0 0.0
    %1322 = vmatpush1.msra.mxu0 %v1250
    %1323 = vmatprep.subr.mxu0 0.0
    %1324 = vmatpush1.msra.mxu0 %v1249
    %1325 = vmatprep.subr.mxu0 0.0
    %1326 = vmatpush1.msra.mxu0 %v1248
    %1327 = vmatprep.subr.mxu0 0.0
    %1328 = vmatpush1.msra.mxu0 %v1247
    %1329 = vmatprep.subr.mxu0 0.0
    %1330 = vmatpush1.msra.mxu0 %v1246
    %1331 = vmatprep.subr.mxu0 0.0
    %1332 = vmatpush1.msra.mxu0 %v1245
    %1333 = vmatprep.subr.mxu0 0.0
    %1334 = vmatpush1.msra.mxu0 %v1244
    %1335 = vmatprep.subr.mxu0 0.0
    %1336 = vmatpush2.msra.mxu0 0.0
    %1337 = vmatprep.subr.mxu0 0.0
    %1338 = vmatpush2.msra.mxu0 0.0
    %1339 = vmatprep.subr.mxu0 0.0
    %1340 = vmatpush2.msra.mxu0 0.0
    %1341 = vmatprep.subr.mxu0 0.0
    %1342 = vmatpush2.msra.mxu0 0.0
    %1343 = vmatprep.subr.mxu0 0.0
    %1344 = vmatpush2.msra.mxu0 0.0
    %1345 = vmatprep.subr.mxu0 0.0
    %1346 = vmatpush2.msra.mxu0 0.0
    %1347 = vmatprep.subr.mxu0 0.0
    %1348 = vmatpush2.msra.mxu0 0.0
    %1349 = vmatprep.subr.mxu0 0.0
    %1350 = vmatpush2.msra.mxu0 0.0
    %1351 = vmatprep.subr.mxu0 0.0
    %1352 = vmatpush2.msra.mxu0 0.0
    %1353 = vmatprep.subr.mxu0 0.0
    %1354 = vmatpush2.msra.mxu0 0.0
    %1355 = vmatprep.subr.mxu0 0.0
    %1356 = vmatpush2.msra.mxu0 0.0
    %1357 = vmatprep.subr.mxu0 0.0
    %1358 = vmatpush2.msra.mxu0 0.0
    %1359 = vmatprep.subr.mxu0 0.0
    %1360 = vmatpush2.msra.mxu0 0.0
    %1361 = vmatprep.subr.mxu0 0.0
    %1362 = vmatpush2.msra.mxu0 0.0
    %1363 = vmatprep.subr.mxu0 0.0
    %1364 = vmatpush2.msra.mxu0 0.0
    %1365 = vmatprep.subr.mxu0 0.0
    %1366 = vmatpush2.msra.mxu0 0.0
    %1367 = vmatprep.mubr.f32.mxu0 0.0
    %1368 = vmatmul.mubr.f32.gmra.mxu0 %v1253
    %v1369 = vpop.f32.mrf.mxu0
    %v1370 = vadd.f32 0.0, %v1369
    %v1371 = vpop.f32.mrf.mxu0
    %1372 = vmatprep.mubr.f32.mxu0 0.0
    %1373 = vmatmul.mubr.f32.gmra.mxu0 %v1256
    %v1374 = vpop.f32.mrf.mxu0
    %v1375 = vadd.f32 0.0, %v1374
    %v1376 = vpop.f32.mrf.mxu0
    %1377 = vmatprep.mubr.f32.mxu0 0.0
    %1378 = vmatmul.mubr.f32.gmra.mxu0 %v1259
    %v1379 = vpop.f32.mrf.mxu0
    %v1380 = vadd.f32 0.0, %v1379
    %v1381 = vpop.f32.mrf.mxu0
    %1382 = vmatprep.mubr.f32.mxu0 0.0
    %1383 = vmatmul.mubr.f32.gmra.mxu0 %v1262
    %v1384 = vpop.f32.mrf.mxu0
    %v1385 = vadd.f32 0.0, %v1384
    %v1386 = vpop.f32.mrf.mxu0
    %1387 = vmatprep.mubr.f32.mxu0 0.0
    %1388 = vmatmul.mubr.f32.gmra.mxu0 %v1265
    %v1389 = vpop.f32.mrf.mxu0
    %v1390 = vadd.f32 0.0, %v1389
    %v1391 = vpop.f32.mrf.mxu0
    %1392 = vmatprep.mubr.f32.mxu0 0.0
    %1393 = vmatmul.mubr.f32.gmra.mxu0 %v1268
    %v1394 = vpop.f32.mrf.mxu0
    %v1395 = vadd.f32 0.0, %v1394
    %v1396 = vpop.f32.mrf.mxu0
    %1397 = vmatprep.mubr.f32.mxu0 0.0
    %1398 = vmatmul.mubr.f32.gmra.mxu0 %v1271
    %v1399 = vpop.f32.mrf.mxu0
    %v1400 = vadd.f32 0.0, %v1399
    %v1401 = vpop.f32.mrf.mxu0
    %1402 = vmatprep.mubr.f32.mxu0 0.0
    %1403 = vmatmul.mubr.f32.gmra.mxu0 %v1274
    %v1404 = vpop.f32.mrf.mxu0
    %v1405 = vadd.f32 0.0, %v1404
    %v1406 = vpop.f32.mrf.mxu0
    %1407 = vmatprep.mubr.f32.mxu0 0.0
    %1408 = vmatmul.mubr.f32.gmra.mxu0 %v1277
    %v1409 = vpop.f32.mrf.mxu0
    %v1410 = vadd.f32 0.0, %v1409
    %v1411 = vpop.f32.mrf.mxu0
    %1412 = vmatprep.mubr.f32.mxu0 0.0
    %1413 = vmatmul.mubr.f32.gmra.mxu0 %v1280
    %v1414 = vpop.f32.mrf.mxu0
    %v1415 = vadd.f32 0.0, %v1414
    %v1416 = vpop.f32.mrf.mxu0
    %1417 = vmatprep.mubr.f32.mxu0 0.0
    %1418 = vmatmul.mubr.f32.gmra.mxu0 %v1283
    %v1419 = vpop.f32.mrf.mxu0
    %v1420 = vadd.f32 0.0, %v1419
    %v1421 = vpop.f32.mrf.mxu0
    %1422 = vmatprep.mubr.f32.mxu0 0.0
    %1423 = vmatmul.mubr.f32.gmra.mxu0 %v1286
    %v1424 = vpop.f32.mrf.mxu0
    %v1425 = vadd.f32 0.0, %v1424
    %v1426 = vpop.f32.mrf.mxu0
    %1427 = vmatprep.mubr.f32.mxu0 0.0
    %1428 = vmatmul.mubr.f32.gmra.mxu0 %v1289
    %v1429 = vpop.f32.mrf.mxu0
    %v1430 = vadd.f32 0.0, %v1429
    %v1431 = vpop.f32.mrf.mxu0
    %1432 = vmatprep.mubr.f32.mxu0 0.0
    %1433 = vmatmul.mubr.f32.gmra.mxu0 %v1292
    %v1434 = vpop.f32.mrf.mxu0
    %v1435 = vadd.f32 0.0, %v1434
    %v1436 = vpop.f32.mrf.mxu0
    %1437 = vmatprep.mubr.f32.mxu0 0.0
    %1438 = vmatmul.mubr.f32.gmra.mxu0 %v1295
    %v1439 = vpop.f32.mrf.mxu0
    %v1440 = vadd.f32 0.0, %v1439
    %v1441 = vpop.f32.mrf.mxu0
    %1442 = vmatprep.mubr.f32.mxu0 0.0
    %1443 = vmatmul.mubr.f32.gmra.mxu0 %v1298
    %v1444 = vpop.f32.mrf.mxu0
    %v1445 = vadd.f32 0.0, %v1444
    %v1446 = vpop.f32.mrf.mxu0
    %1447 = vdwg.mxu0
    %v1448 = vadd.f32 %v1211, %v1370
    %v1449 = vadd.f32 %v1212, %v1375
    %v1450 = vadd.f32 %v1213, %v1380
    %v1451 = vadd.f32 %v1214, %v1385
    %v1452 = vadd.f32 %v1215, %v1390
    %v1453 = vadd.f32 %v1216, %v1395
    %v1454 = vadd.f32 %v1217, %v1400
    %v1455 = vadd.f32 %v1218, %v1405
    %v1456 = vadd.f32 %v1219, %v1410
    %v1457 = vadd.f32 %v1220, %v1415
    %v1458 = vadd.f32 %v1221, %v1420
    %v1459 = vadd.f32 %v1222, %v1425
    %v1460 = vadd.f32 %v1223, %v1430
    %v1461 = vadd.f32 %v1224, %v1435
    %v1462 = vadd.f32 %v1225, %v1440
    %v1463 = vadd.f32 %v1226, %v1445
    %s1464 = scalar_lea.vmem %s0, 32
    %v1465 = vld [vmem:[%s1464] sm:$0xff]
    %v1466 = vld [vmem:[%s1464 + $0x10] sm:$0xff]
    %v1467 = vld [vmem:[%s1464 + $0x20] sm:$0xff]
    %v1468 = vld [vmem:[%s1464 + $0x30] sm:$0xff]
    %v1469 = vld [vmem:[%s1464 + $0x40] sm:$0xff]
    %v1470 = vld [vmem:[%s1464 + $0x50] sm:$0xff]
    %v1471 = vld [vmem:[%s1464 + $0x60] sm:$0xff]
    %v1472 = vld [vmem:[%s1464 + $0x70] sm:$0xff]
    %v1473 = vld [vmem:[%s1464 + $0xa0] sm:$0xff]
    %v1474 = vld [vmem:[%s1464 + $0xb0] sm:$0xff]
    %v1475 = vld [vmem:[%s1464 + $0xc0] sm:$0xff]
    %v1476 = vld [vmem:[%s1464 + $0xd0] sm:$0xff]
    %v1477 = vld [vmem:[%s1464 + $0xe0] sm:$0xff]
    %v1478 = vld [vmem:[%s1464 + $0xf0] sm:$0xff]
    %v1479 = vld [vmem:[%s1464 + $0x100] sm:$0xff]
    %v1480 = vld [vmem:[%s1464 + $0x110] sm:$0xff]
    %s1481 = scalar_lea.vmem %s1, 384
    %v1482 = vld [vmem:[%s1481] sm:$0xff]
    %v1483 = vld [vmem:[%s1481 + $0x8] sm:$0xff]
    %v1484 = vld [vmem:[%s1481 + $0x10] sm:$0xff]
    %v1485 = vld [vmem:[%s1481 + $0x18] sm:$0xff]
    %v1486 = vld [vmem:[%s1481 + $0x20] sm:$0xff]
    %v1487 = vld [vmem:[%s1481 + $0x28] sm:$0xff]
    %v1488 = vld [vmem:[%s1481 + $0x30] sm:$0xff]
    %v1489 = vld [vmem:[%s1481 + $0x38] sm:$0xf]
    %v1491 = vsel %vm64, %v1465, 0
    %v1494 = vsel %vm64, %v1466, 0
    %v1497 = vsel %vm64, %v1467, 0
    %v1500 = vsel %vm64, %v1468, 0
    %v1503 = vsel %vm64, %v1469, 0
    %v1506 = vsel %vm64, %v1470, 0
    %v1509 = vsel %vm64, %v1471, 0
    %v1512 = vsel %vm64, %v1472, 0
    %v1515 = vsel %vm64, %v1473, 0
    %v1518 = vsel %vm64, %v1474, 0
    %v1521 = vsel %vm64, %v1475, 0
    %v1524 = vsel %vm64, %v1476, 0
    %v1527 = vsel %vm64, %v1477, 0
    %v1530 = vsel %vm64, %v1478, 0
    %v1533 = vsel %vm64, %v1479, 0
    %v1536 = vsel %vm64, %v1480, 0
    %v1539 = vsel %vm113, %v1489, 0
    %1541 = vmatprep.subr.mxu0 0.0
    %1542 = vmatpush1.msra.mxu0 0.0
    %1543 = vmatprep.subr.mxu0 0.0
    %1544 = vmatpush1.msra.mxu0 0.0
    %1545 = vmatprep.subr.mxu0 0.0
    %1546 = vmatpush1.msra.mxu0 0.0
    %1547 = vmatprep.subr.mxu0 0.0
    %1548 = vmatpush1.msra.mxu0 0.0
    %1549 = vmatprep.subr.mxu0 0.0
    %1550 = vmatpush1.msra.mxu0 0.0
    %1551 = vmatprep.subr.mxu0 0.0
    %1552 = vmatpush1.msra.mxu0 0.0
    %1553 = vmatprep.subr.mxu0 0.0
    %1554 = vmatpush1.msra.mxu0 0.0
    %1555 = vmatprep.subr.mxu0 0.0
    %1556 = vmatpush1.msra.mxu0 0.0
    %1557 = vmatprep.subr.mxu0 0.0
    %1558 = vmatpush1.msra.mxu0 %v1539
    %1559 = vmatprep.subr.mxu0 0.0
    %1560 = vmatpush1.msra.mxu0 %v1488
    %1561 = vmatprep.subr.mxu0 0.0
    %1562 = vmatpush1.msra.mxu0 %v1487
    %1563 = vmatprep.subr.mxu0 0.0
    %1564 = vmatpush1.msra.mxu0 %v1486
    %1565 = vmatprep.subr.mxu0 0.0
    %1566 = vmatpush1.msra.mxu0 %v1485
    %1567 = vmatprep.subr.mxu0 0.0
    %1568 = vmatpush1.msra.mxu0 %v1484
    %1569 = vmatprep.subr.mxu0 0.0
    %1570 = vmatpush1.msra.mxu0 %v1483
    %1571 = vmatprep.subr.mxu0 0.0
    %1572 = vmatpush1.msra.mxu0 %v1482
    %1573 = vmatprep.subr.mxu0 0.0
    %1574 = vmatpush2.msra.mxu0 0.0
    %1575 = vmatprep.subr.mxu0 0.0
    %1576 = vmatpush2.msra.mxu0 0.0
    %1577 = vmatprep.subr.mxu0 0.0
    %1578 = vmatpush2.msra.mxu0 0.0
    %1579 = vmatprep.subr.mxu0 0.0
    %1580 = vmatpush2.msra.mxu0 0.0
    %1581 = vmatprep.subr.mxu0 0.0
    %1582 = vmatpush2.msra.mxu0 0.0
    %1583 = vmatprep.subr.mxu0 0.0
    %1584 = vmatpush2.msra.mxu0 0.0
    %1585 = vmatprep.subr.mxu0 0.0
    %1586 = vmatpush2.msra.mxu0 0.0
    %1587 = vmatprep.subr.mxu0 0.0
    %1588 = vmatpush2.msra.mxu0 0.0
    %1589 = vmatprep.subr.mxu0 0.0
    %1590 = vmatpush2.msra.mxu0 0.0
    %1591 = vmatprep.subr.mxu0 0.0
    %1592 = vmatpush2.msra.mxu0 0.0
    %1593 = vmatprep.subr.mxu0 0.0
    %1594 = vmatpush2.msra.mxu0 0.0
    %1595 = vmatprep.subr.mxu0 0.0
    %1596 = vmatpush2.msra.mxu0 0.0
    %1597 = vmatprep.subr.mxu0 0.0
    %1598 = vmatpush2.msra.mxu0 0.0
    %1599 = vmatprep.subr.mxu0 0.0
    %1600 = vmatpush2.msra.mxu0 0.0
    %1601 = vmatprep.subr.mxu0 0.0
    %1602 = vmatpush2.msra.mxu0 0.0
    %1603 = vmatprep.subr.mxu0 0.0
    %1604 = vmatpush2.msra.mxu0 0.0
    %1605 = vmatprep.mubr.f32.mxu0 0.0
    %1606 = vmatmul.mubr.f32.gmra.mxu0 %v1491
    %v1607 = vpop.f32.mrf.mxu0
    %v1608 = vadd.f32 0.0, %v1607
    %v1609 = vpop.f32.mrf.mxu0
    %1610 = vmatprep.mubr.f32.mxu0 0.0
    %1611 = vmatmul.mubr.f32.gmra.mxu0 %v1494
    %v1612 = vpop.f32.mrf.mxu0
    %v1613 = vadd.f32 0.0, %v1612
    %v1614 = vpop.f32.mrf.mxu0
    %1615 = vmatprep.mubr.f32.mxu0 0.0
    %1616 = vmatmul.mubr.f32.gmra.mxu0 %v1497
    %v1617 = vpop.f32.mrf.mxu0
    %v1618 = vadd.f32 0.0, %v1617
    %v1619 = vpop.f32.mrf.mxu0
    %1620 = vmatprep.mubr.f32.mxu0 0.0
    %1621 = vmatmul.mubr.f32.gmra.mxu0 %v1500
    %v1622 = vpop.f32.mrf.mxu0
    %v1623 = vadd.f32 0.0, %v1622
    %v1624 = vpop.f32.mrf.mxu0
    %1625 = vmatprep.mubr.f32.mxu0 0.0
    %1626 = vmatmul.mubr.f32.gmra.mxu0 %v1503
    %v1627 = vpop.f32.mrf.mxu0
    %v1628 = vadd.f32 0.0, %v1627
    %v1629 = vpop.f32.mrf.mxu0
    %1630 = vmatprep.mubr.f32.mxu0 0.0
    %1631 = vmatmul.mubr.f32.gmra.mxu0 %v1506
    %v1632 = vpop.f32.mrf.mxu0
    %v1633 = vadd.f32 0.0, %v1632
    %v1634 = vpop.f32.mrf.mxu0
    %1635 = vmatprep.mubr.f32.mxu0 0.0
    %1636 = vmatmul.mubr.f32.gmra.mxu0 %v1509
    %v1637 = vpop.f32.mrf.mxu0
    %v1638 = vadd.f32 0.0, %v1637
    %v1639 = vpop.f32.mrf.mxu0
    %1640 = vmatprep.mubr.f32.mxu0 0.0
    %1641 = vmatmul.mubr.f32.gmra.mxu0 %v1512
    %v1642 = vpop.f32.mrf.mxu0
    %v1643 = vadd.f32 0.0, %v1642
    %v1644 = vpop.f32.mrf.mxu0
    %1645 = vmatprep.mubr.f32.mxu0 0.0
    %1646 = vmatmul.mubr.f32.gmra.mxu0 %v1515
    %v1647 = vpop.f32.mrf.mxu0
    %v1648 = vadd.f32 0.0, %v1647
    %v1649 = vpop.f32.mrf.mxu0
    %1650 = vmatprep.mubr.f32.mxu0 0.0
    %1651 = vmatmul.mubr.f32.gmra.mxu0 %v1518
    %v1652 = vpop.f32.mrf.mxu0
    %v1653 = vadd.f32 0.0, %v1652
    %v1654 = vpop.f32.mrf.mxu0
    %1655 = vmatprep.mubr.f32.mxu0 0.0
    %1656 = vmatmul.mubr.f32.gmra.mxu0 %v1521
    %v1657 = vpop.f32.mrf.mxu0
    %v1658 = vadd.f32 0.0, %v1657
    %v1659 = vpop.f32.mrf.mxu0
    %1660 = vmatprep.mubr.f32.mxu0 0.0
    %1661 = vmatmul.mubr.f32.gmra.mxu0 %v1524
    %v1662 = vpop.f32.mrf.mxu0
    %v1663 = vadd.f32 0.0, %v1662
    %v1664 = vpop.f32.mrf.mxu0
    %1665 = vmatprep.mubr.f32.mxu0 0.0
    %1666 = vmatmul.mubr.f32.gmra.mxu0 %v1527
    %v1667 = vpop.f32.mrf.mxu0
    %v1668 = vadd.f32 0.0, %v1667
    %v1669 = vpop.f32.mrf.mxu0
    %1670 = vmatprep.mubr.f32.mxu0 0.0
    %1671 = vmatmul.mubr.f32.gmra.mxu0 %v1530
    %v1672 = vpop.f32.mrf.mxu0
    %v1673 = vadd.f32 0.0, %v1672
    %v1674 = vpop.f32.mrf.mxu0
    %1675 = vmatprep.mubr.f32.mxu0 0.0
    %1676 = vmatmul.mubr.f32.gmra.mxu0 %v1533
    %v1677 = vpop.f32.mrf.mxu0
    %v1678 = vadd.f32 0.0, %v1677
    %v1679 = vpop.f32.mrf.mxu0
    %1680 = vmatprep.mubr.f32.mxu0 0.0
    %1681 = vmatmul.mubr.f32.gmra.mxu0 %v1536
    %v1682 = vpop.f32.mrf.mxu0
    %v1683 = vadd.f32 0.0, %v1682
    %v1684 = vpop.f32.mrf.mxu0
    %1685 = vdwg.mxu0
    %v1686 = vadd.f32 %v1448, %v1608
    %v1687 = vadd.f32 %v1449, %v1613
    %v1688 = vadd.f32 %v1450, %v1618
    %v1689 = vadd.f32 %v1451, %v1623
    %v1690 = vadd.f32 %v1452, %v1628
    %v1691 = vadd.f32 %v1453, %v1633
    %v1692 = vadd.f32 %v1454, %v1638
    %v1693 = vadd.f32 %v1455, %v1643
    %v1694 = vadd.f32 %v1456, %v1648
    %v1695 = vadd.f32 %v1457, %v1653
    %v1696 = vadd.f32 %v1458, %v1658
    %v1697 = vadd.f32 %v1459, %v1663
    %v1698 = vadd.f32 %v1460, %v1668
    %v1699 = vadd.f32 %v1461, %v1673
    %v1700 = vadd.f32 %v1462, %v1678
    %v1701 = vadd.f32 %v1463, %v1683
    %v1702 = vld [vmem:[%s1464 + $0x1] sm:$0xff]
    %v1703 = vld [vmem:[%s1464 + $0x11] sm:$0xff]
    %v1704 = vld [vmem:[%s1464 + $0x21] sm:$0xff]
    %v1705 = vld [vmem:[%s1464 + $0x31] sm:$0xff]
    %v1706 = vld [vmem:[%s1464 + $0x41] sm:$0xff]
    %v1707 = vld [vmem:[%s1464 + $0x51] sm:$0xff]
    %v1708 = vld [vmem:[%s1464 + $0x61] sm:$0xff]
    %v1709 = vld [vmem:[%s1464 + $0x71] sm:$0xff]
    %v1710 = vld [vmem:[%s1464 + $0xa1] sm:$0xff]
    %v1711 = vld [vmem:[%s1464 + $0xb1] sm:$0xff]
    %v1712 = vld [vmem:[%s1464 + $0xc1] sm:$0xff]
    %v1713 = vld [vmem:[%s1464 + $0xd1] sm:$0xff]
    %v1714 = vld [vmem:[%s1464 + $0xe1] sm:$0xff]
    %v1715 = vld [vmem:[%s1464 + $0xf1] sm:$0xff]
    %v1716 = vld [vmem:[%s1464 + $0x101] sm:$0xff]
    %v1717 = vld [vmem:[%s1464 + $0x111] sm:$0xff]
    %s1718 = scalar_lea.vmem %s1, 448
    %v1719 = vld [vmem:[%s1718] sm:$0xff]
    %v1720 = vld [vmem:[%s1718 + $0x8] sm:$0xff]
    %v1721 = vld [vmem:[%s1718 + $0x10] sm:$0xff]
    %v1722 = vld [vmem:[%s1718 + $0x18] sm:$0xff]
    %v1723 = vld [vmem:[%s1718 + $0x20] sm:$0xff]
    %v1724 = vld [vmem:[%s1718 + $0x28] sm:$0xff]
    %v1725 = vld [vmem:[%s1718 + $0x30] sm:$0xff]
    %v1726 = vld [vmem:[%s1718 + $0x38] sm:$0xf]
    %v1728 = vsel %vm64, %v1702, 0
    %v1731 = vsel %vm64, %v1703, 0
    %v1734 = vsel %vm64, %v1704, 0
    %v1737 = vsel %vm64, %v1705, 0
    %v1740 = vsel %vm64, %v1706, 0
    %v1743 = vsel %vm64, %v1707, 0
    %v1746 = vsel %vm64, %v1708, 0
    %v1749 = vsel %vm64, %v1709, 0
    %v1752 = vsel %vm64, %v1710, 0
    %v1755 = vsel %vm64, %v1711, 0
    %v1758 = vsel %vm64, %v1712, 0
    %v1761 = vsel %vm64, %v1713, 0
    %v1764 = vsel %vm64, %v1714, 0
    %v1767 = vsel %vm64, %v1715, 0
    %v1770 = vsel %vm64, %v1716, 0
    %v1773 = vsel %vm64, %v1717, 0
    %v1776 = vsel %vm113, %v1726, 0
    %1778 = vmatprep.subr.mxu0 0.0
    %1779 = vmatpush1.msra.mxu0 0.0
    %1780 = vmatprep.subr.mxu0 0.0
    %1781 = vmatpush1.msra.mxu0 0.0
    %1782 = vmatprep.subr.mxu0 0.0
    %1783 = vmatpush1.msra.mxu0 0.0
    %1784 = vmatprep.subr.mxu0 0.0
    %1785 = vmatpush1.msra.mxu0 0.0
    %1786 = vmatprep.subr.mxu0 0.0
    %1787 = vmatpush1.msra.mxu0 0.0
    %1788 = vmatprep.subr.mxu0 0.0
    %1789 = vmatpush1.msra.mxu0 0.0
    %1790 = vmatprep.subr.mxu0 0.0
    %1791 = vmatpush1.msra.mxu0 0.0
    %1792 = vmatprep.subr.mxu0 0.0
    %1793 = vmatpush1.msra.mxu0 0.0
    %1794 = vmatprep.subr.mxu0 0.0
    %1795 = vmatpush1.msra.mxu0 %v1776
    %1796 = vmatprep.subr.mxu0 0.0
    %1797 = vmatpush1.msra.mxu0 %v1725
    %1798 = vmatprep.subr.mxu0 0.0
    %1799 = vmatpush1.msra.mxu0 %v1724
    %1800 = vmatprep.subr.mxu0 0.0
    %1801 = vmatpush1.msra.mxu0 %v1723
    %1802 = vmatprep.subr.mxu0 0.0
    %1803 = vmatpush1.msra.mxu0 %v1722
    %1804 = vmatprep.subr.mxu0 0.0
    %1805 = vmatpush1.msra.mxu0 %v1721
    %1806 = vmatprep.subr.mxu0 0.0
    %1807 = vmatpush1.msra.mxu0 %v1720
    %1808 = vmatprep.subr.mxu0 0.0
    %1809 = vmatpush1.msra.mxu0 %v1719
    %1810 = vmatprep.subr.mxu0 0.0
    %1811 = vmatpush2.msra.mxu0 0.0
    %1812 = vmatprep.subr.mxu0 0.0
    %1813 = vmatpush2.msra.mxu0 0.0
    %1814 = vmatprep.subr.mxu0 0.0
    %1815 = vmatpush2.msra.mxu0 0.0
    %1816 = vmatprep.subr.mxu0 0.0
    %1817 = vmatpush2.msra.mxu0 0.0
    %1818 = vmatprep.subr.mxu0 0.0
    %1819 = vmatpush2.msra.mxu0 0.0
    %1820 = vmatprep.subr.mxu0 0.0
    %1821 = vmatpush2.msra.mxu0 0.0
    %1822 = vmatprep.subr.mxu0 0.0
    %1823 = vmatpush2.msra.mxu0 0.0
    %1824 = vmatprep.subr.mxu0 0.0
    %1825 = vmatpush2.msra.mxu0 0.0
    %1826 = vmatprep.subr.mxu0 0.0
    %1827 = vmatpush2.msra.mxu0 0.0
    %1828 = vmatprep.subr.mxu0 0.0
    %1829 = vmatpush2.msra.mxu0 0.0
    %1830 = vmatprep.subr.mxu0 0.0
    %1831 = vmatpush2.msra.mxu0 0.0
    %1832 = vmatprep.subr.mxu0 0.0
    %1833 = vmatpush2.msra.mxu0 0.0
    %1834 = vmatprep.subr.mxu0 0.0
    %1835 = vmatpush2.msra.mxu0 0.0
    %1836 = vmatprep.subr.mxu0 0.0
    %1837 = vmatpush2.msra.mxu0 0.0
    %1838 = vmatprep.subr.mxu0 0.0
    %1839 = vmatpush2.msra.mxu0 0.0
    %1840 = vmatprep.subr.mxu0 0.0
    %1841 = vmatpush2.msra.mxu0 0.0
    %1842 = vmatprep.mubr.f32.mxu0 0.0
    %1843 = vmatmul.mubr.f32.gmra.mxu0 %v1728
    %v1844 = vpop.f32.mrf.mxu0
    %v1845 = vadd.f32 0.0, %v1844
    %v1846 = vpop.f32.mrf.mxu0
    %1847 = vmatprep.mubr.f32.mxu0 0.0
    %1848 = vmatmul.mubr.f32.gmra.mxu0 %v1731
    %v1849 = vpop.f32.mrf.mxu0
    %v1850 = vadd.f32 0.0, %v1849
    %v1851 = vpop.f32.mrf.mxu0
    %1852 = vmatprep.mubr.f32.mxu0 0.0
    %1853 = vmatmul.mubr.f32.gmra.mxu0 %v1734
    %v1854 = vpop.f32.mrf.mxu0
    %v1855 = vadd.f32 0.0, %v1854
    %v1856 = vpop.f32.mrf.mxu0
    %1857 = vmatprep.mubr.f32.mxu0 0.0
    %1858 = vmatmul.mubr.f32.gmra.mxu0 %v1737
    %v1859 = vpop.f32.mrf.mxu0
    %v1860 = vadd.f32 0.0, %v1859
    %v1861 = vpop.f32.mrf.mxu0
    %1862 = vmatprep.mubr.f32.mxu0 0.0
    %1863 = vmatmul.mubr.f32.gmra.mxu0 %v1740
    %v1864 = vpop.f32.mrf.mxu0
    %v1865 = vadd.f32 0.0, %v1864
    %v1866 = vpop.f32.mrf.mxu0
    %1867 = vmatprep.mubr.f32.mxu0 0.0
    %1868 = vmatmul.mubr.f32.gmra.mxu0 %v1743
    %v1869 = vpop.f32.mrf.mxu0
    %v1870 = vadd.f32 0.0, %v1869
    %v1871 = vpop.f32.mrf.mxu0
    %1872 = vmatprep.mubr.f32.mxu0 0.0
    %1873 = vmatmul.mubr.f32.gmra.mxu0 %v1746
    %v1874 = vpop.f32.mrf.mxu0
    %v1875 = vadd.f32 0.0, %v1874
    %v1876 = vpop.f32.mrf.mxu0
    %1877 = vmatprep.mubr.f32.mxu0 0.0
    %1878 = vmatmul.mubr.f32.gmra.mxu0 %v1749
    %v1879 = vpop.f32.mrf.mxu0
    %v1880 = vadd.f32 0.0, %v1879
    %v1881 = vpop.f32.mrf.mxu0
    %1882 = vmatprep.mubr.f32.mxu0 0.0
    %1883 = vmatmul.mubr.f32.gmra.mxu0 %v1752
    %v1884 = vpop.f32.mrf.mxu0
    %v1885 = vadd.f32 0.0, %v1884
    %v1886 = vpop.f32.mrf.mxu0
    %1887 = vmatprep.mubr.f32.mxu0 0.0
    %1888 = vmatmul.mubr.f32.gmra.mxu0 %v1755
    %v1889 = vpop.f32.mrf.mxu0
    %v1890 = vadd.f32 0.0, %v1889
    %v1891 = vpop.f32.mrf.mxu0
    %1892 = vmatprep.mubr.f32.mxu0 0.0
    %1893 = vmatmul.mubr.f32.gmra.mxu0 %v1758
    %v1894 = vpop.f32.mrf.mxu0
    %v1895 = vadd.f32 0.0, %v1894
    %v1896 = vpop.f32.mrf.mxu0
    %1897 = vmatprep.mubr.f32.mxu0 0.0
    %1898 = vmatmul.mubr.f32.gmra.mxu0 %v1761
    %v1899 = vpop.f32.mrf.mxu0
    %v1900 = vadd.f32 0.0, %v1899
    %v1901 = vpop.f32.mrf.mxu0
    %1902 = vmatprep.mubr.f32.mxu0 0.0
    %1903 = vmatmul.mubr.f32.gmra.mxu0 %v1764
    %v1904 = vpop.f32.mrf.mxu0
    %v1905 = vadd.f32 0.0, %v1904
    %v1906 = vpop.f32.mrf.mxu0
    %1907 = vmatprep.mubr.f32.mxu0 0.0
    %1908 = vmatmul.mubr.f32.gmra.mxu0 %v1767
    %v1909 = vpop.f32.mrf.mxu0
    %v1910 = vadd.f32 0.0, %v1909
    %v1911 = vpop.f32.mrf.mxu0
    %1912 = vmatprep.mubr.f32.mxu0 0.0
    %1913 = vmatmul.mubr.f32.gmra.mxu0 %v1770
    %v1914 = vpop.f32.mrf.mxu0
    %v1915 = vadd.f32 0.0, %v1914
    %v1916 = vpop.f32.mrf.mxu0
    %1917 = vmatprep.mubr.f32.mxu0 0.0
    %1918 = vmatmul.mubr.f32.gmra.mxu0 %v1773
    %v1919 = vpop.f32.mrf.mxu0
    %v1920 = vadd.f32 0.0, %v1919
    %v1921 = vpop.f32.mrf.mxu0
    %1922 = vdwg.mxu0
    %v1923 = vadd.f32 %v1686, %v1845
    %v1924 = vadd.f32 %v1687, %v1850
    %v1925 = vadd.f32 %v1688, %v1855
    %v1926 = vadd.f32 %v1689, %v1860
    %v1927 = vadd.f32 %v1690, %v1865
    %v1928 = vadd.f32 %v1691, %v1870
    %v1929 = vadd.f32 %v1692, %v1875
    %v1930 = vadd.f32 %v1693, %v1880
    %v1931 = vadd.f32 %v1694, %v1885
    %v1932 = vadd.f32 %v1695, %v1890
    %v1933 = vadd.f32 %v1696, %v1895
    %v1934 = vadd.f32 %v1697, %v1900
    %v1935 = vadd.f32 %v1698, %v1905
    %v1936 = vadd.f32 %v1699, %v1910
    %v1937 = vadd.f32 %v1700, %v1915
    %v1938 = vadd.f32 %v1701, %v1920
    %v1939 = vld [vmem:[%s1464 + $0x2] sm:$0xff]
    %v1940 = vld [vmem:[%s1464 + $0x12] sm:$0xff]
    %v1941 = vld [vmem:[%s1464 + $0x22] sm:$0xff]
    %v1942 = vld [vmem:[%s1464 + $0x32] sm:$0xff]
    %v1943 = vld [vmem:[%s1464 + $0x42] sm:$0xff]
    %v1944 = vld [vmem:[%s1464 + $0x52] sm:$0xff]
    %v1945 = vld [vmem:[%s1464 + $0x62] sm:$0xff]
    %v1946 = vld [vmem:[%s1464 + $0x72] sm:$0xff]
    %v1947 = vld [vmem:[%s1464 + $0xa2] sm:$0xff]
    %v1948 = vld [vmem:[%s1464 + $0xb2] sm:$0xff]
    %v1949 = vld [vmem:[%s1464 + $0xc2] sm:$0xff]
    %v1950 = vld [vmem:[%s1464 + $0xd2] sm:$0xff]
    %v1951 = vld [vmem:[%s1464 + $0xe2] sm:$0xff]
    %v1952 = vld [vmem:[%s1464 + $0xf2] sm:$0xff]
    %v1953 = vld [vmem:[%s1464 + $0x102] sm:$0xff]
    %v1954 = vld [vmem:[%s1464 + $0x112] sm:$0xff]
    %s1955 = scalar_lea.vmem %s1, 512
    %v1956 = vld [vmem:[%s1955] sm:$0xff]
    %v1957 = vld [vmem:[%s1955 + $0x8] sm:$0xff]
    %v1958 = vld [vmem:[%s1955 + $0x10] sm:$0xff]
    %v1959 = vld [vmem:[%s1955 + $0x18] sm:$0xff]
    %v1960 = vld [vmem:[%s1955 + $0x20] sm:$0xff]
    %v1961 = vld [vmem:[%s1955 + $0x28] sm:$0xff]
    %v1962 = vld [vmem:[%s1955 + $0x30] sm:$0xff]
    %v1963 = vld [vmem:[%s1955 + $0x38] sm:$0xf]
    %v1965 = vsel %vm64, %v1939, 0
    %v1968 = vsel %vm64, %v1940, 0
    %v1971 = vsel %vm64, %v1941, 0
    %v1974 = vsel %vm64, %v1942, 0
    %v1977 = vsel %vm64, %v1943, 0
    %v1980 = vsel %vm64, %v1944, 0
    %v1983 = vsel %vm64, %v1945, 0
    %v1986 = vsel %vm64, %v1946, 0
    %v1989 = vsel %vm64, %v1947, 0
    %v1992 = vsel %vm64, %v1948, 0
    %v1995 = vsel %vm64, %v1949, 0
    %v1998 = vsel %vm64, %v1950, 0
    %v2001 = vsel %vm64, %v1951, 0
    %v2004 = vsel %vm64, %v1952, 0
    %v2007 = vsel %vm64, %v1953, 0
    %v2010 = vsel %vm64, %v1954, 0
    %v2013 = vsel %vm113, %v1963, 0
    %2015 = vmatprep.subr.mxu0 0.0
    %2016 = vmatpush1.msra.mxu0 0.0
    %2017 = vmatprep.subr.mxu0 0.0
    %2018 = vmatpush1.msra.mxu0 0.0
    %2019 = vmatprep.subr.mxu0 0.0
    %2020 = vmatpush1.msra.mxu0 0.0
    %2021 = vmatprep.subr.mxu0 0.0
    %2022 = vmatpush1.msra.mxu0 0.0
    %2023 = vmatprep.subr.mxu0 0.0
    %2024 = vmatpush1.msra.mxu0 0.0
    %2025 = vmatprep.subr.mxu0 0.0
    %2026 = vmatpush1.msra.mxu0 0.0
    %2027 = vmatprep.subr.mxu0 0.0
    %2028 = vmatpush1.msra.mxu0 0.0
    %2029 = vmatprep.subr.mxu0 0.0
    %2030 = vmatpush1.msra.mxu0 0.0
    %2031 = vmatprep.subr.mxu0 0.0
    %2032 = vmatpush1.msra.mxu0 %v2013
    %2033 = vmatprep.subr.mxu0 0.0
    %2034 = vmatpush1.msra.mxu0 %v1962
    %2035 = vmatprep.subr.mxu0 0.0
    %2036 = vmatpush1.msra.mxu0 %v1961
    %2037 = vmatprep.subr.mxu0 0.0
    %2038 = vmatpush1.msra.mxu0 %v1960
    %2039 = vmatprep.subr.mxu0 0.0
    %2040 = vmatpush1.msra.mxu0 %v1959
    %2041 = vmatprep.subr.mxu0 0.0
    %2042 = vmatpush1.msra.mxu0 %v1958
    %2043 = vmatprep.subr.mxu0 0.0
    %2044 = vmatpush1.msra.mxu0 %v1957
    %2045 = vmatprep.subr.mxu0 0.0
    %2046 = vmatpush1.msra.mxu0 %v1956
    %2047 = vmatprep.subr.mxu0 0.0
    %2048 = vmatpush2.msra.mxu0 0.0
    %2049 = vmatprep.subr.mxu0 0.0
    %2050 = vmatpush2.msra.mxu0 0.0
    %2051 = vmatprep.subr.mxu0 0.0
    %2052 = vmatpush2.msra.mxu0 0.0
    %2053 = vmatprep.subr.mxu0 0.0
    %2054 = vmatpush2.msra.mxu0 0.0
    %2055 = vmatprep.subr.mxu0 0.0
    %2056 = vmatpush2.msra.mxu0 0.0
    %2057 = vmatprep.subr.mxu0 0.0
    %2058 = vmatpush2.msra.mxu0 0.0
    %2059 = vmatprep.subr.mxu0 0.0
    %2060 = vmatpush2.msra.mxu0 0.0
    %2061 = vmatprep.subr.mxu0 0.0
    %2062 = vmatpush2.msra.mxu0 0.0
    %2063 = vmatprep.subr.mxu0 0.0
    %2064 = vmatpush2.msra.mxu0 0.0
    %2065 = vmatprep.subr.mxu0 0.0
    %2066 = vmatpush2.msra.mxu0 0.0
    %2067 = vmatprep.subr.mxu0 0.0
    %2068 = vmatpush2.msra.mxu0 0.0
    %2069 = vmatprep.subr.mxu0 0.0
    %2070 = vmatpush2.msra.mxu0 0.0
    %2071 = vmatprep.subr.mxu0 0.0
    %2072 = vmatpush2.msra.mxu0 0.0
    %2073 = vmatprep.subr.mxu0 0.0
    %2074 = vmatpush2.msra.mxu0 0.0
    %2075 = vmatprep.subr.mxu0 0.0
    %2076 = vmatpush2.msra.mxu0 0.0
    %2077 = vmatprep.subr.mxu0 0.0
    %2078 = vmatpush2.msra.mxu0 0.0
    %2079 = vmatprep.mubr.f32.mxu0 0.0
    %2080 = vmatmul.mubr.f32.gmra.mxu0 %v1965
    %v2081 = vpop.f32.mrf.mxu0
    %v2082 = vadd.f32 0.0, %v2081
    %v2083 = vpop.f32.mrf.mxu0
    %2084 = vmatprep.mubr.f32.mxu0 0.0
    %2085 = vmatmul.mubr.f32.gmra.mxu0 %v1968
    %v2086 = vpop.f32.mrf.mxu0
    %v2087 = vadd.f32 0.0, %v2086
    %v2088 = vpop.f32.mrf.mxu0
    %2089 = vmatprep.mubr.f32.mxu0 0.0
    %2090 = vmatmul.mubr.f32.gmra.mxu0 %v1971
    %v2091 = vpop.f32.mrf.mxu0
    %v2092 = vadd.f32 0.0, %v2091
    %v2093 = vpop.f32.mrf.mxu0
    %2094 = vmatprep.mubr.f32.mxu0 0.0
    %2095 = vmatmul.mubr.f32.gmra.mxu0 %v1974
    %v2096 = vpop.f32.mrf.mxu0
    %v2097 = vadd.f32 0.0, %v2096
    %v2098 = vpop.f32.mrf.mxu0
    %2099 = vmatprep.mubr.f32.mxu0 0.0
    %2100 = vmatmul.mubr.f32.gmra.mxu0 %v1977
    %v2101 = vpop.f32.mrf.mxu0
    %v2102 = vadd.f32 0.0, %v2101
    %v2103 = vpop.f32.mrf.mxu0
    %2104 = vmatprep.mubr.f32.mxu0 0.0
    %2105 = vmatmul.mubr.f32.gmra.mxu0 %v1980
    %v2106 = vpop.f32.mrf.mxu0
    %v2107 = vadd.f32 0.0, %v2106
    %v2108 = vpop.f32.mrf.mxu0
    %2109 = vmatprep.mubr.f32.mxu0 0.0
    %2110 = vmatmul.mubr.f32.gmra.mxu0 %v1983
    %v2111 = vpop.f32.mrf.mxu0
    %v2112 = vadd.f32 0.0, %v2111
    %v2113 = vpop.f32.mrf.mxu0
    %2114 = vmatprep.mubr.f32.mxu0 0.0
    %2115 = vmatmul.mubr.f32.gmra.mxu0 %v1986
    %v2116 = vpop.f32.mrf.mxu0
    %v2117 = vadd.f32 0.0, %v2116
    %v2118 = vpop.f32.mrf.mxu0
    %2119 = vmatprep.mubr.f32.mxu0 0.0
    %2120 = vmatmul.mubr.f32.gmra.mxu0 %v1989
    %v2121 = vpop.f32.mrf.mxu0
    %v2122 = vadd.f32 0.0, %v2121
    %v2123 = vpop.f32.mrf.mxu0
    %2124 = vmatprep.mubr.f32.mxu0 0.0
    %2125 = vmatmul.mubr.f32.gmra.mxu0 %v1992
    %v2126 = vpop.f32.mrf.mxu0
    %v2127 = vadd.f32 0.0, %v2126
    %v2128 = vpop.f32.mrf.mxu0
    %2129 = vmatprep.mubr.f32.mxu0 0.0
    %2130 = vmatmul.mubr.f32.gmra.mxu0 %v1995
    %v2131 = vpop.f32.mrf.mxu0
    %v2132 = vadd.f32 0.0, %v2131
    %v2133 = vpop.f32.mrf.mxu0
    %2134 = vmatprep.mubr.f32.mxu0 0.0
    %2135 = vmatmul.mubr.f32.gmra.mxu0 %v1998
    %v2136 = vpop.f32.mrf.mxu0
    %v2137 = vadd.f32 0.0, %v2136
    %v2138 = vpop.f32.mrf.mxu0
    %2139 = vmatprep.mubr.f32.mxu0 0.0
    %2140 = vmatmul.mubr.f32.gmra.mxu0 %v2001
    %v2141 = vpop.f32.mrf.mxu0
    %v2142 = vadd.f32 0.0, %v2141
    %v2143 = vpop.f32.mrf.mxu0
    %2144 = vmatprep.mubr.f32.mxu0 0.0
    %2145 = vmatmul.mubr.f32.gmra.mxu0 %v2004
    %v2146 = vpop.f32.mrf.mxu0
    %v2147 = vadd.f32 0.0, %v2146
    %v2148 = vpop.f32.mrf.mxu0
    %2149 = vmatprep.mubr.f32.mxu0 0.0
    %2150 = vmatmul.mubr.f32.gmra.mxu0 %v2007
    %v2151 = vpop.f32.mrf.mxu0
    %v2152 = vadd.f32 0.0, %v2151
    %v2153 = vpop.f32.mrf.mxu0
    %2154 = vmatprep.mubr.f32.mxu0 0.0
    %2155 = vmatmul.mubr.f32.gmra.mxu0 %v2010
    %v2156 = vpop.f32.mrf.mxu0
    %v2157 = vadd.f32 0.0, %v2156
    %v2158 = vpop.f32.mrf.mxu0
    %2159 = vdwg.mxu0
    %v2160 = vadd.f32 %v1923, %v2082
    %v2161 = vadd.f32 %v1924, %v2087
    %v2162 = vadd.f32 %v1925, %v2092
    %v2163 = vadd.f32 %v1926, %v2097
    %v2164 = vadd.f32 %v1927, %v2102
    %v2165 = vadd.f32 %v1928, %v2107
    %v2166 = vadd.f32 %v1929, %v2112
    %v2167 = vadd.f32 %v1930, %v2117
    %v2168 = vadd.f32 %v1931, %v2122
    %v2169 = vadd.f32 %v1932, %v2127
    %v2170 = vadd.f32 %v1933, %v2132
    %v2171 = vadd.f32 %v1934, %v2137
    %v2172 = vadd.f32 %v1935, %v2142
    %v2173 = vadd.f32 %v1936, %v2147
    %v2174 = vadd.f32 %v1937, %v2152
    %v2175 = vadd.f32 %v1938, %v2157
    %v2176 = vmul.f32 %v2160, 0.5
    %v2177 = vmul.f32 %v2161, 0.5
    %v2178 = vmul.f32 %v2162, 0.5
    %v2179 = vmul.f32 %v2163, 0.5
    %v2180 = vmul.f32 %v2164, 0.5
    %v2181 = vmul.f32 %v2165, 0.5
    %v2182 = vmul.f32 %v2166, 0.5
    %v2183 = vmul.f32 %v2167, 0.5
    %v2184 = vmul.f32 %v2168, 0.5
    %v2185 = vmul.f32 %v2169, 0.5
    %v2186 = vmul.f32 %v2170, 0.5
    %v2187 = vmul.f32 %v2171, 0.5
    %v2188 = vmul.f32 %v2172, 0.5
    %v2189 = vmul.f32 %v2173, 0.5
    %v2190 = vmul.f32 %v2174, 0.5
    %v2191 = vmul.f32 %v2175, 0.5
    %v2192 = vmul.f32 %v2160, 0.70710677
    %v2193 = vmul.f32 %v2161, 0.70710677
    %v2194 = vmul.f32 %v2162, 0.70710677
    %v2195 = vmul.f32 %v2163, 0.70710677
    %v2196 = vmul.f32 %v2164, 0.70710677
    %v2197 = vmul.f32 %v2165, 0.70710677
    %v2198 = vmul.f32 %v2166, 0.70710677
    %v2199 = vmul.f32 %v2167, 0.70710677
    %v2200 = vmul.f32 %v2168, 0.70710677
    %v2201 = vmul.f32 %v2169, 0.70710677
    %v2202 = vmul.f32 %v2170, 0.70710677
    %v2203 = vmul.f32 %v2171, 0.70710677
    %v2204 = vmul.f32 %v2172, 0.70710677
    %v2205 = vmul.f32 %v2173, 0.70710677
    %v2206 = vmul.f32 %v2174, 0.70710677
    %v2207 = vmul.f32 %v2175, 0.70710677
    %v2208 = vand.u32 2147483647, %v2192
    %v2209 = vand.u32 2147483647, %v2193
    %v2210 = vand.u32 2147483647, %v2194
    %v2211 = vand.u32 2147483647, %v2195
    %v2212 = vand.u32 2147483647, %v2196
    %v2213 = vand.u32 2147483647, %v2197
    %v2214 = vand.u32 2147483647, %v2198
    %v2215 = vand.u32 2147483647, %v2199
    %v2216 = vand.u32 2147483647, %v2200
    %v2217 = vand.u32 2147483647, %v2201
    %v2218 = vand.u32 2147483647, %v2202
    %v2219 = vand.u32 2147483647, %v2203
    %v2220 = vand.u32 2147483647, %v2204
    %v2221 = vand.u32 2147483647, %v2205
    %v2222 = vand.u32 2147483647, %v2206
    %v2223 = vand.u32 2147483647, %v2207
    %v2224 = vmul.f32 %v2208, 0.3275911
    %v2225 = vmul.f32 %v2209, 0.3275911
    %v2226 = vmul.f32 %v2210, 0.3275911
    %v2227 = vmul.f32 %v2211, 0.3275911
    %v2228 = vmul.f32 %v2212, 0.3275911
    %v2229 = vmul.f32 %v2213, 0.3275911
    %v2230 = vmul.f32 %v2214, 0.3275911
    %v2231 = vmul.f32 %v2215, 0.3275911
    %v2232 = vmul.f32 %v2216, 0.3275911
    %v2233 = vmul.f32 %v2217, 0.3275911
    %v2234 = vmul.f32 %v2218, 0.3275911
    %v2235 = vmul.f32 %v2219, 0.3275911
    %v2236 = vmul.f32 %v2220, 0.3275911
    %v2237 = vmul.f32 %v2221, 0.3275911
    %v2238 = vmul.f32 %v2222, 0.3275911
    %v2239 = vmul.f32 %v2223, 0.3275911
    %v2240 = vadd.f32 %v2224, 1.0
    %v2241 = vadd.f32 %v2225, 1.0
    %v2242 = vadd.f32 %v2226, 1.0
    %v2243 = vadd.f32 %v2227, 1.0
    %v2244 = vadd.f32 %v2228, 1.0
    %v2245 = vadd.f32 %v2229, 1.0
    %v2246 = vadd.f32 %v2230, 1.0
    %v2247 = vadd.f32 %v2231, 1.0
    %v2248 = vadd.f32 %v2232, 1.0
    %v2249 = vadd.f32 %v2233, 1.0
    %v2250 = vadd.f32 %v2234, 1.0
    %v2251 = vadd.f32 %v2235, 1.0
    %v2252 = vadd.f32 %v2236, 1.0
    %v2253 = vadd.f32 %v2237, 1.0
    %v2254 = vadd.f32 %v2238, 1.0
    %v2255 = vadd.f32 %v2239, 1.0
    %v2256 = vrcp.pop %v2240
    %v2257 = vmul.f32 1.0, %v2256
    %v2258 = vrcp.pop %v2241
    %v2259 = vmul.f32 1.0, %v2258
    %v2260 = vrcp.pop %v2242
    %v2261 = vmul.f32 1.0, %v2260
    %v2262 = vrcp.pop %v2243
    %v2263 = vmul.f32 1.0, %v2262
    %v2264 = vrcp.pop %v2244
    %v2265 = vmul.f32 1.0, %v2264
    %v2266 = vrcp.pop %v2245
    %v2267 = vmul.f32 1.0, %v2266
    %v2268 = vrcp.pop %v2246
    %v2269 = vmul.f32 1.0, %v2268
    %v2270 = vrcp.pop %v2247
    %v2271 = vmul.f32 1.0, %v2270
    %v2272 = vrcp.pop %v2248
    %v2273 = vmul.f32 1.0, %v2272
    %v2274 = vrcp.pop %v2249
    %v2275 = vmul.f32 1.0, %v2274
    %v2276 = vrcp.pop %v2250
    %v2277 = vmul.f32 1.0, %v2276
    %v2278 = vrcp.pop %v2251
    %v2279 = vmul.f32 1.0, %v2278
    %v2280 = vrcp.pop %v2252
    %v2281 = vmul.f32 1.0, %v2280
    %v2282 = vrcp.pop %v2253
    %v2283 = vmul.f32 1.0, %v2282
    %v2284 = vrcp.pop %v2254
    %v2285 = vmul.f32 1.0, %v2284
    %v2286 = vrcp.pop %v2255
    %v2287 = vmul.f32 1.0, %v2286
    %v2288 = vmul.f32 %v2257, 1.0614054
    %v2289 = vmul.f32 %v2259, 1.0614054
    %v2290 = vmul.f32 %v2261, 1.0614054
    %v2291 = vmul.f32 %v2263, 1.0614054
    %v2292 = vmul.f32 %v2265, 1.0614054
    %v2293 = vmul.f32 %v2267, 1.0614054
    %v2294 = vmul.f32 %v2269, 1.0614054
    %v2295 = vmul.f32 %v2271, 1.0614054
    %v2296 = vmul.f32 %v2273, 1.0614054
    %v2297 = vmul.f32 %v2275, 1.0614054
    %v2298 = vmul.f32 %v2277, 1.0614054
    %v2299 = vmul.f32 %v2279, 1.0614054
    %v2300 = vmul.f32 %v2281, 1.0614054
    %v2301 = vmul.f32 %v2283, 1.0614054
    %v2302 = vmul.f32 %v2285, 1.0614054
    %v2303 = vmul.f32 %v2287, 1.0614054
    %v2304 = vadd.f32 %v2288, -1.4531521
    %v2305 = vadd.f32 %v2289, -1.4531521
    %v2306 = vadd.f32 %v2290, -1.4531521
    %v2307 = vadd.f32 %v2291, -1.4531521
    %v2308 = vadd.f32 %v2292, -1.4531521
    %v2309 = vadd.f32 %v2293, -1.4531521
    %v2310 = vadd.f32 %v2294, -1.4531521
    %v2311 = vadd.f32 %v2295, -1.4531521
    %v2312 = vadd.f32 %v2296, -1.4531521
    %v2313 = vadd.f32 %v2297, -1.4531521
    %v2314 = vadd.f32 %v2298, -1.4531521
    %v2315 = vadd.f32 %v2299, -1.4531521
    %v2316 = vadd.f32 %v2300, -1.4531521
    %v2317 = vadd.f32 %v2301, -1.4531521
    %v2318 = vadd.f32 %v2302, -1.4531521
    %v2319 = vadd.f32 %v2303, -1.4531521
    %v2320 = vmul.f32 %v2304, %v2257
    %v2321 = vmul.f32 %v2305, %v2259
    %v2322 = vmul.f32 %v2306, %v2261
    %v2323 = vmul.f32 %v2307, %v2263
    %v2324 = vmul.f32 %v2308, %v2265
    %v2325 = vmul.f32 %v2309, %v2267
    %v2326 = vmul.f32 %v2310, %v2269
    %v2327 = vmul.f32 %v2311, %v2271
    %v2328 = vmul.f32 %v2312, %v2273
    %v2329 = vmul.f32 %v2313, %v2275
    %v2330 = vmul.f32 %v2314, %v2277
    %v2331 = vmul.f32 %v2315, %v2279
    %v2332 = vmul.f32 %v2316, %v2281
    %v2333 = vmul.f32 %v2317, %v2283
    %v2334 = vmul.f32 %v2318, %v2285
    %v2335 = vmul.f32 %v2319, %v2287
    %v2336 = vadd.f32 %v2320, 1.4214138
    %v2337 = vadd.f32 %v2321, 1.4214138
    %v2338 = vadd.f32 %v2322, 1.4214138
    %v2339 = vadd.f32 %v2323, 1.4214138
    %v2340 = vadd.f32 %v2324, 1.4214138
    %v2341 = vadd.f32 %v2325, 1.4214138
    %v2342 = vadd.f32 %v2326, 1.4214138
    %v2343 = vadd.f32 %v2327, 1.4214138
    %v2344 = vadd.f32 %v2328, 1.4214138
    %v2345 = vadd.f32 %v2329, 1.4214138
    %v2346 = vadd.f32 %v2330, 1.4214138
    %v2347 = vadd.f32 %v2331, 1.4214138
    %v2348 = vadd.f32 %v2332, 1.4214138
    %v2349 = vadd.f32 %v2333, 1.4214138
    %v2350 = vadd.f32 %v2334, 1.4214138
    %v2351 = vadd.f32 %v2335, 1.4214138
    %v2352 = vmul.f32 %v2336, %v2257
    %v2353 = vmul.f32 %v2337, %v2259
    %v2354 = vmul.f32 %v2338, %v2261
    %v2355 = vmul.f32 %v2339, %v2263
    %v2356 = vmul.f32 %v2340, %v2265
    %v2357 = vmul.f32 %v2341, %v2267
    %v2358 = vmul.f32 %v2342, %v2269
    %v2359 = vmul.f32 %v2343, %v2271
    %v2360 = vmul.f32 %v2344, %v2273
    %v2361 = vmul.f32 %v2345, %v2275
    %v2362 = vmul.f32 %v2346, %v2277
    %v2363 = vmul.f32 %v2347, %v2279
    %v2364 = vmul.f32 %v2348, %v2281
    %v2365 = vmul.f32 %v2349, %v2283
    %v2366 = vmul.f32 %v2350, %v2285
    %v2367 = vmul.f32 %v2351, %v2287
    %v2368 = vadd.f32 %v2352, -0.28449672
    %v2369 = vadd.f32 %v2353, -0.28449672
    %v2370 = vadd.f32 %v2354, -0.28449672
    %v2371 = vadd.f32 %v2355, -0.28449672
    %v2372 = vadd.f32 %v2356, -0.28449672
    %v2373 = vadd.f32 %v2357, -0.28449672
    %v2374 = vadd.f32 %v2358, -0.28449672
    %v2375 = vadd.f32 %v2359, -0.28449672
    %v2376 = vadd.f32 %v2360, -0.28449672
    %v2377 = vadd.f32 %v2361, -0.28449672
    %v2378 = vadd.f32 %v2362, -0.28449672
    %v2379 = vadd.f32 %v2363, -0.28449672
    %v2380 = vadd.f32 %v2364, -0.28449672
    %v2381 = vadd.f32 %v2365, -0.28449672
    %v2382 = vadd.f32 %v2366, -0.28449672
    %v2383 = vadd.f32 %v2367, -0.28449672
    %v2384 = vmul.f32 %v2368, %v2257
    %v2385 = vmul.f32 %v2369, %v2259
    %v2386 = vmul.f32 %v2370, %v2261
    %v2387 = vmul.f32 %v2371, %v2263
    %v2388 = vmul.f32 %v2372, %v2265
    %v2389 = vmul.f32 %v2373, %v2267
    %v2390 = vmul.f32 %v2374, %v2269
    %v2391 = vmul.f32 %v2375, %v2271
    %v2392 = vmul.f32 %v2376, %v2273
    %v2393 = vmul.f32 %v2377, %v2275
    %v2394 = vmul.f32 %v2378, %v2277
    %v2395 = vmul.f32 %v2379, %v2279
    %v2396 = vmul.f32 %v2380, %v2281
    %v2397 = vmul.f32 %v2381, %v2283
    %v2398 = vmul.f32 %v2382, %v2285
    %v2399 = vmul.f32 %v2383, %v2287
    %v2400 = vadd.f32 %v2384, 0.2548296
    %v2401 = vadd.f32 %v2385, 0.2548296
    %v2402 = vadd.f32 %v2386, 0.2548296
    %v2403 = vadd.f32 %v2387, 0.2548296
    %v2404 = vadd.f32 %v2388, 0.2548296
    %v2405 = vadd.f32 %v2389, 0.2548296
    %v2406 = vadd.f32 %v2390, 0.2548296
    %v2407 = vadd.f32 %v2391, 0.2548296
    %v2408 = vadd.f32 %v2392, 0.2548296
    %v2409 = vadd.f32 %v2393, 0.2548296
    %v2410 = vadd.f32 %v2394, 0.2548296
    %v2411 = vadd.f32 %v2395, 0.2548296
    %v2412 = vadd.f32 %v2396, 0.2548296
    %v2413 = vadd.f32 %v2397, 0.2548296
    %v2414 = vadd.f32 %v2398, 0.2548296
    %v2415 = vadd.f32 %v2399, 0.2548296
    %v2416 = vmul.f32 %v2400, %v2257
    %v2417 = vmul.f32 %v2401, %v2259
    %v2418 = vmul.f32 %v2402, %v2261
    %v2419 = vmul.f32 %v2403, %v2263
    %v2420 = vmul.f32 %v2404, %v2265
    %v2421 = vmul.f32 %v2405, %v2267
    %v2422 = vmul.f32 %v2406, %v2269
    %v2423 = vmul.f32 %v2407, %v2271
    %v2424 = vmul.f32 %v2408, %v2273
    %v2425 = vmul.f32 %v2409, %v2275
    %v2426 = vmul.f32 %v2410, %v2277
    %v2427 = vmul.f32 %v2411, %v2279
    %v2428 = vmul.f32 %v2412, %v2281
    %v2429 = vmul.f32 %v2413, %v2283
    %v2430 = vmul.f32 %v2414, %v2285
    %v2431 = vmul.f32 %v2415, %v2287
    %v2432 = vsub.f32 0.0, %v2208
    %v2433 = vsub.f32 0.0, %v2209
    %v2434 = vsub.f32 0.0, %v2210
    %v2435 = vsub.f32 0.0, %v2211
    %v2436 = vsub.f32 0.0, %v2212
    %v2437 = vsub.f32 0.0, %v2213
    %v2438 = vsub.f32 0.0, %v2214
    %v2439 = vsub.f32 0.0, %v2215
    %v2440 = vsub.f32 0.0, %v2216
    %v2441 = vsub.f32 0.0, %v2217
    %v2442 = vsub.f32 0.0, %v2218
    %v2443 = vsub.f32 0.0, %v2219
    %v2444 = vsub.f32 0.0, %v2220
    %v2445 = vsub.f32 0.0, %v2221
    %v2446 = vsub.f32 0.0, %v2222
    %v2447 = vsub.f32 0.0, %v2223
    %v2448 = vmul.f32 %v2432, %v2208
    %v2449 = vmul.f32 %v2433, %v2209
    %v2450 = vmul.f32 %v2434, %v2210
    %v2451 = vmul.f32 %v2435, %v2211
    %v2452 = vmul.f32 %v2436, %v2212
    %v2453 = vmul.f32 %v2437, %v2213
    %v2454 = vmul.f32 %v2438, %v2214
    %v2455 = vmul.f32 %v2439, %v2215
    %v2456 = vmul.f32 %v2440, %v2216
    %v2457 = vmul.f32 %v2441, %v2217
    %v2458 = vmul.f32 %v2442, %v2218
    %v2459 = vmul.f32 %v2443, %v2219
    %v2460 = vmul.f32 %v2444, %v2220
    %v2461 = vmul.f32 %v2445, %v2221
    %v2462 = vmul.f32 %v2446, %v2222
    %v2463 = vmul.f32 %v2447, %v2223
    %v2464 = vmul.f32 %v2448, 1.442695
    %v2465 = vpow.pop %v2464
    %v2466 = vmul.f32 %v2449, 1.442695
    %v2467 = vpow.pop %v2466
    %v2468 = vmul.f32 %v2450, 1.442695
    %v2469 = vpow.pop %v2468
    %v2470 = vmul.f32 %v2451, 1.442695
    %v2471 = vpow.pop %v2470
    %v2472 = vmul.f32 %v2452, 1.442695
    %v2473 = vpow.pop %v2472
    %v2474 = vmul.f32 %v2453, 1.442695
    %v2475 = vpow.pop %v2474
    %v2476 = vmul.f32 %v2454, 1.442695
    %v2477 = vpow.pop %v2476
    %v2478 = vmul.f32 %v2455, 1.442695
    %v2479 = vpow.pop %v2478
    %v2480 = vmul.f32 %v2456, 1.442695
    %v2481 = vpow.pop %v2480
    %v2482 = vmul.f32 %v2457, 1.442695
    %v2483 = vpow.pop %v2482
    %v2484 = vmul.f32 %v2458, 1.442695
    %v2485 = vpow.pop %v2484
    %v2486 = vmul.f32 %v2459, 1.442695
    %v2487 = vpow.pop %v2486
    %v2488 = vmul.f32 %v2460, 1.442695
    %v2489 = vpow.pop %v2488
    %v2490 = vmul.f32 %v2461, 1.442695
    %v2491 = vpow.pop %v2490
    %v2492 = vmul.f32 %v2462, 1.442695
    %v2493 = vpow.pop %v2492
    %v2494 = vmul.f32 %v2463, 1.442695
    %v2495 = vpow.pop %v2494
    %v2496 = vmul.f32 %v2416, %v2465
    %v2497 = vmul.f32 %v2417, %v2467
    %v2498 = vmul.f32 %v2418, %v2469
    %v2499 = vmul.f32 %v2419, %v2471
    %v2500 = vmul.f32 %v2420, %v2473
    %v2501 = vmul.f32 %v2421, %v2475
    %v2502 = vmul.f32 %v2422, %v2477
    %v2503 = vmul.f32 %v2423, %v2479
    %v2504 = vmul.f32 %v2424, %v2481
    %v2505 = vmul.f32 %v2425, %v2483
    %v2506 = vmul.f32 %v2426, %v2485
    %v2507 = vmul.f32 %v2427, %v2487
    %v2508 = vmul.f32 %v2428, %v2489
    %v2509 = vmul.f32 %v2429, %v2491
    %v2510 = vmul.f32 %v2430, %v2493
    %v2511 = vmul.f32 %v2431, %v2495
    %v2512 = vsub.f32 1.0, %v2496
    %v2513 = vsub.f32 1.0, %v2497
    %v2514 = vsub.f32 1.0, %v2498
    %v2515 = vsub.f32 1.0, %v2499
    %v2516 = vsub.f32 1.0, %v2500
    %v2517 = vsub.f32 1.0, %v2501
    %v2518 = vsub.f32 1.0, %v2502
    %v2519 = vsub.f32 1.0, %v2503
    %v2520 = vsub.f32 1.0, %v2504
    %v2521 = vsub.f32 1.0, %v2505
    %v2522 = vsub.f32 1.0, %v2506
    %v2523 = vsub.f32 1.0, %v2507
    %v2524 = vsub.f32 1.0, %v2508
    %v2525 = vsub.f32 1.0, %v2509
    %v2526 = vsub.f32 1.0, %v2510
    %v2527 = vsub.f32 1.0, %v2511
    %vm2528 = vcmp.ge.f32.partialorder %v2192, 0.0
    %vm2529 = vcmp.ge.f32.partialorder %v2193, 0.0
    %vm2530 = vcmp.ge.f32.partialorder %v2194, 0.0
    %vm2531 = vcmp.ge.f32.partialorder %v2195, 0.0
    %vm2532 = vcmp.ge.f32.partialorder %v2196, 0.0
    %vm2533 = vcmp.ge.f32.partialorder %v2197, 0.0
    %vm2534 = vcmp.ge.f32.partialorder %v2198, 0.0
    %vm2535 = vcmp.ge.f32.partialorder %v2199, 0.0
    %vm2536 = vcmp.ge.f32.partialorder %v2200, 0.0
    %vm2537 = vcmp.ge.f32.partialorder %v2201, 0.0
    %vm2538 = vcmp.ge.f32.partialorder %v2202, 0.0
    %vm2539 = vcmp.ge.f32.partialorder %v2203, 0.0
    %vm2540 = vcmp.ge.f32.partialorder %v2204, 0.0
    %vm2541 = vcmp.ge.f32.partialorder %v2205, 0.0
    %vm2542 = vcmp.ge.f32.partialorder %v2206, 0.0
    %vm2543 = vcmp.ge.f32.partialorder %v2207, 0.0
    %v2544 = vsub.f32 0.0, %v2512
    %v2545 = vsub.f32 0.0, %v2513
    %v2546 = vsub.f32 0.0, %v2514
    %v2547 = vsub.f32 0.0, %v2515
    %v2548 = vsub.f32 0.0, %v2516
    %v2549 = vsub.f32 0.0, %v2517
    %v2550 = vsub.f32 0.0, %v2518
    %v2551 = vsub.f32 0.0, %v2519
    %v2552 = vsub.f32 0.0, %v2520
    %v2553 = vsub.f32 0.0, %v2521
    %v2554 = vsub.f32 0.0, %v2522
    %v2555 = vsub.f32 0.0, %v2523
    %v2556 = vsub.f32 0.0, %v2524
    %v2557 = vsub.f32 0.0, %v2525
    %v2558 = vsub.f32 0.0, %v2526
    %v2559 = vsub.f32 0.0, %v2527
    %v2560 = vsel %vm2528, %v2512, %v2544
    %v2561 = vsel %vm2529, %v2513, %v2545
    %v2562 = vsel %vm2530, %v2514, %v2546
    %v2563 = vsel %vm2531, %v2515, %v2547
    %v2564 = vsel %vm2532, %v2516, %v2548
    %v2565 = vsel %vm2533, %v2517, %v2549
    %v2566 = vsel %vm2534, %v2518, %v2550
    %v2567 = vsel %vm2535, %v2519, %v2551
    %v2568 = vsel %vm2536, %v2520, %v2552
    %v2569 = vsel %vm2537, %v2521, %v2553
    %v2570 = vsel %vm2538, %v2522, %v2554
    %v2571 = vsel %vm2539, %v2523, %v2555
    %v2572 = vsel %vm2540, %v2524, %v2556
    %v2573 = vsel %vm2541, %v2525, %v2557
    %v2574 = vsel %vm2542, %v2526, %v2558
    %v2575 = vsel %vm2543, %v2527, %v2559
    %v2576 = vadd.f32 %v2560, 1.0
    %v2577 = vadd.f32 %v2561, 1.0
    %v2578 = vadd.f32 %v2562, 1.0
    %v2579 = vadd.f32 %v2563, 1.0
    %v2580 = vadd.f32 %v2564, 1.0
    %v2581 = vadd.f32 %v2565, 1.0
    %v2582 = vadd.f32 %v2566, 1.0
    %v2583 = vadd.f32 %v2567, 1.0
    %v2584 = vadd.f32 %v2568, 1.0
    %v2585 = vadd.f32 %v2569, 1.0
    %v2586 = vadd.f32 %v2570, 1.0
    %v2587 = vadd.f32 %v2571, 1.0
    %v2588 = vadd.f32 %v2572, 1.0
    %v2589 = vadd.f32 %v2573, 1.0
    %v2590 = vadd.f32 %v2574, 1.0
    %v2591 = vadd.f32 %v2575, 1.0
    %v2592 = vmul.f32 %v2176, %v2576
    %v2593 = vmul.f32 %v2177, %v2577
    %v2594 = vmul.f32 %v2178, %v2578
    %v2595 = vmul.f32 %v2179, %v2579
    %v2596 = vmul.f32 %v2180, %v2580
    %v2597 = vmul.f32 %v2181, %v2581
    %v2598 = vmul.f32 %v2182, %v2582
    %v2599 = vmul.f32 %v2183, %v2583
    %v2600 = vmul.f32 %v2184, %v2584
    %v2601 = vmul.f32 %v2185, %v2585
    %v2602 = vmul.f32 %v2186, %v2586
    %v2603 = vmul.f32 %v2187, %v2587
    %v2604 = vmul.f32 %v2188, %v2588
    %v2605 = vmul.f32 %v2189, %v2589
    %v2606 = vmul.f32 %v2190, %v2590
    %v2607 = vmul.f32 %v2191, %v2591
    %vm2608 = vcmask 162816
    %2609 = vst.msk [vmem:[#allocation2] sm:$0xff] %vm2608, 0.0
    %vm2610 = vcmask 156672
    %2611 = vst.msk [vmem:[#allocation2 + $0x8] sm:$0x3] %vm2610, 0.0
    %2612 = vst.msk [vmem:[#allocation2 + $0xa0] sm:$0xff] %vm2608, 0.0
    %2613 = vst.msk [vmem:[#allocation2 + $0xa8] sm:$0x3] %vm2610, 0.0
    %s2614 = scalar_lea.vmem [#allocation2], 144
    %2615 = vst.msk [vmem:[%s2614] sm:$0xff] %vm2608, 0.0
    %2616 = vst.msk [vmem:[%s2614 + $0x8] sm:$0x3] %vm2610, 0.0
    %2617 = vst.msk [vmem:[%s2614 + $0xa0] sm:$0xff] %vm2608, 0.0
    %2618 = vst.msk [vmem:[%s2614 + $0xa8] sm:$0x3] %vm2610, 0.0
    %s2619 = scalar_lea.vmem [#allocation2], 16
    %vm2620 = vcmask 155648
    %2621 = vst.msk [vmem:[%s2619] sm:$0x1] %vm2620, 0.0
    %2622 = vst.msk [vmem:[%s2619 + $0x10] sm:$0x1] %vm2620, 0.0
    %2623 = vst.msk [vmem:[%s2619 + $0x20] sm:$0x1] %vm2620, 0.0
    %2624 = vst.msk [vmem:[%s2619 + $0x30] sm:$0x1] %vm2620, 0.0
    %2625 = vst.msk [vmem:[%s2619 + $0x40] sm:$0x1] %vm2620, 0.0
    %2626 = vst.msk [vmem:[%s2619 + $0x50] sm:$0x1] %vm2620, 0.0
    %2627 = vst.msk [vmem:[%s2619 + $0x60] sm:$0x1] %vm2620, 0.0
    %2628 = vst.msk [vmem:[%s2619 + $0x70] sm:$0x1] %vm2620, 0.0
    %2629 = vst.msk [vmem:[%s2619 + $0xa0] sm:$0x1] %vm2620, 0.0
    %2630 = vst.msk [vmem:[%s2619 + $0xb0] sm:$0x1] %vm2620, 0.0
    %2631 = vst.msk [vmem:[%s2619 + $0xc0] sm:$0x1] %vm2620, 0.0
    %2632 = vst.msk [vmem:[%s2619 + $0xd0] sm:$0x1] %vm2620, 0.0
    %2633 = vst.msk [vmem:[%s2619 + $0xe0] sm:$0x1] %vm2620, 0.0
    %2634 = vst.msk [vmem:[%s2619 + $0xf0] sm:$0x1] %vm2620, 0.0
    %2635 = vst.msk [vmem:[%s2619 + $0x100] sm:$0x1] %vm2620, 0.0
    %2636 = vst.msk [vmem:[%s2619 + $0x110] sm:$0x1] %vm2620, 0.0
    %2637 = vst.msk [vmem:[%s2619 + $0x9] sm:$0x1] %vm2620, 0.0
    %2638 = vst.msk [vmem:[%s2619 + $0x19] sm:$0x1] %vm2620, 0.0
    %2639 = vst.msk [vmem:[%s2619 + $0x29] sm:$0x1] %vm2620, 0.0
    %2640 = vst.msk [vmem:[%s2619 + $0x39] sm:$0x1] %vm2620, 0.0
    %2641 = vst.msk [vmem:[%s2619 + $0x49] sm:$0x1] %vm2620, 0.0
    %2642 = vst.msk [vmem:[%s2619 + $0x59] sm:$0x1] %vm2620, 0.0
    %2643 = vst.msk [vmem:[%s2619 + $0x69] sm:$0x1] %vm2620, 0.0
    %2644 = vst.msk [vmem:[%s2619 + $0x79] sm:$0x1] %vm2620, 0.0
    %2645 = vst.msk [vmem:[%s2619 + $0xa9] sm:$0x1] %vm2620, 0.0
    %2646 = vst.msk [vmem:[%s2619 + $0xb9] sm:$0x1] %vm2620, 0.0
    %2647 = vst.msk [vmem:[%s2619 + $0xc9] sm:$0x1] %vm2620, 0.0
    %2648 = vst.msk [vmem:[%s2619 + $0xd9] sm:$0x1] %vm2620, 0.0
    %2649 = vst.msk [vmem:[%s2619 + $0xe9] sm:$0x1] %vm2620, 0.0
    %2650 = vst.msk [vmem:[%s2619 + $0xf9] sm:$0x1] %vm2620, 0.0
    %2651 = vst.msk [vmem:[%s2619 + $0x109] sm:$0x1] %vm2620, 0.0
    %2652 = vst.msk [vmem:[%s2619 + $0x119] sm:$0x1] %vm2620, 0.0
    %2653 = vst.msk [vmem:[%s2619 + $0x1] sm:$0xff] %vm2608, %v2592
    %2654 = vst.msk [vmem:[%s2619 + $0x11] sm:$0xff] %vm2608, %v2593
    %2655 = vst.msk [vmem:[%s2619 + $0x21] sm:$0xff] %vm2608, %v2594
    %2656 = vst.msk [vmem:[%s2619 + $0x31] sm:$0xff] %vm2608, %v2595
    %2657 = vst.msk [vmem:[%s2619 + $0x41] sm:$0xff] %vm2608, %v2596
    %2658 = vst.msk [vmem:[%s2619 + $0x51] sm:$0xff] %vm2608, %v2597
    %2659 = vst.msk [vmem:[%s2619 + $0x61] sm:$0xff] %vm2608, %v2598
    %2660 = vst.msk [vmem:[%s2619 + $0x71] sm:$0xff] %vm2608, %v2599
    %2661 = vst.msk [vmem:[%s2619 + $0xa1] sm:$0xff] %vm2608, %v2600
    %2662 = vst.msk [vmem:[%s2619 + $0xb1] sm:$0xff] %vm2608, %v2601
    %2663 = vst.msk [vmem:[%s2619 + $0xc1] sm:$0xff] %vm2608, %v2602
    %2664 = vst.msk [vmem:[%s2619 + $0xd1] sm:$0xff] %vm2608, %v2603
    %2665 = vst.msk [vmem:[%s2619 + $0xe1] sm:$0xff] %vm2608, %v2604
    %2666 = vst.msk [vmem:[%s2619 + $0xf1] sm:$0xff] %vm2608, %v2605
    %2667 = vst.msk [vmem:[%s2619 + $0x101] sm:$0xff] %vm2608, %v2606
    %2668 = vst.msk [vmem:[%s2619 + $0x111] sm:$0xff] %vm2608, %v2607
    %v2669 = vld [vmem:[%s4] sm:$0x1]
    %v2671 = vlaneseq
    %v2672 = vshrl.u32 %v2671, 7
    %v2673 = vsub.s32 0, %v2672
    %v2674 = vrot.slane %v2669, %v2673
    %v2676 = vld [vmem:[#allocation2] sm:$0xff]
    %v2677 = vld [vmem:[#allocation2 + $0x10] sm:$0xff]
    %v2678 = vld [vmem:[#allocation2 + $0x20] sm:$0xff]
    %v2679 = vld [vmem:[#allocation2 + $0x30] sm:$0xff]
    %v2680 = vld [vmem:[#allocation2 + $0x40] sm:$0xff]
    %v2681 = vld [vmem:[#allocation2 + $0x50] sm:$0xff]
    %v2682 = vld [vmem:[#allocation2 + $0x60] sm:$0xff]
    %v2683 = vld [vmem:[#allocation2 + $0x70] sm:$0xff]
    %v2684 = vld [vmem:[#allocation2 + $0xa0] sm:$0xff]
    %v2685 = vld [vmem:[#allocation2 + $0xb0] sm:$0xff]
    %v2686 = vld [vmem:[#allocation2 + $0xc0] sm:$0xff]
    %v2687 = vld [vmem:[#allocation2 + $0xd0] sm:$0xff]
    %v2688 = vld [vmem:[#allocation2 + $0xe0] sm:$0xff]
    %v2689 = vld [vmem:[#allocation2 + $0xf0] sm:$0xff]
    %v2690 = vld [vmem:[#allocation2 + $0x100] sm:$0xff]
    %v2691 = vld [vmem:[#allocation2 + $0x110] sm:$0xff]
    %v2692 = vld [vmem:[%s3] sm:$0xff]
    %v2693 = vld [vmem:[%s3 + $0x8] sm:$0xff]
    %v2694 = vld [vmem:[%s3 + $0x10] sm:$0xf]
    %v2696 = vsel %vm2608, %v2676, 0
    %v2699 = vsel %vm2608, %v2677, 0
    %v2702 = vsel %vm2608, %v2678, 0
    %v2705 = vsel %vm2608, %v2679, 0
    %v2708 = vsel %vm2608, %v2680, 0
    %v2711 = vsel %vm2608, %v2681, 0
    %v2714 = vsel %vm2608, %v2682, 0
    %v2717 = vsel %vm2608, %v2683, 0
    %v2720 = vsel %vm2608, %v2684, 0
    %v2723 = vsel %vm2608, %v2685, 0
    %v2726 = vsel %vm2608, %v2686, 0
    %v2729 = vsel %vm2608, %v2687, 0
    %v2732 = vsel %vm2608, %v2688, 0
    %v2735 = vsel %vm2608, %v2689, 0
    %v2738 = vsel %vm2608, %v2690, 0
    %v2741 = vsel %vm2608, %v2691, 0
    %v2744 = vsel %vm113, %v2694, 0
    %2746 = vmatprep.subr.mxu0 0.0
    %2747 = vmatpush1.msra.mxu0 0.0
    %2748 = vmatprep.subr.mxu0 0.0
    %2749 = vmatpush1.msra.mxu0 0.0
    %2750 = vmatprep.subr.mxu0 0.0
    %2751 = vmatpush1.msra.mxu0 0.0
    %2752 = vmatprep.subr.mxu0 0.0
    %2753 = vmatpush1.msra.mxu0 0.0
    %2754 = vmatprep.subr.mxu0 0.0
    %2755 = vmatpush1.msra.mxu0 0.0
    %2756 = vmatprep.subr.mxu0 0.0
    %2757 = vmatpush1.msra.mxu0 0.0
    %2758 = vmatprep.subr.mxu0 0.0
    %2759 = vmatpush1.msra.mxu0 0.0
    %2760 = vmatprep.subr.mxu0 0.0
    %2761 = vmatpush1.msra.mxu0 0.0
    %2762 = vmatprep.subr.mxu0 0.0
    %2763 = vmatpush1.msra.mxu0 0.0
    %2764 = vmatprep.subr.mxu0 0.0
    %2765 = vmatpush1.msra.mxu0 0.0
    %2766 = vmatprep.subr.mxu0 0.0
    %2767 = vmatpush1.msra.mxu0 0.0
    %2768 = vmatprep.subr.mxu0 0.0
    %2769 = vmatpush1.msra.mxu0 0.0
    %2770 = vmatprep.subr.mxu0 0.0
    %2771 = vmatpush1.msra.mxu0 0.0
    %2772 = vmatprep.subr.mxu0 0.0
    %2773 = vmatpush1.msra.mxu0 %v2744
    %2774 = vmatprep.subr.mxu0 0.0
    %2775 = vmatpush1.msra.mxu0 %v2693
    %2776 = vmatprep.subr.mxu0 0.0
    %2777 = vmatpush1.msra.mxu0 %v2692
    %2778 = vmatprep.subr.mxu0 0.0
    %2779 = vmatpush2.msra.mxu0 0.0
    %2780 = vmatprep.subr.mxu0 0.0
    %2781 = vmatpush2.msra.mxu0 0.0
    %2782 = vmatprep.subr.mxu0 0.0
    %2783 = vmatpush2.msra.mxu0 0.0
    %2784 = vmatprep.subr.mxu0 0.0
    %2785 = vmatpush2.msra.mxu0 0.0
    %2786 = vmatprep.subr.mxu0 0.0
    %2787 = vmatpush2.msra.mxu0 0.0
    %2788 = vmatprep.subr.mxu0 0.0
    %2789 = vmatpush2.msra.mxu0 0.0
    %2790 = vmatprep.subr.mxu0 0.0
    %2791 = vmatpush2.msra.mxu0 0.0
    %2792 = vmatprep.subr.mxu0 0.0
    %2793 = vmatpush2.msra.mxu0 0.0
    %2794 = vmatprep.subr.mxu0 0.0
    %2795 = vmatpush2.msra.mxu0 0.0
    %2796 = vmatprep.subr.mxu0 0.0
    %2797 = vmatpush2.msra.mxu0 0.0
    %2798 = vmatprep.subr.mxu0 0.0
    %2799 = vmatpush2.msra.mxu0 0.0
    %2800 = vmatprep.subr.mxu0 0.0
    %2801 = vmatpush2.msra.mxu0 0.0
    %2802 = vmatprep.subr.mxu0 0.0
    %2803 = vmatpush2.msra.mxu0 0.0
    %2804 = vmatprep.subr.mxu0 0.0
    %2805 = vmatpush2.msra.mxu0 0.0
    %2806 = vmatprep.subr.mxu0 0.0
    %2807 = vmatpush2.msra.mxu0 0.0
    %2808 = vmatprep.subr.mxu0 0.0
    %2809 = vmatpush2.msra.mxu0 0.0
    %2810 = vmatprep.mubr.f32.mxu0 0.0
    %2811 = vmatmul.mubr.f32.gmra.mxu0 %v2696
    %v2812 = vpop.f32.mrf.mxu0
    %v2813 = vadd.f32 0.0, %v2812
    %v2814 = vpop.f32.mrf.mxu0
    %2815 = vmatprep.mubr.f32.mxu0 0.0
    %2816 = vmatmul.mubr.f32.gmra.mxu0 %v2699
    %v2817 = vpop.f32.mrf.mxu0
    %v2818 = vadd.f32 0.0, %v2817
    %v2819 = vpop.f32.mrf.mxu0
    %2820 = vmatprep.mubr.f32.mxu0 0.0
    %2821 = vmatmul.mubr.f32.gmra.mxu0 %v2702
    %v2822 = vpop.f32.mrf.mxu0
    %v2823 = vadd.f32 0.0, %v2822
    %v2824 = vpop.f32.mrf.mxu0
    %2825 = vmatprep.mubr.f32.mxu0 0.0
    %2826 = vmatmul.mubr.f32.gmra.mxu0 %v2705
    %v2827 = vpop.f32.mrf.mxu0
    %v2828 = vadd.f32 0.0, %v2827
    %v2829 = vpop.f32.mrf.mxu0
    %2830 = vmatprep.mubr.f32.mxu0 0.0
    %2831 = vmatmul.mubr.f32.gmra.mxu0 %v2708
    %v2832 = vpop.f32.mrf.mxu0
    %v2833 = vadd.f32 0.0, %v2832
    %v2834 = vpop.f32.mrf.mxu0
    %2835 = vmatprep.mubr.f32.mxu0 0.0
    %2836 = vmatmul.mubr.f32.gmra.mxu0 %v2711
    %v2837 = vpop.f32.mrf.mxu0
    %v2838 = vadd.f32 0.0, %v2837
    %v2839 = vpop.f32.mrf.mxu0
    %2840 = vmatprep.mubr.f32.mxu0 0.0
    %2841 = vmatmul.mubr.f32.gmra.mxu0 %v2714
    %v2842 = vpop.f32.mrf.mxu0
    %v2843 = vadd.f32 0.0, %v2842
    %v2844 = vpop.f32.mrf.mxu0
    %2845 = vmatprep.mubr.f32.mxu0 0.0
    %2846 = vmatmul.mubr.f32.gmra.mxu0 %v2717
    %v2847 = vpop.f32.mrf.mxu0
    %v2848 = vadd.f32 0.0, %v2847
    %v2849 = vpop.f32.mrf.mxu0
    %2850 = vmatprep.mubr.f32.mxu0 0.0
    %2851 = vmatmul.mubr.f32.gmra.mxu0 %v2720
    %v2852 = vpop.f32.mrf.mxu0
    %v2853 = vadd.f32 0.0, %v2852
    %v2854 = vpop.f32.mrf.mxu0
    %2855 = vmatprep.mubr.f32.mxu0 0.0
    %2856 = vmatmul.mubr.f32.gmra.mxu0 %v2723
    %v2857 = vpop.f32.mrf.mxu0
    %v2858 = vadd.f32 0.0, %v2857
    %v2859 = vpop.f32.mrf.mxu0
    %2860 = vmatprep.mubr.f32.mxu0 0.0
    %2861 = vmatmul.mubr.f32.gmra.mxu0 %v2726
    %v2862 = vpop.f32.mrf.mxu0
    %v2863 = vadd.f32 0.0, %v2862
    %v2864 = vpop.f32.mrf.mxu0
    %2865 = vmatprep.mubr.f32.mxu0 0.0
    %2866 = vmatmul.mubr.f32.gmra.mxu0 %v2729
    %v2867 = vpop.f32.mrf.mxu0
    %v2868 = vadd.f32 0.0, %v2867
    %v2869 = vpop.f32.mrf.mxu0
    %2870 = vmatprep.mubr.f32.mxu0 0.0
    %2871 = vmatmul.mubr.f32.gmra.mxu0 %v2732
    %v2872 = vpop.f32.mrf.mxu0
    %v2873 = vadd.f32 0.0, %v2872
    %v2874 = vpop.f32.mrf.mxu0
    %2875 = vmatprep.mubr.f32.mxu0 0.0
    %2876 = vmatmul.mubr.f32.gmra.mxu0 %v2735
    %v2877 = vpop.f32.mrf.mxu0
    %v2878 = vadd.f32 0.0, %v2877
    %v2879 = vpop.f32.mrf.mxu0
    %2880 = vmatprep.mubr.f32.mxu0 0.0
    %2881 = vmatmul.mubr.f32.gmra.mxu0 %v2738
    %v2882 = vpop.f32.mrf.mxu0
    %v2883 = vadd.f32 0.0, %v2882
    %v2884 = vpop.f32.mrf.mxu0
    %2885 = vmatprep.mubr.f32.mxu0 0.0
    %2886 = vmatmul.mubr.f32.gmra.mxu0 %v2741
    %v2887 = vpop.f32.mrf.mxu0
    %v2888 = vadd.f32 0.0, %v2887
    %v2889 = vpop.f32.mrf.mxu0
    %2890 = vdwg.mxu0
    %v2891 = vadd.f32 %v2674, %v2813
    %v2892 = vadd.f32 %v2674, %v2818
    %v2893 = vadd.f32 %v2674, %v2823
    %v2894 = vadd.f32 %v2674, %v2828
    %v2895 = vadd.f32 %v2674, %v2833
    %v2896 = vadd.f32 %v2674, %v2838
    %v2897 = vadd.f32 %v2674, %v2843
    %v2898 = vadd.f32 %v2674, %v2848
    %v2899 = vadd.f32 %v2674, %v2853
    %v2900 = vadd.f32 %v2674, %v2858
    %v2901 = vadd.f32 %v2674, %v2863
    %v2902 = vadd.f32 %v2674, %v2868
    %v2903 = vadd.f32 %v2674, %v2873
    %v2904 = vadd.f32 %v2674, %v2878
    %v2905 = vadd.f32 %v2674, %v2883
    %v2906 = vadd.f32 %v2674, %v2888
    %v2907 = vld [vmem:[#allocation2 + $0x1] sm:$0xff]
    %v2908 = vld [vmem:[#allocation2 + $0x11] sm:$0xff]
    %v2909 = vld [vmem:[#allocation2 + $0x21] sm:$0xff]
    %v2910 = vld [vmem:[#allocation2 + $0x31] sm:$0xff]
    %v2911 = vld [vmem:[#allocation2 + $0x41] sm:$0xff]
    %v2912 = vld [vmem:[#allocation2 + $0x51] sm:$0xff]
    %v2913 = vld [vmem:[#allocation2 + $0x61] sm:$0xff]
    %v2914 = vld [vmem:[#allocation2 + $0x71] sm:$0xff]
    %v2915 = vld [vmem:[#allocation2 + $0xa1] sm:$0xff]
    %v2916 = vld [vmem:[#allocation2 + $0xb1] sm:$0xff]
    %v2917 = vld [vmem:[#allocation2 + $0xc1] sm:$0xff]
    %v2918 = vld [vmem:[#allocation2 + $0xd1] sm:$0xff]
    %v2919 = vld [vmem:[#allocation2 + $0xe1] sm:$0xff]
    %v2920 = vld [vmem:[#allocation2 + $0xf1] sm:$0xff]
    %v2921 = vld [vmem:[#allocation2 + $0x101] sm:$0xff]
    %v2922 = vld [vmem:[#allocation2 + $0x111] sm:$0xff]
    %s2923 = scalar_lea.vmem %s3, 24
    %v2924 = vld [vmem:[%s2923] sm:$0xff]
    %v2925 = vld [vmem:[%s2923 + $0x8] sm:$0xff]
    %v2926 = vld [vmem:[%s2923 + $0x10] sm:$0xf]
    %v2928 = vsel %vm2608, %v2907, 0
    %v2931 = vsel %vm2608, %v2908, 0
    %v2934 = vsel %vm2608, %v2909, 0
    %v2937 = vsel %vm2608, %v2910, 0
    %v2940 = vsel %vm2608, %v2911, 0
    %v2943 = vsel %vm2608, %v2912, 0
    %v2946 = vsel %vm2608, %v2913, 0
    %v2949 = vsel %vm2608, %v2914, 0
    %v2952 = vsel %vm2608, %v2915, 0
    %v2955 = vsel %vm2608, %v2916, 0
    %v2958 = vsel %vm2608, %v2917, 0
    %v2961 = vsel %vm2608, %v2918, 0
    %v2964 = vsel %vm2608, %v2919, 0
    %v2967 = vsel %vm2608, %v2920, 0
    %v2970 = vsel %vm2608, %v2921, 0
    %v2973 = vsel %vm2608, %v2922, 0
    %v2976 = vsel %vm113, %v2926, 0
    %2978 = vmatprep.subr.mxu0 0.0
    %2979 = vmatpush1.msra.mxu0 0.0
    %2980 = vmatprep.subr.mxu0 0.0
    %2981 = vmatpush1.msra.mxu0 0.0
    %2982 = vmatprep.subr.mxu0 0.0
    %2983 = vmatpush1.msra.mxu0 0.0
    %2984 = vmatprep.subr.mxu0 0.0
    %2985 = vmatpush1.msra.mxu0 0.0
    %2986 = vmatprep.subr.mxu0 0.0
    %2987 = vmatpush1.msra.mxu0 0.0
    %2988 = vmatprep.subr.mxu0 0.0
    %2989 = vmatpush1.msra.mxu0 0.0
    %2990 = vmatprep.subr.mxu0 0.0
    %2991 = vmatpush1.msra.mxu0 0.0
    %2992 = vmatprep.subr.mxu0 0.0
    %2993 = vmatpush1.msra.mxu0 0.0
    %2994 = vmatprep.subr.mxu0 0.0
    %2995 = vmatpush1.msra.mxu0 0.0
    %2996 = vmatprep.subr.mxu0 0.0
    %2997 = vmatpush1.msra.mxu0 0.0
    %2998 = vmatprep.subr.mxu0 0.0
    %2999 = vmatpush1.msra.mxu0 0.0
    %3000 = vmatprep.subr.mxu0 0.0
    %3001 = vmatpush1.msra.mxu0 0.0
    %3002 = vmatprep.subr.mxu0 0.0
    %3003 = vmatpush1.msra.mxu0 0.0
    %3004 = vmatprep.subr.mxu0 0.0
    %3005 = vmatpush1.msra.mxu0 %v2976
    %3006 = vmatprep.subr.mxu0 0.0
    %3007 = vmatpush1.msra.mxu0 %v2925
    %3008 = vmatprep.subr.mxu0 0.0
    %3009 = vmatpush1.msra.mxu0 %v2924
    %3010 = vmatprep.subr.mxu0 0.0
    %3011 = vmatpush2.msra.mxu0 0.0
    %3012 = vmatprep.subr.mxu0 0.0
    %3013 = vmatpush2.msra.mxu0 0.0
    %3014 = vmatprep.subr.mxu0 0.0
    %3015 = vmatpush2.msra.mxu0 0.0
    %3016 = vmatprep.subr.mxu0 0.0
    %3017 = vmatpush2.msra.mxu0 0.0
    %3018 = vmatprep.subr.mxu0 0.0
    %3019 = vmatpush2.msra.mxu0 0.0
    %3020 = vmatprep.subr.mxu0 0.0
    %3021 = vmatpush2.msra.mxu0 0.0
    %3022 = vmatprep.subr.mxu0 0.0
    %3023 = vmatpush2.msra.mxu0 0.0
    %3024 = vmatprep.subr.mxu0 0.0
    %3025 = vmatpush2.msra.mxu0 0.0
    %3026 = vmatprep.subr.mxu0 0.0
    %3027 = vmatpush2.msra.mxu0 0.0
    %3028 = vmatprep.subr.mxu0 0.0
    %3029 = vmatpush2.msra.mxu0 0.0
    %3030 = vmatprep.subr.mxu0 0.0
    %3031 = vmatpush2.msra.mxu0 0.0
    %3032 = vmatprep.subr.mxu0 0.0
    %3033 = vmatpush2.msra.mxu0 0.0
    %3034 = vmatprep.subr.mxu0 0.0
    %3035 = vmatpush2.msra.mxu0 0.0
    %3036 = vmatprep.subr.mxu0 0.0
    %3037 = vmatpush2.msra.mxu0 0.0
    %3038 = vmatprep.subr.mxu0 0.0
    %3039 = vmatpush2.msra.mxu0 0.0
    %3040 = vmatprep.subr.mxu0 0.0
    %3041 = vmatpush2.msra.mxu0 0.0
    %3042 = vmatprep.mubr.f32.mxu0 0.0
    %3043 = vmatmul.mubr.f32.gmra.mxu0 %v2928
    %v3044 = vpop.f32.mrf.mxu0
    %v3045 = vadd.f32 0.0, %v3044
    %v3046 = vpop.f32.mrf.mxu0
    %3047 = vmatprep.mubr.f32.mxu0 0.0
    %3048 = vmatmul.mubr.f32.gmra.mxu0 %v2931
    %v3049 = vpop.f32.mrf.mxu0
    %v3050 = vadd.f32 0.0, %v3049
    %v3051 = vpop.f32.mrf.mxu0
    %3052 = vmatprep.mubr.f32.mxu0 0.0
    %3053 = vmatmul.mubr.f32.gmra.mxu0 %v2934
    %v3054 = vpop.f32.mrf.mxu0
    %v3055 = vadd.f32 0.0, %v3054
    %v3056 = vpop.f32.mrf.mxu0
    %3057 = vmatprep.mubr.f32.mxu0 0.0
    %3058 = vmatmul.mubr.f32.gmra.mxu0 %v2937
    %v3059 = vpop.f32.mrf.mxu0
    %v3060 = vadd.f32 0.0, %v3059
    %v3061 = vpop.f32.mrf.mxu0
    %3062 = vmatprep.mubr.f32.mxu0 0.0
    %3063 = vmatmul.mubr.f32.gmra.mxu0 %v2940
    %v3064 = vpop.f32.mrf.mxu0
    %v3065 = vadd.f32 0.0, %v3064
    %v3066 = vpop.f32.mrf.mxu0
    %3067 = vmatprep.mubr.f32.mxu0 0.0
    %3068 = vmatmul.mubr.f32.gmra.mxu0 %v2943
    %v3069 = vpop.f32.mrf.mxu0
    %v3070 = vadd.f32 0.0, %v3069
    %v3071 = vpop.f32.mrf.mxu0
    %3072 = vmatprep.mubr.f32.mxu0 0.0
    %3073 = vmatmul.mubr.f32.gmra.mxu0 %v2946
    %v3074 = vpop.f32.mrf.mxu0
    %v3075 = vadd.f32 0.0, %v3074
    %v3076 = vpop.f32.mrf.mxu0
    %3077 = vmatprep.mubr.f32.mxu0 0.0
    %3078 = vmatmul.mubr.f32.gmra.mxu0 %v2949
    %v3079 = vpop.f32.mrf.mxu0
    %v3080 = vadd.f32 0.0, %v3079
    %v3081 = vpop.f32.mrf.mxu0
    %3082 = vmatprep.mubr.f32.mxu0 0.0
    %3083 = vmatmul.mubr.f32.gmra.mxu0 %v2952
    %v3084 = vpop.f32.mrf.mxu0
    %v3085 = vadd.f32 0.0, %v3084
    %v3086 = vpop.f32.mrf.mxu0
    %3087 = vmatprep.mubr.f32.mxu0 0.0
    %3088 = vmatmul.mubr.f32.gmra.mxu0 %v2955
    %v3089 = vpop.f32.mrf.mxu0
    %v3090 = vadd.f32 0.0, %v3089
    %v3091 = vpop.f32.mrf.mxu0
    %3092 = vmatprep.mubr.f32.mxu0 0.0
    %3093 = vmatmul.mubr.f32.gmra.mxu0 %v2958
    %v3094 = vpop.f32.mrf.mxu0
    %v3095 = vadd.f32 0.0, %v3094
    %v3096 = vpop.f32.mrf.mxu0
    %3097 = vmatprep.mubr.f32.mxu0 0.0
    %3098 = vmatmul.mubr.f32.gmra.mxu0 %v2961
    %v3099 = vpop.f32.mrf.mxu0
    %v3100 = vadd.f32 0.0, %v3099
    %v3101 = vpop.f32.mrf.mxu0
    %3102 = vmatprep.mubr.f32.mxu0 0.0
    %3103 = vmatmul.mubr.f32.gmra.mxu0 %v2964
    %v3104 = vpop.f32.mrf.mxu0
    %v3105 = vadd.f32 0.0, %v3104
    %v3106 = vpop.f32.mrf.mxu0
    %3107 = vmatprep.mubr.f32.mxu0 0.0
    %3108 = vmatmul.mubr.f32.gmra.mxu0 %v2967
    %v3109 = vpop.f32.mrf.mxu0
    %v3110 = vadd.f32 0.0, %v3109
    %v3111 = vpop.f32.mrf.mxu0
    %3112 = vmatprep.mubr.f32.mxu0 0.0
    %3113 = vmatmul.mubr.f32.gmra.mxu0 %v2970
    %v3114 = vpop.f32.mrf.mxu0
    %v3115 = vadd.f32 0.0, %v3114
    %v3116 = vpop.f32.mrf.mxu0
    %3117 = vmatprep.mubr.f32.mxu0 0.0
    %3118 = vmatmul.mubr.f32.gmra.mxu0 %v2973
    %v3119 = vpop.f32.mrf.mxu0
    %v3120 = vadd.f32 0.0, %v3119
    %v3121 = vpop.f32.mrf.mxu0
    %3122 = vdwg.mxu0
    %v3123 = vadd.f32 %v2891, %v3045
    %v3124 = vadd.f32 %v2892, %v3050
    %v3125 = vadd.f32 %v2893, %v3055
    %v3126 = vadd.f32 %v2894, %v3060
    %v3127 = vadd.f32 %v2895, %v3065
    %v3128 = vadd.f32 %v2896, %v3070
    %v3129 = vadd.f32 %v2897, %v3075
    %v3130 = vadd.f32 %v2898, %v3080
    %v3131 = vadd.f32 %v2899, %v3085
    %v3132 = vadd.f32 %v2900, %v3090
    %v3133 = vadd.f32 %v2901, %v3095
    %v3134 = vadd.f32 %v2902, %v3100
    %v3135 = vadd.f32 %v2903, %v3105
    %v3136 = vadd.f32 %v2904, %v3110
    %v3137 = vadd.f32 %v2905, %v3115
    %v3138 = vadd.f32 %v2906, %v3120
    %v3139 = vld [vmem:[#allocation2 + $0x2] sm:$0xff]
    %v3140 = vld [vmem:[#allocation2 + $0x12] sm:$0xff]
    %v3141 = vld [vmem:[#allocation2 + $0x22] sm:$0xff]
    %v3142 = vld [vmem:[#allocation2 + $0x32] sm:$0xff]
    %v3143 = vld [vmem:[#allocation2 + $0x42] sm:$0xff]
    %v3144 = vld [vmem:[#allocation2 + $0x52] sm:$0xff]
    %v3145 = vld [vmem:[#allocation2 + $0x62] sm:$0xff]
    %v3146 = vld [vmem:[#allocation2 + $0x72] sm:$0xff]
    %v3147 = vld [vmem:[#allocation2 + $0xa2] sm:$0xff]
    %v3148 = vld [vmem:[#allocation2 + $0xb2] sm:$0xff]
    %v3149 = vld [vmem:[#allocation2 + $0xc2] sm:$0xff]
    %v3150 = vld [vmem:[#allocation2 + $0xd2] sm:$0xff]
    %v3151 = vld [vmem:[#allocation2 + $0xe2] sm:$0xff]
    %v3152 = vld [vmem:[#allocation2 + $0xf2] sm:$0xff]
    %v3153 = vld [vmem:[#allocation2 + $0x102] sm:$0xff]
    %v3154 = vld [vmem:[#allocation2 + $0x112] sm:$0xff]
    %s3155 = scalar_lea.vmem %s3, 48
    %v3156 = vld [vmem:[%s3155] sm:$0xff]
    %v3157 = vld [vmem:[%s3155 + $0x8] sm:$0xff]
    %v3158 = vld [vmem:[%s3155 + $0x10] sm:$0xf]
    %v3160 = vsel %vm2608, %v3139, 0
    %v3163 = vsel %vm2608, %v3140, 0
    %v3166 = vsel %vm2608, %v3141, 0
    %v3169 = vsel %vm2608, %v3142, 0
    %v3172 = vsel %vm2608, %v3143, 0
    %v3175 = vsel %vm2608, %v3144, 0
    %v3178 = vsel %vm2608, %v3145, 0
    %v3181 = vsel %vm2608, %v3146, 0
    %v3184 = vsel %vm2608, %v3147, 0
    %v3187 = vsel %vm2608, %v3148, 0
    %v3190 = vsel %vm2608, %v3149, 0
    %v3193 = vsel %vm2608, %v3150, 0
    %v3196 = vsel %vm2608, %v3151, 0
    %v3199 = vsel %vm2608, %v3152, 0
    %v3202 = vsel %vm2608, %v3153, 0
    %v3205 = vsel %vm2608, %v3154, 0
    %v3208 = vsel %vm113, %v3158, 0
    %3210 = vmatprep.subr.mxu0 0.0
    %3211 = vmatpush1.msra.mxu0 0.0
    %3212 = vmatprep.subr.mxu0 0.0
    %3213 = vmatpush1.msra.mxu0 0.0
    %3214 = vmatprep.subr.mxu0 0.0
    %3215 = vmatpush1.msra.mxu0 0.0
    %3216 = vmatprep.subr.mxu0 0.0
    %3217 = vmatpush1.msra.mxu0 0.0
    %3218 = vmatprep.subr.mxu0 0.0
    %3219 = vmatpush1.msra.mxu0 0.0
    %3220 = vmatprep.subr.mxu0 0.0
    %3221 = vmatpush1.msra.mxu0 0.0
    %3222 = vmatprep.subr.mxu0 0.0
    %3223 = vmatpush1.msra.mxu0 0.0
    %3224 = vmatprep.subr.mxu0 0.0
    %3225 = vmatpush1.msra.mxu0 0.0
    %3226 = vmatprep.subr.mxu0 0.0
    %3227 = vmatpush1.msra.mxu0 0.0
    %3228 = vmatprep.subr.mxu0 0.0
    %3229 = vmatpush1.msra.mxu0 0.0
    %3230 = vmatprep.subr.mxu0 0.0
    %3231 = vmatpush1.msra.mxu0 0.0
    %3232 = vmatprep.subr.mxu0 0.0
    %3233 = vmatpush1.msra.mxu0 0.0
    %3234 = vmatprep.subr.mxu0 0.0
    %3235 = vmatpush1.msra.mxu0 0.0
    %3236 = vmatprep.subr.mxu0 0.0
    %3237 = vmatpush1.msra.mxu0 %v3208
    %3238 = vmatprep.subr.mxu0 0.0
    %3239 = vmatpush1.msra.mxu0 %v3157
    %3240 = vmatprep.subr.mxu0 0.0
    %3241 = vmatpush1.msra.mxu0 %v3156
    %3242 = vmatprep.subr.mxu0 0.0
    %3243 = vmatpush2.msra.mxu0 0.0
    %3244 = vmatprep.subr.mxu0 0.0
    %3245 = vmatpush2.msra.mxu0 0.0
    %3246 = vmatprep.subr.mxu0 0.0
    %3247 = vmatpush2.msra.mxu0 0.0
    %3248 = vmatprep.subr.mxu0 0.0
    %3249 = vmatpush2.msra.mxu0 0.0
    %3250 = vmatprep.subr.mxu0 0.0
    %3251 = vmatpush2.msra.mxu0 0.0
    %3252 = vmatprep.subr.mxu0 0.0
    %3253 = vmatpush2.msra.mxu0 0.0
    %3254 = vmatprep.subr.mxu0 0.0
    %3255 = vmatpush2.msra.mxu0 0.0
    %3256 = vmatprep.subr.mxu0 0.0
    %3257 = vmatpush2.msra.mxu0 0.0
    %3258 = vmatprep.subr.mxu0 0.0
    %3259 = vmatpush2.msra.mxu0 0.0
    %3260 = vmatprep.subr.mxu0 0.0
    %3261 = vmatpush2.msra.mxu0 0.0
    %3262 = vmatprep.subr.mxu0 0.0
    %3263 = vmatpush2.msra.mxu0 0.0
    %3264 = vmatprep.subr.mxu0 0.0
    %3265 = vmatpush2.msra.mxu0 0.0
    %3266 = vmatprep.subr.mxu0 0.0
    %3267 = vmatpush2.msra.mxu0 0.0
    %3268 = vmatprep.subr.mxu0 0.0
    %3269 = vmatpush2.msra.mxu0 0.0
    %3270 = vmatprep.subr.mxu0 0.0
    %3271 = vmatpush2.msra.mxu0 0.0
    %3272 = vmatprep.subr.mxu0 0.0
    %3273 = vmatpush2.msra.mxu0 0.0
    %3274 = vmatprep.mubr.f32.mxu0 0.0
    %3275 = vmatmul.mubr.f32.gmra.mxu0 %v3160
    %v3276 = vpop.f32.mrf.mxu0
    %v3277 = vadd.f32 0.0, %v3276
    %v3278 = vpop.f32.mrf.mxu0
    %3279 = vmatprep.mubr.f32.mxu0 0.0
    %3280 = vmatmul.mubr.f32.gmra.mxu0 %v3163
    %v3281 = vpop.f32.mrf.mxu0
    %v3282 = vadd.f32 0.0, %v3281
    %v3283 = vpop.f32.mrf.mxu0
    %3284 = vmatprep.mubr.f32.mxu0 0.0
    %3285 = vmatmul.mubr.f32.gmra.mxu0 %v3166
    %v3286 = vpop.f32.mrf.mxu0
    %v3287 = vadd.f32 0.0, %v3286
    %v3288 = vpop.f32.mrf.mxu0
    %3289 = vmatprep.mubr.f32.mxu0 0.0
    %3290 = vmatmul.mubr.f32.gmra.mxu0 %v3169
    %v3291 = vpop.f32.mrf.mxu0
    %v3292 = vadd.f32 0.0, %v3291
    %v3293 = vpop.f32.mrf.mxu0
    %3294 = vmatprep.mubr.f32.mxu0 0.0
    %3295 = vmatmul.mubr.f32.gmra.mxu0 %v3172
    %v3296 = vpop.f32.mrf.mxu0
    %v3297 = vadd.f32 0.0, %v3296
    %v3298 = vpop.f32.mrf.mxu0
    %3299 = vmatprep.mubr.f32.mxu0 0.0
    %3300 = vmatmul.mubr.f32.gmra.mxu0 %v3175
    %v3301 = vpop.f32.mrf.mxu0
    %v3302 = vadd.f32 0.0, %v3301
    %v3303 = vpop.f32.mrf.mxu0
    %3304 = vmatprep.mubr.f32.mxu0 0.0
    %3305 = vmatmul.mubr.f32.gmra.mxu0 %v3178
    %v3306 = vpop.f32.mrf.mxu0
    %v3307 = vadd.f32 0.0, %v3306
    %v3308 = vpop.f32.mrf.mxu0
    %3309 = vmatprep.mubr.f32.mxu0 0.0
    %3310 = vmatmul.mubr.f32.gmra.mxu0 %v3181
    %v3311 = vpop.f32.mrf.mxu0
    %v3312 = vadd.f32 0.0, %v3311
    %v3313 = vpop.f32.mrf.mxu0
    %3314 = vmatprep.mubr.f32.mxu0 0.0
    %3315 = vmatmul.mubr.f32.gmra.mxu0 %v3184
    %v3316 = vpop.f32.mrf.mxu0
    %v3317 = vadd.f32 0.0, %v3316
    %v3318 = vpop.f32.mrf.mxu0
    %3319 = vmatprep.mubr.f32.mxu0 0.0
    %3320 = vmatmul.mubr.f32.gmra.mxu0 %v3187
    %v3321 = vpop.f32.mrf.mxu0
    %v3322 = vadd.f32 0.0, %v3321
    %v3323 = vpop.f32.mrf.mxu0
    %3324 = vmatprep.mubr.f32.mxu0 0.0
    %3325 = vmatmul.mubr.f32.gmra.mxu0 %v3190
    %v3326 = vpop.f32.mrf.mxu0
    %v3327 = vadd.f32 0.0, %v3326
    %v3328 = vpop.f32.mrf.mxu0
    %3329 = vmatprep.mubr.f32.mxu0 0.0
    %3330 = vmatmul.mubr.f32.gmra.mxu0 %v3193
    %v3331 = vpop.f32.mrf.mxu0
    %v3332 = vadd.f32 0.0, %v3331
    %v3333 = vpop.f32.mrf.mxu0
    %3334 = vmatprep.mubr.f32.mxu0 0.0
    %3335 = vmatmul.mubr.f32.gmra.mxu0 %v3196
    %v3336 = vpop.f32.mrf.mxu0
    %v3337 = vadd.f32 0.0, %v3336
    %v3338 = vpop.f32.mrf.mxu0
    %3339 = vmatprep.mubr.f32.mxu0 0.0
    %3340 = vmatmul.mubr.f32.gmra.mxu0 %v3199
    %v3341 = vpop.f32.mrf.mxu0
    %v3342 = vadd.f32 0.0, %v3341
    %v3343 = vpop.f32.mrf.mxu0
    %3344 = vmatprep.mubr.f32.mxu0 0.0
    %3345 = vmatmul.mubr.f32.gmra.mxu0 %v3202
    %v3346 = vpop.f32.mrf.mxu0
    %v3347 = vadd.f32 0.0, %v3346
    %v3348 = vpop.f32.mrf.mxu0
    %3349 = vmatprep.mubr.f32.mxu0 0.0
    %3350 = vmatmul.mubr.f32.gmra.mxu0 %v3205
    %v3351 = vpop.f32.mrf.mxu0
    %v3352 = vadd.f32 0.0, %v3351
    %v3353 = vpop.f32.mrf.mxu0
    %3354 = vdwg.mxu0
    %v3355 = vadd.f32 %v3123, %v3277
    %v3356 = vadd.f32 %v3124, %v3282
    %v3357 = vadd.f32 %v3125, %v3287
    %v3358 = vadd.f32 %v3126, %v3292
    %v3359 = vadd.f32 %v3127, %v3297
    %v3360 = vadd.f32 %v3128, %v3302
    %v3361 = vadd.f32 %v3129, %v3307
    %v3362 = vadd.f32 %v3130, %v3312
    %v3363 = vadd.f32 %v3131, %v3317
    %v3364 = vadd.f32 %v3132, %v3322
    %v3365 = vadd.f32 %v3133, %v3327
    %v3366 = vadd.f32 %v3134, %v3332
    %v3367 = vadd.f32 %v3135, %v3337
    %v3368 = vadd.f32 %v3136, %v3342
    %v3369 = vadd.f32 %v3137, %v3347
    %v3370 = vadd.f32 %v3138, %v3352
    %v3371 = vld [vmem:[%s2619] sm:$0xff]
    %v3372 = vld [vmem:[%s2619 + $0x10] sm:$0xff]
    %v3373 = vld [vmem:[%s2619 + $0x20] sm:$0xff]
    %v3374 = vld [vmem:[%s2619 + $0x30] sm:$0xff]
    %v3375 = vld [vmem:[%s2619 + $0x40] sm:$0xff]
    %v3376 = vld [vmem:[%s2619 + $0x50] sm:$0xff]
    %v3377 = vld [vmem:[%s2619 + $0x60] sm:$0xff]
    %v3378 = vld [vmem:[%s2619 + $0x70] sm:$0xff]
    %v3379 = vld [vmem:[%s2619 + $0xa0] sm:$0xff]
    %v3380 = vld [vmem:[%s2619 + $0xb0] sm:$0xff]
    %v3381 = vld [vmem:[%s2619 + $0xc0] sm:$0xff]
    %v3382 = vld [vmem:[%s2619 + $0xd0] sm:$0xff]
    %v3383 = vld [vmem:[%s2619 + $0xe0] sm:$0xff]
    %v3384 = vld [vmem:[%s2619 + $0xf0] sm:$0xff]
    %v3385 = vld [vmem:[%s2619 + $0x100] sm:$0xff]
    %v3386 = vld [vmem:[%s2619 + $0x110] sm:$0xff]
    %s3387 = scalar_lea.vmem %s3, 72
    %v3388 = vld [vmem:[%s3387] sm:$0xff]
    %v3389 = vld [vmem:[%s3387 + $0x8] sm:$0xff]
    %v3390 = vld [vmem:[%s3387 + $0x10] sm:$0xf]
    %v3392 = vsel %vm2608, %v3371, 0
    %v3395 = vsel %vm2608, %v3372, 0
    %v3398 = vsel %vm2608, %v3373, 0
    %v3401 = vsel %vm2608, %v3374, 0
    %v3404 = vsel %vm2608, %v3375, 0
    %v3407 = vsel %vm2608, %v3376, 0
    %v3410 = vsel %vm2608, %v3377, 0
    %v3413 = vsel %vm2608, %v3378, 0
    %v3416 = vsel %vm2608, %v3379, 0
    %v3419 = vsel %vm2608, %v3380, 0
    %v3422 = vsel %vm2608, %v3381, 0
    %v3425 = vsel %vm2608, %v3382, 0
    %v3428 = vsel %vm2608, %v3383, 0
    %v3431 = vsel %vm2608, %v3384, 0
    %v3434 = vsel %vm2608, %v3385, 0
    %v3437 = vsel %vm2608, %v3386, 0
    %v3440 = vsel %vm113, %v3390, 0
    %3442 = vmatprep.subr.mxu0 0.0
    %3443 = vmatpush1.msra.mxu0 0.0
    %3444 = vmatprep.subr.mxu0 0.0
    %3445 = vmatpush1.msra.mxu0 0.0
    %3446 = vmatprep.subr.mxu0 0.0
    %3447 = vmatpush1.msra.mxu0 0.0
    %3448 = vmatprep.subr.mxu0 0.0
    %3449 = vmatpush1.msra.mxu0 0.0
    %3450 = vmatprep.subr.mxu0 0.0
    %3451 = vmatpush1.msra.mxu0 0.0
    %3452 = vmatprep.subr.mxu0 0.0
    %3453 = vmatpush1.msra.mxu0 0.0
    %3454 = vmatprep.subr.mxu0 0.0
    %3455 = vmatpush1.msra.mxu0 0.0
    %3456 = vmatprep.subr.mxu0 0.0
    %3457 = vmatpush1.msra.mxu0 0.0
    %3458 = vmatprep.subr.mxu0 0.0
    %3459 = vmatpush1.msra.mxu0 0.0
    %3460 = vmatprep.subr.mxu0 0.0
    %3461 = vmatpush1.msra.mxu0 0.0
    %3462 = vmatprep.subr.mxu0 0.0
    %3463 = vmatpush1.msra.mxu0 0.0
    %3464 = vmatprep.subr.mxu0 0.0
    %3465 = vmatpush1.msra.mxu0 0.0
    %3466 = vmatprep.subr.mxu0 0.0
    %3467 = vmatpush1.msra.mxu0 0.0
    %3468 = vmatprep.subr.mxu0 0.0
    %3469 = vmatpush1.msra.mxu0 %v3440
    %3470 = vmatprep.subr.mxu0 0.0
    %3471 = vmatpush1.msra.mxu0 %v3389
    %3472 = vmatprep.subr.mxu0 0.0
    %3473 = vmatpush1.msra.mxu0 %v3388
    %3474 = vmatprep.subr.mxu0 0.0
    %3475 = vmatpush2.msra.mxu0 0.0
    %3476 = vmatprep.subr.mxu0 0.0
    %3477 = vmatpush2.msra.mxu0 0.0
    %3478 = vmatprep.subr.mxu0 0.0
    %3479 = vmatpush2.msra.mxu0 0.0
    %3480 = vmatprep.subr.mxu0 0.0
    %3481 = vmatpush2.msra.mxu0 0.0
    %3482 = vmatprep.subr.mxu0 0.0
    %3483 = vmatpush2.msra.mxu0 0.0
    %3484 = vmatprep.subr.mxu0 0.0
    %3485 = vmatpush2.msra.mxu0 0.0
    %3486 = vmatprep.subr.mxu0 0.0
    %3487 = vmatpush2.msra.mxu0 0.0
    %3488 = vmatprep.subr.mxu0 0.0
    %3489 = vmatpush2.msra.mxu0 0.0
    %3490 = vmatprep.subr.mxu0 0.0
    %3491 = vmatpush2.msra.mxu0 0.0
    %3492 = vmatprep.subr.mxu0 0.0
    %3493 = vmatpush2.msra.mxu0 0.0
    %3494 = vmatprep.subr.mxu0 0.0
    %3495 = vmatpush2.msra.mxu0 0.0
    %3496 = vmatprep.subr.mxu0 0.0
    %3497 = vmatpush2.msra.mxu0 0.0
    %3498 = vmatprep.subr.mxu0 0.0
    %3499 = vmatpush2.msra.mxu0 0.0
    %3500 = vmatprep.subr.mxu0 0.0
    %3501 = vmatpush2.msra.mxu0 0.0
    %3502 = vmatprep.subr.mxu0 0.0
    %3503 = vmatpush2.msra.mxu0 0.0
    %3504 = vmatprep.subr.mxu0 0.0
    %3505 = vmatpush2.msra.mxu0 0.0
    %3506 = vmatprep.mubr.f32.mxu0 0.0
    %3507 = vmatmul.mubr.f32.gmra.mxu0 %v3392
    %v3508 = vpop.f32.mrf.mxu0
    %v3509 = vadd.f32 0.0, %v3508
    %v3510 = vpop.f32.mrf.mxu0
    %3511 = vmatprep.mubr.f32.mxu0 0.0
    %3512 = vmatmul.mubr.f32.gmra.mxu0 %v3395
    %v3513 = vpop.f32.mrf.mxu0
    %v3514 = vadd.f32 0.0, %v3513
    %v3515 = vpop.f32.mrf.mxu0
    %3516 = vmatprep.mubr.f32.mxu0 0.0
    %3517 = vmatmul.mubr.f32.gmra.mxu0 %v3398
    %v3518 = vpop.f32.mrf.mxu0
    %v3519 = vadd.f32 0.0, %v3518
    %v3520 = vpop.f32.mrf.mxu0
    %3521 = vmatprep.mubr.f32.mxu0 0.0
    %3522 = vmatmul.mubr.f32.gmra.mxu0 %v3401
    %v3523 = vpop.f32.mrf.mxu0
    %v3524 = vadd.f32 0.0, %v3523
    %v3525 = vpop.f32.mrf.mxu0
    %3526 = vmatprep.mubr.f32.mxu0 0.0
    %3527 = vmatmul.mubr.f32.gmra.mxu0 %v3404
    %v3528 = vpop.f32.mrf.mxu0
    %v3529 = vadd.f32 0.0, %v3528
    %v3530 = vpop.f32.mrf.mxu0
    %3531 = vmatprep.mubr.f32.mxu0 0.0
    %3532 = vmatmul.mubr.f32.gmra.mxu0 %v3407
    %v3533 = vpop.f32.mrf.mxu0
    %v3534 = vadd.f32 0.0, %v3533
    %v3535 = vpop.f32.mrf.mxu0
    %3536 = vmatprep.mubr.f32.mxu0 0.0
    %3537 = vmatmul.mubr.f32.gmra.mxu0 %v3410
    %v3538 = vpop.f32.mrf.mxu0
    %v3539 = vadd.f32 0.0, %v3538
    %v3540 = vpop.f32.mrf.mxu0
    %3541 = vmatprep.mubr.f32.mxu0 0.0
    %3542 = vmatmul.mubr.f32.gmra.mxu0 %v3413
    %v3543 = vpop.f32.mrf.mxu0
    %v3544 = vadd.f32 0.0, %v3543
    %v3545 = vpop.f32.mrf.mxu0
    %3546 = vmatprep.mubr.f32.mxu0 0.0
    %3547 = vmatmul.mubr.f32.gmra.mxu0 %v3416
    %v3548 = vpop.f32.mrf.mxu0
    %v3549 = vadd.f32 0.0, %v3548
    %v3550 = vpop.f32.mrf.mxu0
    %3551 = vmatprep.mubr.f32.mxu0 0.0
    %3552 = vmatmul.mubr.f32.gmra.mxu0 %v3419
    %v3553 = vpop.f32.mrf.mxu0
    %v3554 = vadd.f32 0.0, %v3553
    %v3555 = vpop.f32.mrf.mxu0
    %3556 = vmatprep.mubr.f32.mxu0 0.0
    %3557 = vmatmul.mubr.f32.gmra.mxu0 %v3422
    %v3558 = vpop.f32.mrf.mxu0
    %v3559 = vadd.f32 0.0, %v3558
    %v3560 = vpop.f32.mrf.mxu0
    %3561 = vmatprep.mubr.f32.mxu0 0.0
    %3562 = vmatmul.mubr.f32.gmra.mxu0 %v3425
    %v3563 = vpop.f32.mrf.mxu0
    %v3564 = vadd.f32 0.0, %v3563
    %v3565 = vpop.f32.mrf.mxu0
    %3566 = vmatprep.mubr.f32.mxu0 0.0
    %3567 = vmatmul.mubr.f32.gmra.mxu0 %v3428
    %v3568 = vpop.f32.mrf.mxu0
    %v3569 = vadd.f32 0.0, %v3568
    %v3570 = vpop.f32.mrf.mxu0
    %3571 = vmatprep.mubr.f32.mxu0 0.0
    %3572 = vmatmul.mubr.f32.gmra.mxu0 %v3431
    %v3573 = vpop.f32.mrf.mxu0
    %v3574 = vadd.f32 0.0, %v3573
    %v3575 = vpop.f32.mrf.mxu0
    %3576 = vmatprep.mubr.f32.mxu0 0.0
    %3577 = vmatmul.mubr.f32.gmra.mxu0 %v3434
    %v3578 = vpop.f32.mrf.mxu0
    %v3579 = vadd.f32 0.0, %v3578
    %v3580 = vpop.f32.mrf.mxu0
    %3581 = vmatprep.mubr.f32.mxu0 0.0
    %3582 = vmatmul.mubr.f32.gmra.mxu0 %v3437
    %v3583 = vpop.f32.mrf.mxu0
    %v3584 = vadd.f32 0.0, %v3583
    %v3585 = vpop.f32.mrf.mxu0
    %3586 = vdwg.mxu0
    %v3587 = vadd.f32 %v3355, %v3509
    %v3588 = vadd.f32 %v3356, %v3514
    %v3589 = vadd.f32 %v3357, %v3519
    %v3590 = vadd.f32 %v3358, %v3524
    %v3591 = vadd.f32 %v3359, %v3529
    %v3592 = vadd.f32 %v3360, %v3534
    %v3593 = vadd.f32 %v3361, %v3539
    %v3594 = vadd.f32 %v3362, %v3544
    %v3595 = vadd.f32 %v3363, %v3549
    %v3596 = vadd.f32 %v3364, %v3554
    %v3597 = vadd.f32 %v3365, %v3559
    %v3598 = vadd.f32 %v3366, %v3564
    %v3599 = vadd.f32 %v3367, %v3569
    %v3600 = vadd.f32 %v3368, %v3574
    %v3601 = vadd.f32 %v3369, %v3579
    %v3602 = vadd.f32 %v3370, %v3584
    %v3603 = vld [vmem:[%s2619 + $0x1] sm:$0xff]
    %v3604 = vld [vmem:[%s2619 + $0x11] sm:$0xff]
    %v3605 = vld [vmem:[%s2619 + $0x21] sm:$0xff]
    %v3606 = vld [vmem:[%s2619 + $0x31] sm:$0xff]
    %v3607 = vld [vmem:[%s2619 + $0x41] sm:$0xff]
    %v3608 = vld [vmem:[%s2619 + $0x51] sm:$0xff]
    %v3609 = vld [vmem:[%s2619 + $0x61] sm:$0xff]
    %v3610 = vld [vmem:[%s2619 + $0x71] sm:$0xff]
    %v3611 = vld [vmem:[%s2619 + $0xa1] sm:$0xff]
    %v3612 = vld [vmem:[%s2619 + $0xb1] sm:$0xff]
    %v3613 = vld [vmem:[%s2619 + $0xc1] sm:$0xff]
    %v3614 = vld [vmem:[%s2619 + $0xd1] sm:$0xff]
    %v3615 = vld [vmem:[%s2619 + $0xe1] sm:$0xff]
    %v3616 = vld [vmem:[%s2619 + $0xf1] sm:$0xff]
    %v3617 = vld [vmem:[%s2619 + $0x101] sm:$0xff]
    %v3618 = vld [vmem:[%s2619 + $0x111] sm:$0xff]
    %s3619 = scalar_lea.vmem %s3, 96
    %v3620 = vld [vmem:[%s3619] sm:$0xff]
    %v3621 = vld [vmem:[%s3619 + $0x8] sm:$0xff]
    %v3622 = vld [vmem:[%s3619 + $0x10] sm:$0xf]
    %v3624 = vsel %vm2608, %v3603, 0
    %v3627 = vsel %vm2608, %v3604, 0
    %v3630 = vsel %vm2608, %v3605, 0
    %v3633 = vsel %vm2608, %v3606, 0
    %v3636 = vsel %vm2608, %v3607, 0
    %v3639 = vsel %vm2608, %v3608, 0
    %v3642 = vsel %vm2608, %v3609, 0
    %v3645 = vsel %vm2608, %v3610, 0
    %v3648 = vsel %vm2608, %v3611, 0
    %v3651 = vsel %vm2608, %v3612, 0
    %v3654 = vsel %vm2608, %v3613, 0
    %v3657 = vsel %vm2608, %v3614, 0
    %v3660 = vsel %vm2608, %v3615, 0
    %v3663 = vsel %vm2608, %v3616, 0
    %v3666 = vsel %vm2608, %v3617, 0
    %v3669 = vsel %vm2608, %v3618, 0
    %v3672 = vsel %vm113, %v3622, 0
    %3674 = vmatprep.subr.mxu0 0.0
    %3675 = vmatpush1.msra.mxu0 0.0
    %3676 = vmatprep.subr.mxu0 0.0
    %3677 = vmatpush1.msra.mxu0 0.0
    %3678 = vmatprep.subr.mxu0 0.0
    %3679 = vmatpush1.msra.mxu0 0.0
    %3680 = vmatprep.subr.mxu0 0.0
    %3681 = vmatpush1.msra.mxu0 0.0
    %3682 = vmatprep.subr.mxu0 0.0
    %3683 = vmatpush1.msra.mxu0 0.0
    %3684 = vmatprep.subr.mxu0 0.0
    %3685 = vmatpush1.msra.mxu0 0.0
    %3686 = vmatprep.subr.mxu0 0.0
    %3687 = vmatpush1.msra.mxu0 0.0
    %3688 = vmatprep.subr.mxu0 0.0
    %3689 = vmatpush1.msra.mxu0 0.0
    %3690 = vmatprep.subr.mxu0 0.0
    %3691 = vmatpush1.msra.mxu0 0.0
    %3692 = vmatprep.subr.mxu0 0.0
    %3693 = vmatpush1.msra.mxu0 0.0
    %3694 = vmatprep.subr.mxu0 0.0
    %3695 = vmatpush1.msra.mxu0 0.0
    %3696 = vmatprep.subr.mxu0 0.0
    %3697 = vmatpush1.msra.mxu0 0.0
    %3698 = vmatprep.subr.mxu0 0.0
    %3699 = vmatpush1.msra.mxu0 0.0
    %3700 = vmatprep.subr.mxu0 0.0
    %3701 = vmatpush1.msra.mxu0 %v3672
    %3702 = vmatprep.subr.mxu0 0.0
    %3703 = vmatpush1.msra.mxu0 %v3621
    %3704 = vmatprep.subr.mxu0 0.0
    %3705 = vmatpush1.msra.mxu0 %v3620
    %3706 = vmatprep.subr.mxu0 0.0
    %3707 = vmatpush2.msra.mxu0 0.0
    %3708 = vmatprep.subr.mxu0 0.0
    %3709 = vmatpush2.msra.mxu0 0.0
    %3710 = vmatprep.subr.mxu0 0.0
    %3711 = vmatpush2.msra.mxu0 0.0
    %3712 = vmatprep.subr.mxu0 0.0
    %3713 = vmatpush2.msra.mxu0 0.0
    %3714 = vmatprep.subr.mxu0 0.0
    %3715 = vmatpush2.msra.mxu0 0.0
    %3716 = vmatprep.subr.mxu0 0.0
    %3717 = vmatpush2.msra.mxu0 0.0
    %3718 = vmatprep.subr.mxu0 0.0
    %3719 = vmatpush2.msra.mxu0 0.0
    %3720 = vmatprep.subr.mxu0 0.0
    %3721 = vmatpush2.msra.mxu0 0.0
    %3722 = vmatprep.subr.mxu0 0.0
    %3723 = vmatpush2.msra.mxu0 0.0
    %3724 = vmatprep.subr.mxu0 0.0
    %3725 = vmatpush2.msra.mxu0 0.0
    %3726 = vmatprep.subr.mxu0 0.0
    %3727 = vmatpush2.msra.mxu0 0.0
    %3728 = vmatprep.subr.mxu0 0.0
    %3729 = vmatpush2.msra.mxu0 0.0
    %3730 = vmatprep.subr.mxu0 0.0
    %3731 = vmatpush2.msra.mxu0 0.0
    %3732 = vmatprep.subr.mxu0 0.0
    %3733 = vmatpush2.msra.mxu0 0.0
    %3734 = vmatprep.subr.mxu0 0.0
    %3735 = vmatpush2.msra.mxu0 0.0
    %3736 = vmatprep.subr.mxu0 0.0
    %3737 = vmatpush2.msra.mxu0 0.0
    %3738 = vmatprep.mubr.f32.mxu0 0.0
    %3739 = vmatmul.mubr.f32.gmra.mxu0 %v3624
    %v3740 = vpop.f32.mrf.mxu0
    %v3741 = vadd.f32 0.0, %v3740
    %v3742 = vpop.f32.mrf.mxu0
    %3743 = vmatprep.mubr.f32.mxu0 0.0
    %3744 = vmatmul.mubr.f32.gmra.mxu0 %v3627
    %v3745 = vpop.f32.mrf.mxu0
    %v3746 = vadd.f32 0.0, %v3745
    %v3747 = vpop.f32.mrf.mxu0
    %3748 = vmatprep.mubr.f32.mxu0 0.0
    %3749 = vmatmul.mubr.f32.gmra.mxu0 %v3630
    %v3750 = vpop.f32.mrf.mxu0
    %v3751 = vadd.f32 0.0, %v3750
    %v3752 = vpop.f32.mrf.mxu0
    %3753 = vmatprep.mubr.f32.mxu0 0.0
    %3754 = vmatmul.mubr.f32.gmra.mxu0 %v3633
    %v3755 = vpop.f32.mrf.mxu0
    %v3756 = vadd.f32 0.0, %v3755
    %v3757 = vpop.f32.mrf.mxu0
    %3758 = vmatprep.mubr.f32.mxu0 0.0
    %3759 = vmatmul.mubr.f32.gmra.mxu0 %v3636
    %v3760 = vpop.f32.mrf.mxu0
    %v3761 = vadd.f32 0.0, %v3760
    %v3762 = vpop.f32.mrf.mxu0
    %3763 = vmatprep.mubr.f32.mxu0 0.0
    %3764 = vmatmul.mubr.f32.gmra.mxu0 %v3639
    %v3765 = vpop.f32.mrf.mxu0
    %v3766 = vadd.f32 0.0, %v3765
    %v3767 = vpop.f32.mrf.mxu0
    %3768 = vmatprep.mubr.f32.mxu0 0.0
    %3769 = vmatmul.mubr.f32.gmra.mxu0 %v3642
    %v3770 = vpop.f32.mrf.mxu0
    %v3771 = vadd.f32 0.0, %v3770
    %v3772 = vpop.f32.mrf.mxu0
    %3773 = vmatprep.mubr.f32.mxu0 0.0
    %3774 = vmatmul.mubr.f32.gmra.mxu0 %v3645
    %v3775 = vpop.f32.mrf.mxu0
    %v3776 = vadd.f32 0.0, %v3775
    %v3777 = vpop.f32.mrf.mxu0
    %3778 = vmatprep.mubr.f32.mxu0 0.0
    %3779 = vmatmul.mubr.f32.gmra.mxu0 %v3648
    %v3780 = vpop.f32.mrf.mxu0
    %v3781 = vadd.f32 0.0, %v3780
    %v3782 = vpop.f32.mrf.mxu0
    %3783 = vmatprep.mubr.f32.mxu0 0.0
    %3784 = vmatmul.mubr.f32.gmra.mxu0 %v3651
    %v3785 = vpop.f32.mrf.mxu0
    %v3786 = vadd.f32 0.0, %v3785
    %v3787 = vpop.f32.mrf.mxu0
    %3788 = vmatprep.mubr.f32.mxu0 0.0
    %3789 = vmatmul.mubr.f32.gmra.mxu0 %v3654
    %v3790 = vpop.f32.mrf.mxu0
    %v3791 = vadd.f32 0.0, %v3790
    %v3792 = vpop.f32.mrf.mxu0
    %3793 = vmatprep.mubr.f32.mxu0 0.0
    %3794 = vmatmul.mubr.f32.gmra.mxu0 %v3657
    %v3795 = vpop.f32.mrf.mxu0
    %v3796 = vadd.f32 0.0, %v3795
    %v3797 = vpop.f32.mrf.mxu0
    %3798 = vmatprep.mubr.f32.mxu0 0.0
    %3799 = vmatmul.mubr.f32.gmra.mxu0 %v3660
    %v3800 = vpop.f32.mrf.mxu0
    %v3801 = vadd.f32 0.0, %v3800
    %v3802 = vpop.f32.mrf.mxu0
    %3803 = vmatprep.mubr.f32.mxu0 0.0
    %3804 = vmatmul.mubr.f32.gmra.mxu0 %v3663
    %v3805 = vpop.f32.mrf.mxu0
    %v3806 = vadd.f32 0.0, %v3805
    %v3807 = vpop.f32.mrf.mxu0
    %3808 = vmatprep.mubr.f32.mxu0 0.0
    %3809 = vmatmul.mubr.f32.gmra.mxu0 %v3666
    %v3810 = vpop.f32.mrf.mxu0
    %v3811 = vadd.f32 0.0, %v3810
    %v3812 = vpop.f32.mrf.mxu0
    %3813 = vmatprep.mubr.f32.mxu0 0.0
    %3814 = vmatmul.mubr.f32.gmra.mxu0 %v3669
    %v3815 = vpop.f32.mrf.mxu0
    %v3816 = vadd.f32 0.0, %v3815
    %v3817 = vpop.f32.mrf.mxu0
    %3818 = vdwg.mxu0
    %v3819 = vadd.f32 %v3587, %v3741
    %v3820 = vadd.f32 %v3588, %v3746
    %v3821 = vadd.f32 %v3589, %v3751
    %v3822 = vadd.f32 %v3590, %v3756
    %v3823 = vadd.f32 %v3591, %v3761
    %v3824 = vadd.f32 %v3592, %v3766
    %v3825 = vadd.f32 %v3593, %v3771
    %v3826 = vadd.f32 %v3594, %v3776
    %v3827 = vadd.f32 %v3595, %v3781
    %v3828 = vadd.f32 %v3596, %v3786
    %v3829 = vadd.f32 %v3597, %v3791
    %v3830 = vadd.f32 %v3598, %v3796
    %v3831 = vadd.f32 %v3599, %v3801
    %v3832 = vadd.f32 %v3600, %v3806
    %v3833 = vadd.f32 %v3601, %v3811
    %v3834 = vadd.f32 %v3602, %v3816
    %v3835 = vld [vmem:[%s2619 + $0x2] sm:$0xff]
    %v3836 = vld [vmem:[%s2619 + $0x12] sm:$0xff]
    %v3837 = vld [vmem:[%s2619 + $0x22] sm:$0xff]
    %v3838 = vld [vmem:[%s2619 + $0x32] sm:$0xff]
    %v3839 = vld [vmem:[%s2619 + $0x42] sm:$0xff]
    %v3840 = vld [vmem:[%s2619 + $0x52] sm:$0xff]
    %v3841 = vld [vmem:[%s2619 + $0x62] sm:$0xff]
    %v3842 = vld [vmem:[%s2619 + $0x72] sm:$0xff]
    %v3843 = vld [vmem:[%s2619 + $0xa2] sm:$0xff]
    %v3844 = vld [vmem:[%s2619 + $0xb2] sm:$0xff]
    %v3845 = vld [vmem:[%s2619 + $0xc2] sm:$0xff]
    %v3846 = vld [vmem:[%s2619 + $0xd2] sm:$0xff]
    %v3847 = vld [vmem:[%s2619 + $0xe2] sm:$0xff]
    %v3848 = vld [vmem:[%s2619 + $0xf2] sm:$0xff]
    %v3849 = vld [vmem:[%s2619 + $0x102] sm:$0xff]
    %v3850 = vld [vmem:[%s2619 + $0x112] sm:$0xff]
    %s3851 = scalar_lea.vmem %s3, 120
    %v3852 = vld [vmem:[%s3851] sm:$0xff]
    %v3853 = vld [vmem:[%s3851 + $0x8] sm:$0xff]
    %v3854 = vld [vmem:[%s3851 + $0x10] sm:$0xf]
    %v3856 = vsel %vm2608, %v3835, 0
    %v3859 = vsel %vm2608, %v3836, 0
    %v3862 = vsel %vm2608, %v3837, 0
    %v3865 = vsel %vm2608, %v3838, 0
    %v3868 = vsel %vm2608, %v3839, 0
    %v3871 = vsel %vm2608, %v3840, 0
    %v3874 = vsel %vm2608, %v3841, 0
    %v3877 = vsel %vm2608, %v3842, 0
    %v3880 = vsel %vm2608, %v3843, 0
    %v3883 = vsel %vm2608, %v3844, 0
    %v3886 = vsel %vm2608, %v3845, 0
    %v3889 = vsel %vm2608, %v3846, 0
    %v3892 = vsel %vm2608, %v3847, 0
    %v3895 = vsel %vm2608, %v3848, 0
    %v3898 = vsel %vm2608, %v3849, 0
    %v3901 = vsel %vm2608, %v3850, 0
    %v3904 = vsel %vm113, %v3854, 0
    %3906 = vmatprep.subr.mxu0 0.0
    %3907 = vmatpush1.msra.mxu0 0.0
    %3908 = vmatprep.subr.mxu0 0.0
    %3909 = vmatpush1.msra.mxu0 0.0
    %3910 = vmatprep.subr.mxu0 0.0
    %3911 = vmatpush1.msra.mxu0 0.0
    %3912 = vmatprep.subr.mxu0 0.0
    %3913 = vmatpush1.msra.mxu0 0.0
    %3914 = vmatprep.subr.mxu0 0.0
    %3915 = vmatpush1.msra.mxu0 0.0
    %3916 = vmatprep.subr.mxu0 0.0
    %3917 = vmatpush1.msra.mxu0 0.0
    %3918 = vmatprep.subr.mxu0 0.0
    %3919 = vmatpush1.msra.mxu0 0.0
    %3920 = vmatprep.subr.mxu0 0.0
    %3921 = vmatpush1.msra.mxu0 0.0
    %3922 = vmatprep.subr.mxu0 0.0
    %3923 = vmatpush1.msra.mxu0 0.0
    %3924 = vmatprep.subr.mxu0 0.0
    %3925 = vmatpush1.msra.mxu0 0.0
    %3926 = vmatprep.subr.mxu0 0.0
    %3927 = vmatpush1.msra.mxu0 0.0
    %3928 = vmatprep.subr.mxu0 0.0
    %3929 = vmatpush1.msra.mxu0 0.0
    %3930 = vmatprep.subr.mxu0 0.0
    %3931 = vmatpush1.msra.mxu0 0.0
    %3932 = vmatprep.subr.mxu0 0.0
    %3933 = vmatpush1.msra.mxu0 %v3904
    %3934 = vmatprep.subr.mxu0 0.0
    %3935 = vmatpush1.msra.mxu0 %v3853
    %3936 = vmatprep.subr.mxu0 0.0
    %3937 = vmatpush1.msra.mxu0 %v3852
    %3938 = vmatprep.subr.mxu0 0.0
    %3939 = vmatpush2.msra.mxu0 0.0
    %3940 = vmatprep.subr.mxu0 0.0
    %3941 = vmatpush2.msra.mxu0 0.0
    %3942 = vmatprep.subr.mxu0 0.0
    %3943 = vmatpush2.msra.mxu0 0.0
    %3944 = vmatprep.subr.mxu0 0.0
    %3945 = vmatpush2.msra.mxu0 0.0
    %3946 = vmatprep.subr.mxu0 0.0
    %3947 = vmatpush2.msra.mxu0 0.0
    %3948 = vmatprep.subr.mxu0 0.0
    %3949 = vmatpush2.msra.mxu0 0.0
    %3950 = vmatprep.subr.mxu0 0.0
    %3951 = vmatpush2.msra.mxu0 0.0
    %3952 = vmatprep.subr.mxu0 0.0
    %3953 = vmatpush2.msra.mxu0 0.0
    %3954 = vmatprep.subr.mxu0 0.0
    %3955 = vmatpush2.msra.mxu0 0.0
    %3956 = vmatprep.subr.mxu0 0.0
    %3957 = vmatpush2.msra.mxu0 0.0
    %3958 = vmatprep.subr.mxu0 0.0
    %3959 = vmatpush2.msra.mxu0 0.0
    %3960 = vmatprep.subr.mxu0 0.0
    %3961 = vmatpush2.msra.mxu0 0.0
    %3962 = vmatprep.subr.mxu0 0.0
    %3963 = vmatpush2.msra.mxu0 0.0
    %3964 = vmatprep.subr.mxu0 0.0
    %3965 = vmatpush2.msra.mxu0 0.0
    %3966 = vmatprep.subr.mxu0 0.0
    %3967 = vmatpush2.msra.mxu0 0.0
    %3968 = vmatprep.subr.mxu0 0.0
    %3969 = vmatpush2.msra.mxu0 0.0
    %3970 = vmatprep.mubr.f32.mxu0 0.0
    %3971 = vmatmul.mubr.f32.gmra.mxu0 %v3856
    %v3972 = vpop.f32.mrf.mxu0
    %v3973 = vadd.f32 0.0, %v3972
    %v3974 = vpop.f32.mrf.mxu0
    %3975 = vmatprep.mubr.f32.mxu0 0.0
    %3976 = vmatmul.mubr.f32.gmra.mxu0 %v3859
    %v3977 = vpop.f32.mrf.mxu0
    %v3978 = vadd.f32 0.0, %v3977
    %v3979 = vpop.f32.mrf.mxu0
    %3980 = vmatprep.mubr.f32.mxu0 0.0
    %3981 = vmatmul.mubr.f32.gmra.mxu0 %v3862
    %v3982 = vpop.f32.mrf.mxu0
    %v3983 = vadd.f32 0.0, %v3982
    %v3984 = vpop.f32.mrf.mxu0
    %3985 = vmatprep.mubr.f32.mxu0 0.0
    %3986 = vmatmul.mubr.f32.gmra.mxu0 %v3865
    %v3987 = vpop.f32.mrf.mxu0
    %v3988 = vadd.f32 0.0, %v3987
    %v3989 = vpop.f32.mrf.mxu0
    %3990 = vmatprep.mubr.f32.mxu0 0.0
    %3991 = vmatmul.mubr.f32.gmra.mxu0 %v3868
    %v3992 = vpop.f32.mrf.mxu0
    %v3993 = vadd.f32 0.0, %v3992
    %v3994 = vpop.f32.mrf.mxu0
    %3995 = vmatprep.mubr.f32.mxu0 0.0
    %3996 = vmatmul.mubr.f32.gmra.mxu0 %v3871
    %v3997 = vpop.f32.mrf.mxu0
    %v3998 = vadd.f32 0.0, %v3997
    %v3999 = vpop.f32.mrf.mxu0
    %4000 = vmatprep.mubr.f32.mxu0 0.0
    %4001 = vmatmul.mubr.f32.gmra.mxu0 %v3874
    %v4002 = vpop.f32.mrf.mxu0
    %v4003 = vadd.f32 0.0, %v4002
    %v4004 = vpop.f32.mrf.mxu0
    %4005 = vmatprep.mubr.f32.mxu0 0.0
    %4006 = vmatmul.mubr.f32.gmra.mxu0 %v3877
    %v4007 = vpop.f32.mrf.mxu0
    %v4008 = vadd.f32 0.0, %v4007
    %v4009 = vpop.f32.mrf.mxu0
    %4010 = vmatprep.mubr.f32.mxu0 0.0
    %4011 = vmatmul.mubr.f32.gmra.mxu0 %v3880
    %v4012 = vpop.f32.mrf.mxu0
    %v4013 = vadd.f32 0.0, %v4012
    %v4014 = vpop.f32.mrf.mxu0
    %4015 = vmatprep.mubr.f32.mxu0 0.0
    %4016 = vmatmul.mubr.f32.gmra.mxu0 %v3883
    %v4017 = vpop.f32.mrf.mxu0
    %v4018 = vadd.f32 0.0, %v4017
    %v4019 = vpop.f32.mrf.mxu0
    %4020 = vmatprep.mubr.f32.mxu0 0.0
    %4021 = vmatmul.mubr.f32.gmra.mxu0 %v3886
    %v4022 = vpop.f32.mrf.mxu0
    %v4023 = vadd.f32 0.0, %v4022
    %v4024 = vpop.f32.mrf.mxu0
    %4025 = vmatprep.mubr.f32.mxu0 0.0
    %4026 = vmatmul.mubr.f32.gmra.mxu0 %v3889
    %v4027 = vpop.f32.mrf.mxu0
    %v4028 = vadd.f32 0.0, %v4027
    %v4029 = vpop.f32.mrf.mxu0
    %4030 = vmatprep.mubr.f32.mxu0 0.0
    %4031 = vmatmul.mubr.f32.gmra.mxu0 %v3892
    %v4032 = vpop.f32.mrf.mxu0
    %v4033 = vadd.f32 0.0, %v4032
    %v4034 = vpop.f32.mrf.mxu0
    %4035 = vmatprep.mubr.f32.mxu0 0.0
    %4036 = vmatmul.mubr.f32.gmra.mxu0 %v3895
    %v4037 = vpop.f32.mrf.mxu0
    %v4038 = vadd.f32 0.0, %v4037
    %v4039 = vpop.f32.mrf.mxu0
    %4040 = vmatprep.mubr.f32.mxu0 0.0
    %4041 = vmatmul.mubr.f32.gmra.mxu0 %v3898
    %v4042 = vpop.f32.mrf.mxu0
    %v4043 = vadd.f32 0.0, %v4042
    %v4044 = vpop.f32.mrf.mxu0
    %4045 = vmatprep.mubr.f32.mxu0 0.0
    %4046 = vmatmul.mubr.f32.gmra.mxu0 %v3901
    %v4047 = vpop.f32.mrf.mxu0
    %v4048 = vadd.f32 0.0, %v4047
    %v4049 = vpop.f32.mrf.mxu0
    %4050 = vdwg.mxu0
    %v4051 = vadd.f32 %v3819, %v3973
    %v4052 = vadd.f32 %v3820, %v3978
    %v4053 = vadd.f32 %v3821, %v3983
    %v4054 = vadd.f32 %v3822, %v3988
    %v4055 = vadd.f32 %v3823, %v3993
    %v4056 = vadd.f32 %v3824, %v3998
    %v4057 = vadd.f32 %v3825, %v4003
    %v4058 = vadd.f32 %v3826, %v4008
    %v4059 = vadd.f32 %v3827, %v4013
    %v4060 = vadd.f32 %v3828, %v4018
    %v4061 = vadd.f32 %v3829, %v4023
    %v4062 = vadd.f32 %v3830, %v4028
    %v4063 = vadd.f32 %v3831, %v4033
    %v4064 = vadd.f32 %v3832, %v4038
    %v4065 = vadd.f32 %v3833, %v4043
    %v4066 = vadd.f32 %v3834, %v4048
    %s4067 = scalar_lea.vmem [#allocation2], 32
    %v4068 = vld [vmem:[%s4067] sm:$0xff]
    %v4069 = vld [vmem:[%s4067 + $0x10] sm:$0xff]
    %v4070 = vld [vmem:[%s4067 + $0x20] sm:$0xff]
    %v4071 = vld [vmem:[%s4067 + $0x30] sm:$0xff]
    %v4072 = vld [vmem:[%s4067 + $0x40] sm:$0xff]
    %v4073 = vld [vmem:[%s4067 + $0x50] sm:$0xff]
    %v4074 = vld [vmem:[%s4067 + $0x60] sm:$0xff]
    %v4075 = vld [vmem:[%s4067 + $0x70] sm:$0xff]
    %v4076 = vld [vmem:[%s4067 + $0xa0] sm:$0xff]
    %v4077 = vld [vmem:[%s4067 + $0xb0] sm:$0xff]
    %v4078 = vld [vmem:[%s4067 + $0xc0] sm:$0xff]
    %v4079 = vld [vmem:[%s4067 + $0xd0] sm:$0xff]
    %v4080 = vld [vmem:[%s4067 + $0xe0] sm:$0xff]
    %v4081 = vld [vmem:[%s4067 + $0xf0] sm:$0xff]
    %v4082 = vld [vmem:[%s4067 + $0x100] sm:$0xff]
    %v4083 = vld [vmem:[%s4067 + $0x110] sm:$0xff]
    %s4084 = scalar_lea.vmem %s3, 144
    %v4085 = vld [vmem:[%s4084] sm:$0xff]
    %v4086 = vld [vmem:[%s4084 + $0x8] sm:$0xff]
    %v4087 = vld [vmem:[%s4084 + $0x10] sm:$0xf]
    %v4089 = vsel %vm2608, %v4068, 0
    %v4092 = vsel %vm2608, %v4069, 0
    %v4095 = vsel %vm2608, %v4070, 0
    %v4098 = vsel %vm2608, %v4071, 0
    %v4101 = vsel %vm2608, %v4072, 0
    %v4104 = vsel %vm2608, %v4073, 0
    %v4107 = vsel %vm2608, %v4074, 0
    %v4110 = vsel %vm2608, %v4075, 0
    %v4113 = vsel %vm2608, %v4076, 0
    %v4116 = vsel %vm2608, %v4077, 0
    %v4119 = vsel %vm2608, %v4078, 0
    %v4122 = vsel %vm2608, %v4079, 0
    %v4125 = vsel %vm2608, %v4080, 0
    %v4128 = vsel %vm2608, %v4081, 0
    %v4131 = vsel %vm2608, %v4082, 0
    %v4134 = vsel %vm2608, %v4083, 0
    %v4137 = vsel %vm113, %v4087, 0
    %4139 = vmatprep.subr.mxu0 0.0
    %4140 = vmatpush1.msra.mxu0 0.0
    %4141 = vmatprep.subr.mxu0 0.0
    %4142 = vmatpush1.msra.mxu0 0.0
    %4143 = vmatprep.subr.mxu0 0.0
    %4144 = vmatpush1.msra.mxu0 0.0
    %4145 = vmatprep.subr.mxu0 0.0
    %4146 = vmatpush1.msra.mxu0 0.0
    %4147 = vmatprep.subr.mxu0 0.0
    %4148 = vmatpush1.msra.mxu0 0.0
    %4149 = vmatprep.subr.mxu0 0.0
    %4150 = vmatpush1.msra.mxu0 0.0
    %4151 = vmatprep.subr.mxu0 0.0
    %4152 = vmatpush1.msra.mxu0 0.0
    %4153 = vmatprep.subr.mxu0 0.0
    %4154 = vmatpush1.msra.mxu0 0.0
    %4155 = vmatprep.subr.mxu0 0.0
    %4156 = vmatpush1.msra.mxu0 0.0
    %4157 = vmatprep.subr.mxu0 0.0
    %4158 = vmatpush1.msra.mxu0 0.0
    %4159 = vmatprep.subr.mxu0 0.0
    %4160 = vmatpush1.msra.mxu0 0.0
    %4161 = vmatprep.subr.mxu0 0.0
    %4162 = vmatpush1.msra.mxu0 0.0
    %4163 = vmatprep.subr.mxu0 0.0
    %4164 = vmatpush1.msra.mxu0 0.0
    %4165 = vmatprep.subr.mxu0 0.0
    %4166 = vmatpush1.msra.mxu0 %v4137
    %4167 = vmatprep.subr.mxu0 0.0
    %4168 = vmatpush1.msra.mxu0 %v4086
    %4169 = vmatprep.subr.mxu0 0.0
    %4170 = vmatpush1.msra.mxu0 %v4085
    %4171 = vmatprep.subr.mxu0 0.0
    %4172 = vmatpush2.msra.mxu0 0.0
    %4173 = vmatprep.subr.mxu0 0.0
    %4174 = vmatpush2.msra.mxu0 0.0
    %4175 = vmatprep.subr.mxu0 0.0
    %4176 = vmatpush2.msra.mxu0 0.0
    %4177 = vmatprep.subr.mxu0 0.0
    %4178 = vmatpush2.msra.mxu0 0.0
    %4179 = vmatprep.subr.mxu0 0.0
    %4180 = vmatpush2.msra.mxu0 0.0
    %4181 = vmatprep.subr.mxu0 0.0
    %4182 = vmatpush2.msra.mxu0 0.0
    %4183 = vmatprep.subr.mxu0 0.0
    %4184 = vmatpush2.msra.mxu0 0.0
    %4185 = vmatprep.subr.mxu0 0.0
    %4186 = vmatpush2.msra.mxu0 0.0
    %4187 = vmatprep.subr.mxu0 0.0
    %4188 = vmatpush2.msra.mxu0 0.0
    %4189 = vmatprep.subr.mxu0 0.0
    %4190 = vmatpush2.msra.mxu0 0.0
    %4191 = vmatprep.subr.mxu0 0.0
    %4192 = vmatpush2.msra.mxu0 0.0
    %4193 = vmatprep.subr.mxu0 0.0
    %4194 = vmatpush2.msra.mxu0 0.0
    %4195 = vmatprep.subr.mxu0 0.0
    %4196 = vmatpush2.msra.mxu0 0.0
    %4197 = vmatprep.subr.mxu0 0.0
    %4198 = vmatpush2.msra.mxu0 0.0
    %4199 = vmatprep.subr.mxu0 0.0
    %4200 = vmatpush2.msra.mxu0 0.0
    %4201 = vmatprep.subr.mxu0 0.0
    %4202 = vmatpush2.msra.mxu0 0.0
    %4203 = vmatprep.mubr.f32.mxu0 0.0
    %4204 = vmatmul.mubr.f32.gmra.mxu0 %v4089
    %v4205 = vpop.f32.mrf.mxu0
    %v4206 = vadd.f32 0.0, %v4205
    %v4207 = vpop.f32.mrf.mxu0
    %4208 = vmatprep.mubr.f32.mxu0 0.0
    %4209 = vmatmul.mubr.f32.gmra.mxu0 %v4092
    %v4210 = vpop.f32.mrf.mxu0
    %v4211 = vadd.f32 0.0, %v4210
    %v4212 = vpop.f32.mrf.mxu0
    %4213 = vmatprep.mubr.f32.mxu0 0.0
    %4214 = vmatmul.mubr.f32.gmra.mxu0 %v4095
    %v4215 = vpop.f32.mrf.mxu0
    %v4216 = vadd.f32 0.0, %v4215
    %v4217 = vpop.f32.mrf.mxu0
    %4218 = vmatprep.mubr.f32.mxu0 0.0
    %4219 = vmatmul.mubr.f32.gmra.mxu0 %v4098
    %v4220 = vpop.f32.mrf.mxu0
    %v4221 = vadd.f32 0.0, %v4220
    %v4222 = vpop.f32.mrf.mxu0
    %4223 = vmatprep.mubr.f32.mxu0 0.0
    %4224 = vmatmul.mubr.f32.gmra.mxu0 %v4101
    %v4225 = vpop.f32.mrf.mxu0
    %v4226 = vadd.f32 0.0, %v4225
    %v4227 = vpop.f32.mrf.mxu0
    %4228 = vmatprep.mubr.f32.mxu0 0.0
    %4229 = vmatmul.mubr.f32.gmra.mxu0 %v4104
    %v4230 = vpop.f32.mrf.mxu0
    %v4231 = vadd.f32 0.0, %v4230
    %v4232 = vpop.f32.mrf.mxu0
    %4233 = vmatprep.mubr.f32.mxu0 0.0
    %4234 = vmatmul.mubr.f32.gmra.mxu0 %v4107
    %v4235 = vpop.f32.mrf.mxu0
    %v4236 = vadd.f32 0.0, %v4235
    %v4237 = vpop.f32.mrf.mxu0
    %4238 = vmatprep.mubr.f32.mxu0 0.0
    %4239 = vmatmul.mubr.f32.gmra.mxu0 %v4110
    %v4240 = vpop.f32.mrf.mxu0
    %v4241 = vadd.f32 0.0, %v4240
    %v4242 = vpop.f32.mrf.mxu0
    %4243 = vmatprep.mubr.f32.mxu0 0.0
    %4244 = vmatmul.mubr.f32.gmra.mxu0 %v4113
    %v4245 = vpop.f32.mrf.mxu0
    %v4246 = vadd.f32 0.0, %v4245
    %v4247 = vpop.f32.mrf.mxu0
    %4248 = vmatprep.mubr.f32.mxu0 0.0
    %4249 = vmatmul.mubr.f32.gmra.mxu0 %v4116
    %v4250 = vpop.f32.mrf.mxu0
    %v4251 = vadd.f32 0.0, %v4250
    %v4252 = vpop.f32.mrf.mxu0
    %4253 = vmatprep.mubr.f32.mxu0 0.0
    %4254 = vmatmul.mubr.f32.gmra.mxu0 %v4119
    %v4255 = vpop.f32.mrf.mxu0
    %v4256 = vadd.f32 0.0, %v4255
    %v4257 = vpop.f32.mrf.mxu0
    %4258 = vmatprep.mubr.f32.mxu0 0.0
    %4259 = vmatmul.mubr.f32.gmra.mxu0 %v4122
    %v4260 = vpop.f32.mrf.mxu0
    %v4261 = vadd.f32 0.0, %v4260
    %v4262 = vpop.f32.mrf.mxu0
    %4263 = vmatprep.mubr.f32.mxu0 0.0
    %4264 = vmatmul.mubr.f32.gmra.mxu0 %v4125
    %v4265 = vpop.f32.mrf.mxu0
    %v4266 = vadd.f32 0.0, %v4265
    %v4267 = vpop.f32.mrf.mxu0
    %4268 = vmatprep.mubr.f32.mxu0 0.0
    %4269 = vmatmul.mubr.f32.gmra.mxu0 %v4128
    %v4270 = vpop.f32.mrf.mxu0
    %v4271 = vadd.f32 0.0, %v4270
    %v4272 = vpop.f32.mrf.mxu0
    %4273 = vmatprep.mubr.f32.mxu0 0.0
    %4274 = vmatmul.mubr.f32.gmra.mxu0 %v4131
    %v4275 = vpop.f32.mrf.mxu0
    %v4276 = vadd.f32 0.0, %v4275
    %v4277 = vpop.f32.mrf.mxu0
    %4278 = vmatprep.mubr.f32.mxu0 0.0
    %4279 = vmatmul.mubr.f32.gmra.mxu0 %v4134
    %v4280 = vpop.f32.mrf.mxu0
    %v4281 = vadd.f32 0.0, %v4280
    %v4282 = vpop.f32.mrf.mxu0
    %4283 = vdwg.mxu0
    %v4284 = vadd.f32 %v4051, %v4206
    %v4285 = vadd.f32 %v4052, %v4211
    %v4286 = vadd.f32 %v4053, %v4216
    %v4287 = vadd.f32 %v4054, %v4221
    %v4288 = vadd.f32 %v4055, %v4226
    %v4289 = vadd.f32 %v4056, %v4231
    %v4290 = vadd.f32 %v4057, %v4236
    %v4291 = vadd.f32 %v4058, %v4241
    %v4292 = vadd.f32 %v4059, %v4246
    %v4293 = vadd.f32 %v4060, %v4251
    %v4294 = vadd.f32 %v4061, %v4256
    %v4295 = vadd.f32 %v4062, %v4261
    %v4296 = vadd.f32 %v4063, %v4266
    %v4297 = vadd.f32 %v4064, %v4271
    %v4298 = vadd.f32 %v4065, %v4276
    %v4299 = vadd.f32 %v4066, %v4281
    %v4300 = vld [vmem:[%s4067 + $0x1] sm:$0xff]
    %v4301 = vld [vmem:[%s4067 + $0x11] sm:$0xff]
    %v4302 = vld [vmem:[%s4067 + $0x21] sm:$0xff]
    %v4303 = vld [vmem:[%s4067 + $0x31] sm:$0xff]
    %v4304 = vld [vmem:[%s4067 + $0x41] sm:$0xff]
    %v4305 = vld [vmem:[%s4067 + $0x51] sm:$0xff]
    %v4306 = vld [vmem:[%s4067 + $0x61] sm:$0xff]
    %v4307 = vld [vmem:[%s4067 + $0x71] sm:$0xff]
    %v4308 = vld [vmem:[%s4067 + $0xa1] sm:$0xff]
    %v4309 = vld [vmem:[%s4067 + $0xb1] sm:$0xff]
    %v4310 = vld [vmem:[%s4067 + $0xc1] sm:$0xff]
    %v4311 = vld [vmem:[%s4067 + $0xd1] sm:$0xff]
    %v4312 = vld [vmem:[%s4067 + $0xe1] sm:$0xff]
    %v4313 = vld [vmem:[%s4067 + $0xf1] sm:$0xff]
    %v4314 = vld [vmem:[%s4067 + $0x101] sm:$0xff]
    %v4315 = vld [vmem:[%s4067 + $0x111] sm:$0xff]
    %s4316 = scalar_lea.vmem %s3, 168
    %v4317 = vld [vmem:[%s4316] sm:$0xff]
    %v4318 = vld [vmem:[%s4316 + $0x8] sm:$0xff]
    %v4319 = vld [vmem:[%s4316 + $0x10] sm:$0xf]
    %v4321 = vsel %vm2608, %v4300, 0
    %v4324 = vsel %vm2608, %v4301, 0
    %v4327 = vsel %vm2608, %v4302, 0
    %v4330 = vsel %vm2608, %v4303, 0
    %v4333 = vsel %vm2608, %v4304, 0
    %v4336 = vsel %vm2608, %v4305, 0
    %v4339 = vsel %vm2608, %v4306, 0
    %v4342 = vsel %vm2608, %v4307, 0
    %v4345 = vsel %vm2608, %v4308, 0
    %v4348 = vsel %vm2608, %v4309, 0
    %v4351 = vsel %vm2608, %v4310, 0
    %v4354 = vsel %vm2608, %v4311, 0
    %v4357 = vsel %vm2608, %v4312, 0
    %v4360 = vsel %vm2608, %v4313, 0
    %v4363 = vsel %vm2608, %v4314, 0
    %v4366 = vsel %vm2608, %v4315, 0
    %v4369 = vsel %vm113, %v4319, 0
    %4371 = vmatprep.subr.mxu0 0.0
    %4372 = vmatpush1.msra.mxu0 0.0
    %4373 = vmatprep.subr.mxu0 0.0
    %4374 = vmatpush1.msra.mxu0 0.0
    %4375 = vmatprep.subr.mxu0 0.0
    %4376 = vmatpush1.msra.mxu0 0.0
    %4377 = vmatprep.subr.mxu0 0.0
    %4378 = vmatpush1.msra.mxu0 0.0
    %4379 = vmatprep.subr.mxu0 0.0
    %4380 = vmatpush1.msra.mxu0 0.0
    %4381 = vmatprep.subr.mxu0 0.0
    %4382 = vmatpush1.msra.mxu0 0.0
    %4383 = vmatprep.subr.mxu0 0.0
    %4384 = vmatpush1.msra.mxu0 0.0
    %4385 = vmatprep.subr.mxu0 0.0
    %4386 = vmatpush1.msra.mxu0 0.0
    %4387 = vmatprep.subr.mxu0 0.0
    %4388 = vmatpush1.msra.mxu0 0.0
    %4389 = vmatprep.subr.mxu0 0.0
    %4390 = vmatpush1.msra.mxu0 0.0
    %4391 = vmatprep.subr.mxu0 0.0
    %4392 = vmatpush1.msra.mxu0 0.0
    %4393 = vmatprep.subr.mxu0 0.0
    %4394 = vmatpush1.msra.mxu0 0.0
    %4395 = vmatprep.subr.mxu0 0.0
    %4396 = vmatpush1.msra.mxu0 0.0
    %4397 = vmatprep.subr.mxu0 0.0
    %4398 = vmatpush1.msra.mxu0 %v4369
    %4399 = vmatprep.subr.mxu0 0.0
    %4400 = vmatpush1.msra.mxu0 %v4318
    %4401 = vmatprep.subr.mxu0 0.0
    %4402 = vmatpush1.msra.mxu0 %v4317
    %4403 = vmatprep.subr.mxu0 0.0
    %4404 = vmatpush2.msra.mxu0 0.0
    %4405 = vmatprep.subr.mxu0 0.0
    %4406 = vmatpush2.msra.mxu0 0.0
    %4407 = vmatprep.subr.mxu0 0.0
    %4408 = vmatpush2.msra.mxu0 0.0
    %4409 = vmatprep.subr.mxu0 0.0
    %4410 = vmatpush2.msra.mxu0 0.0
    %4411 = vmatprep.subr.mxu0 0.0
    %4412 = vmatpush2.msra.mxu0 0.0
    %4413 = vmatprep.subr.mxu0 0.0
    %4414 = vmatpush2.msra.mxu0 0.0
    %4415 = vmatprep.subr.mxu0 0.0
    %4416 = vmatpush2.msra.mxu0 0.0
    %4417 = vmatprep.subr.mxu0 0.0
    %4418 = vmatpush2.msra.mxu0 0.0
    %4419 = vmatprep.subr.mxu0 0.0
    %4420 = vmatpush2.msra.mxu0 0.0
    %4421 = vmatprep.subr.mxu0 0.0
    %4422 = vmatpush2.msra.mxu0 0.0
    %4423 = vmatprep.subr.mxu0 0.0
    %4424 = vmatpush2.msra.mxu0 0.0
    %4425 = vmatprep.subr.mxu0 0.0
    %4426 = vmatpush2.msra.mxu0 0.0
    %4427 = vmatprep.subr.mxu0 0.0
    %4428 = vmatpush2.msra.mxu0 0.0
    %4429 = vmatprep.subr.mxu0 0.0
    %4430 = vmatpush2.msra.mxu0 0.0
    %4431 = vmatprep.subr.mxu0 0.0
    %4432 = vmatpush2.msra.mxu0 0.0
    %4433 = vmatprep.subr.mxu0 0.0
    %4434 = vmatpush2.msra.mxu0 0.0
    %4435 = vmatprep.mubr.f32.mxu0 0.0
    %4436 = vmatmul.mubr.f32.gmra.mxu0 %v4321
    %v4437 = vpop.f32.mrf.mxu0
    %v4438 = vadd.f32 0.0, %v4437
    %v4439 = vpop.f32.mrf.mxu0
    %4440 = vmatprep.mubr.f32.mxu0 0.0
    %4441 = vmatmul.mubr.f32.gmra.mxu0 %v4324
    %v4442 = vpop.f32.mrf.mxu0
    %v4443 = vadd.f32 0.0, %v4442
    %v4444 = vpop.f32.mrf.mxu0
    %4445 = vmatprep.mubr.f32.mxu0 0.0
    %4446 = vmatmul.mubr.f32.gmra.mxu0 %v4327
    %v4447 = vpop.f32.mrf.mxu0
    %v4448 = vadd.f32 0.0, %v4447
    %v4449 = vpop.f32.mrf.mxu0
    %4450 = vmatprep.mubr.f32.mxu0 0.0
    %4451 = vmatmul.mubr.f32.gmra.mxu0 %v4330
    %v4452 = vpop.f32.mrf.mxu0
    %v4453 = vadd.f32 0.0, %v4452
    %v4454 = vpop.f32.mrf.mxu0
    %4455 = vmatprep.mubr.f32.mxu0 0.0
    %4456 = vmatmul.mubr.f32.gmra.mxu0 %v4333
    %v4457 = vpop.f32.mrf.mxu0
    %v4458 = vadd.f32 0.0, %v4457
    %v4459 = vpop.f32.mrf.mxu0
    %4460 = vmatprep.mubr.f32.mxu0 0.0
    %4461 = vmatmul.mubr.f32.gmra.mxu0 %v4336
    %v4462 = vpop.f32.mrf.mxu0
    %v4463 = vadd.f32 0.0, %v4462
    %v4464 = vpop.f32.mrf.mxu0
    %4465 = vmatprep.mubr.f32.mxu0 0.0
    %4466 = vmatmul.mubr.f32.gmra.mxu0 %v4339
    %v4467 = vpop.f32.mrf.mxu0
    %v4468 = vadd.f32 0.0, %v4467
    %v4469 = vpop.f32.mrf.mxu0
    %4470 = vmatprep.mubr.f32.mxu0 0.0
    %4471 = vmatmul.mubr.f32.gmra.mxu0 %v4342
    %v4472 = vpop.f32.mrf.mxu0
    %v4473 = vadd.f32 0.0, %v4472
    %v4474 = vpop.f32.mrf.mxu0
    %4475 = vmatprep.mubr.f32.mxu0 0.0
    %4476 = vmatmul.mubr.f32.gmra.mxu0 %v4345
    %v4477 = vpop.f32.mrf.mxu0
    %v4478 = vadd.f32 0.0, %v4477
    %v4479 = vpop.f32.mrf.mxu0
    %4480 = vmatprep.mubr.f32.mxu0 0.0
    %4481 = vmatmul.mubr.f32.gmra.mxu0 %v4348
    %v4482 = vpop.f32.mrf.mxu0
    %v4483 = vadd.f32 0.0, %v4482
    %v4484 = vpop.f32.mrf.mxu0
    %4485 = vmatprep.mubr.f32.mxu0 0.0
    %4486 = vmatmul.mubr.f32.gmra.mxu0 %v4351
    %v4487 = vpop.f32.mrf.mxu0
    %v4488 = vadd.f32 0.0, %v4487
    %v4489 = vpop.f32.mrf.mxu0
    %4490 = vmatprep.mubr.f32.mxu0 0.0
    %4491 = vmatmul.mubr.f32.gmra.mxu0 %v4354
    %v4492 = vpop.f32.mrf.mxu0
    %v4493 = vadd.f32 0.0, %v4492
    %v4494 = vpop.f32.mrf.mxu0
    %4495 = vmatprep.mubr.f32.mxu0 0.0
    %4496 = vmatmul.mubr.f32.gmra.mxu0 %v4357
    %v4497 = vpop.f32.mrf.mxu0
    %v4498 = vadd.f32 0.0, %v4497
    %v4499 = vpop.f32.mrf.mxu0
    %4500 = vmatprep.mubr.f32.mxu0 0.0
    %4501 = vmatmul.mubr.f32.gmra.mxu0 %v4360
    %v4502 = vpop.f32.mrf.mxu0
    %v4503 = vadd.f32 0.0, %v4502
    %v4504 = vpop.f32.mrf.mxu0
    %4505 = vmatprep.mubr.f32.mxu0 0.0
    %4506 = vmatmul.mubr.f32.gmra.mxu0 %v4363
    %v4507 = vpop.f32.mrf.mxu0
    %v4508 = vadd.f32 0.0, %v4507
    %v4509 = vpop.f32.mrf.mxu0
    %4510 = vmatprep.mubr.f32.mxu0 0.0
    %4511 = vmatmul.mubr.f32.gmra.mxu0 %v4366
    %v4512 = vpop.f32.mrf.mxu0
    %v4513 = vadd.f32 0.0, %v4512
    %v4514 = vpop.f32.mrf.mxu0
    %4515 = vdwg.mxu0
    %v4516 = vadd.f32 %v4284, %v4438
    %v4517 = vadd.f32 %v4285, %v4443
    %v4518 = vadd.f32 %v4286, %v4448
    %v4519 = vadd.f32 %v4287, %v4453
    %v4520 = vadd.f32 %v4288, %v4458
    %v4521 = vadd.f32 %v4289, %v4463
    %v4522 = vadd.f32 %v4290, %v4468
    %v4523 = vadd.f32 %v4291, %v4473
    %v4524 = vadd.f32 %v4292, %v4478
    %v4525 = vadd.f32 %v4293, %v4483
    %v4526 = vadd.f32 %v4294, %v4488
    %v4527 = vadd.f32 %v4295, %v4493
    %v4528 = vadd.f32 %v4296, %v4498
    %v4529 = vadd.f32 %v4297, %v4503
    %v4530 = vadd.f32 %v4298, %v4508
    %v4531 = vadd.f32 %v4299, %v4513
    %v4532 = vld [vmem:[%s4067 + $0x2] sm:$0xff]
    %v4533 = vld [vmem:[%s4067 + $0x12] sm:$0xff]
    %v4534 = vld [vmem:[%s4067 + $0x22] sm:$0xff]
    %v4535 = vld [vmem:[%s4067 + $0x32] sm:$0xff]
    %v4536 = vld [vmem:[%s4067 + $0x42] sm:$0xff]
    %v4537 = vld [vmem:[%s4067 + $0x52] sm:$0xff]
    %v4538 = vld [vmem:[%s4067 + $0x62] sm:$0xff]
    %v4539 = vld [vmem:[%s4067 + $0x72] sm:$0xff]
    %v4540 = vld [vmem:[%s4067 + $0xa2] sm:$0xff]
    %v4541 = vld [vmem:[%s4067 + $0xb2] sm:$0xff]
    %v4542 = vld [vmem:[%s4067 + $0xc2] sm:$0xff]
    %v4543 = vld [vmem:[%s4067 + $0xd2] sm:$0xff]
    %v4544 = vld [vmem:[%s4067 + $0xe2] sm:$0xff]
    %v4545 = vld [vmem:[%s4067 + $0xf2] sm:$0xff]
    %v4546 = vld [vmem:[%s4067 + $0x102] sm:$0xff]
    %v4547 = vld [vmem:[%s4067 + $0x112] sm:$0xff]
    %s4548 = scalar_lea.vmem %s3, 192
    %v4549 = vld [vmem:[%s4548] sm:$0xff]
    %v4550 = vld [vmem:[%s4548 + $0x8] sm:$0xff]
    %v4551 = vld [vmem:[%s4548 + $0x10] sm:$0xf]
    %v4553 = vsel %vm2608, %v4532, 0
    %v4556 = vsel %vm2608, %v4533, 0
    %v4559 = vsel %vm2608, %v4534, 0
    %v4562 = vsel %vm2608, %v4535, 0
    %v4565 = vsel %vm2608, %v4536, 0
    %v4568 = vsel %vm2608, %v4537, 0
    %v4571 = vsel %vm2608, %v4538, 0
    %v4574 = vsel %vm2608, %v4539, 0
    %v4577 = vsel %vm2608, %v4540, 0
    %v4580 = vsel %vm2608, %v4541, 0
    %v4583 = vsel %vm2608, %v4542, 0
    %v4586 = vsel %vm2608, %v4543, 0
    %v4589 = vsel %vm2608, %v4544, 0
    %v4592 = vsel %vm2608, %v4545, 0
    %v4595 = vsel %vm2608, %v4546, 0
    %v4598 = vsel %vm2608, %v4547, 0
    %v4601 = vsel %vm113, %v4551, 0
    %4603 = vmatprep.subr.mxu0 0.0
    %4604 = vmatpush1.msra.mxu0 0.0
    %4605 = vmatprep.subr.mxu0 0.0
    %4606 = vmatpush1.msra.mxu0 0.0
    %4607 = vmatprep.subr.mxu0 0.0
    %4608 = vmatpush1.msra.mxu0 0.0
    %4609 = vmatprep.subr.mxu0 0.0
    %4610 = vmatpush1.msra.mxu0 0.0
    %4611 = vmatprep.subr.mxu0 0.0
    %4612 = vmatpush1.msra.mxu0 0.0
    %4613 = vmatprep.subr.mxu0 0.0
    %4614 = vmatpush1.msra.mxu0 0.0
    %4615 = vmatprep.subr.mxu0 0.0
    %4616 = vmatpush1.msra.mxu0 0.0
    %4617 = vmatprep.subr.mxu0 0.0
    %4618 = vmatpush1.msra.mxu0 0.0
    %4619 = vmatprep.subr.mxu0 0.0
    %4620 = vmatpush1.msra.mxu0 0.0
    %4621 = vmatprep.subr.mxu0 0.0
    %4622 = vmatpush1.msra.mxu0 0.0
    %4623 = vmatprep.subr.mxu0 0.0
    %4624 = vmatpush1.msra.mxu0 0.0
    %4625 = vmatprep.subr.mxu0 0.0
    %4626 = vmatpush1.msra.mxu0 0.0
    %4627 = vmatprep.subr.mxu0 0.0
    %4628 = vmatpush1.msra.mxu0 0.0
    %4629 = vmatprep.subr.mxu0 0.0
    %4630 = vmatpush1.msra.mxu0 %v4601
    %4631 = vmatprep.subr.mxu0 0.0
    %4632 = vmatpush1.msra.mxu0 %v4550
    %4633 = vmatprep.subr.mxu0 0.0
    %4634 = vmatpush1.msra.mxu0 %v4549
    %4635 = vmatprep.subr.mxu0 0.0
    %4636 = vmatpush2.msra.mxu0 0.0
    %4637 = vmatprep.subr.mxu0 0.0
    %4638 = vmatpush2.msra.mxu0 0.0
    %4639 = vmatprep.subr.mxu0 0.0
    %4640 = vmatpush2.msra.mxu0 0.0
    %4641 = vmatprep.subr.mxu0 0.0
    %4642 = vmatpush2.msra.mxu0 0.0
    %4643 = vmatprep.subr.mxu0 0.0
    %4644 = vmatpush2.msra.mxu0 0.0
    %4645 = vmatprep.subr.mxu0 0.0
    %4646 = vmatpush2.msra.mxu0 0.0
    %4647 = vmatprep.subr.mxu0 0.0
    %4648 = vmatpush2.msra.mxu0 0.0
    %4649 = vmatprep.subr.mxu0 0.0
    %4650 = vmatpush2.msra.mxu0 0.0
    %4651 = vmatprep.subr.mxu0 0.0
    %4652 = vmatpush2.msra.mxu0 0.0
    %4653 = vmatprep.subr.mxu0 0.0
    %4654 = vmatpush2.msra.mxu0 0.0
    %4655 = vmatprep.subr.mxu0 0.0
    %4656 = vmatpush2.msra.mxu0 0.0
    %4657 = vmatprep.subr.mxu0 0.0
    %4658 = vmatpush2.msra.mxu0 0.0
    %4659 = vmatprep.subr.mxu0 0.0
    %4660 = vmatpush2.msra.mxu0 0.0
    %4661 = vmatprep.subr.mxu0 0.0
    %4662 = vmatpush2.msra.mxu0 0.0
    %4663 = vmatprep.subr.mxu0 0.0
    %4664 = vmatpush2.msra.mxu0 0.0
    %4665 = vmatprep.subr.mxu0 0.0
    %4666 = vmatpush2.msra.mxu0 0.0
    %4667 = vmatprep.mubr.f32.mxu0 0.0
    %4668 = vmatmul.mubr.f32.gmra.mxu0 %v4553
    %v4669 = vpop.f32.mrf.mxu0
    %v4670 = vadd.f32 0.0, %v4669
    %v4671 = vpop.f32.mrf.mxu0
    %4672 = vmatprep.mubr.f32.mxu0 0.0
    %4673 = vmatmul.mubr.f32.gmra.mxu0 %v4556
    %v4674 = vpop.f32.mrf.mxu0
    %v4675 = vadd.f32 0.0, %v4674
    %v4676 = vpop.f32.mrf.mxu0
    %4677 = vmatprep.mubr.f32.mxu0 0.0
    %4678 = vmatmul.mubr.f32.gmra.mxu0 %v4559
    %v4679 = vpop.f32.mrf.mxu0
    %v4680 = vadd.f32 0.0, %v4679
    %v4681 = vpop.f32.mrf.mxu0
    %4682 = vmatprep.mubr.f32.mxu0 0.0
    %4683 = vmatmul.mubr.f32.gmra.mxu0 %v4562
    %v4684 = vpop.f32.mrf.mxu0
    %v4685 = vadd.f32 0.0, %v4684
    %v4686 = vpop.f32.mrf.mxu0
    %4687 = vmatprep.mubr.f32.mxu0 0.0
    %4688 = vmatmul.mubr.f32.gmra.mxu0 %v4565
    %v4689 = vpop.f32.mrf.mxu0
    %v4690 = vadd.f32 0.0, %v4689
    %v4691 = vpop.f32.mrf.mxu0
    %4692 = vmatprep.mubr.f32.mxu0 0.0
    %4693 = vmatmul.mubr.f32.gmra.mxu0 %v4568
    %v4694 = vpop.f32.mrf.mxu0
    %v4695 = vadd.f32 0.0, %v4694
    %v4696 = vpop.f32.mrf.mxu0
    %4697 = vmatprep.mubr.f32.mxu0 0.0
    %4698 = vmatmul.mubr.f32.gmra.mxu0 %v4571
    %v4699 = vpop.f32.mrf.mxu0
    %v4700 = vadd.f32 0.0, %v4699
    %v4701 = vpop.f32.mrf.mxu0
    %4702 = vmatprep.mubr.f32.mxu0 0.0
    %4703 = vmatmul.mubr.f32.gmra.mxu0 %v4574
    %v4704 = vpop.f32.mrf.mxu0
    %v4705 = vadd.f32 0.0, %v4704
    %v4706 = vpop.f32.mrf.mxu0
    %4707 = vmatprep.mubr.f32.mxu0 0.0
    %4708 = vmatmul.mubr.f32.gmra.mxu0 %v4577
    %v4709 = vpop.f32.mrf.mxu0
    %v4710 = vadd.f32 0.0, %v4709
    %v4711 = vpop.f32.mrf.mxu0
    %4712 = vmatprep.mubr.f32.mxu0 0.0
    %4713 = vmatmul.mubr.f32.gmra.mxu0 %v4580
    %v4714 = vpop.f32.mrf.mxu0
    %v4715 = vadd.f32 0.0, %v4714
    %v4716 = vpop.f32.mrf.mxu0
    %4717 = vmatprep.mubr.f32.mxu0 0.0
    %4718 = vmatmul.mubr.f32.gmra.mxu0 %v4583
    %v4719 = vpop.f32.mrf.mxu0
    %v4720 = vadd.f32 0.0, %v4719
    %v4721 = vpop.f32.mrf.mxu0
    %4722 = vmatprep.mubr.f32.mxu0 0.0
    %4723 = vmatmul.mubr.f32.gmra.mxu0 %v4586
    %v4724 = vpop.f32.mrf.mxu0
    %v4725 = vadd.f32 0.0, %v4724
    %v4726 = vpop.f32.mrf.mxu0
    %4727 = vmatprep.mubr.f32.mxu0 0.0
    %4728 = vmatmul.mubr.f32.gmra.mxu0 %v4589
    %v4729 = vpop.f32.mrf.mxu0
    %v4730 = vadd.f32 0.0, %v4729
    %v4731 = vpop.f32.mrf.mxu0
    %4732 = vmatprep.mubr.f32.mxu0 0.0
    %4733 = vmatmul.mubr.f32.gmra.mxu0 %v4592
    %v4734 = vpop.f32.mrf.mxu0
    %v4735 = vadd.f32 0.0, %v4734
    %v4736 = vpop.f32.mrf.mxu0
    %4737 = vmatprep.mubr.f32.mxu0 0.0
    %4738 = vmatmul.mubr.f32.gmra.mxu0 %v4595
    %v4739 = vpop.f32.mrf.mxu0
    %v4740 = vadd.f32 0.0, %v4739
    %v4741 = vpop.f32.mrf.mxu0
    %4742 = vmatprep.mubr.f32.mxu0 0.0
    %4743 = vmatmul.mubr.f32.gmra.mxu0 %v4598
    %v4744 = vpop.f32.mrf.mxu0
    %v4745 = vadd.f32 0.0, %v4744
    %v4746 = vpop.f32.mrf.mxu0
    %4747 = vdwg.mxu0
    %v4748 = vadd.f32 %v4516, %v4670
    %v4749 = vadd.f32 %v4517, %v4675
    %v4750 = vadd.f32 %v4518, %v4680
    %v4751 = vadd.f32 %v4519, %v4685
    %v4752 = vadd.f32 %v4520, %v4690
    %v4753 = vadd.f32 %v4521, %v4695
    %v4754 = vadd.f32 %v4522, %v4700
    %v4755 = vadd.f32 %v4523, %v4705
    %v4756 = vadd.f32 %v4524, %v4710
    %v4757 = vadd.f32 %v4525, %v4715
    %v4758 = vadd.f32 %v4526, %v4720
    %v4759 = vadd.f32 %v4527, %v4725
    %v4760 = vadd.f32 %v4528, %v4730
    %v4761 = vadd.f32 %v4529, %v4735
    %v4762 = vadd.f32 %v4530, %v4740
    %v4763 = vadd.f32 %v4531, %v4745
    %v4764 = vld [vmem:[%s8] sm:$0x1]
    %v4765 = vsel %vm64, %v4748, 0.0
    %v4766 = vsel %vm64, %v4749, 0.0
    %v4767 = vadd.f32 %v4765, %v4766
    %v4768 = vsel %vm64, %v4750, 0.0
    %v4769 = vadd.f32 %v4767, %v4768
    %v4770 = vsel %vm64, %v4751, 0.0
    %v4771 = vadd.f32 %v4769, %v4770
    %v4772 = vsel %vm64, %v4752, 0.0
    %v4773 = vadd.f32 %v4771, %v4772
    %v4774 = vsel %vm64, %v4753, 0.0
    %v4775 = vadd.f32 %v4773, %v4774
    %v4776 = vsel %vm64, %v4754, 0.0
    %v4777 = vadd.f32 %v4775, %v4776
    %v4778 = vsel %vm64, %v4755, 0.0
    %v4779 = vadd.f32 %v4777, %v4778
    %v4780 = vrot.slane %v4779, 4
    %v4781 = vadd.f32 %v4779, %v4780
    %v4782 = vrot.slane %v4781, 2
    %v4783 = vadd.f32 %v4781, %v4782
    %v4784 = vrot.slane %v4783, 1
    %v4785 = vadd.f32 %v4783, %v4784
    %v4786 = vmul.f32 %v4785, 0.015625
    %v4787 = vld [vmem:[%s5] sm:$0x1]
    %v4788 = vmul.f32 %v4786, %v4787
    %vm4789 = vcmask 483328
    %v4790 = vsel %vm4789, %v4788, 0.0
    %4791 = vadd.xlane.f32.xlu0 %v4790
    %v4792 = vpop.xlane.xlu0 %4791
    %v4793 = vld [vmem:[%s6] sm:$0x1]
    %v4794 = vadd.f32 %v4792, %v4793
    %v4795 = vmax.f32 %v4794, 0.0
    %v4796 = vld [vmem:[%s7] sm:$0x1]
    %4798 = vset.pattern.permute.xlu0 0
    %4799 = vperm.xlu0 %4798, %v4795
    %v4800 = vpop.permute.xlu0 %4799
    %v4802 = vmul.f32 %v4800, %v4796
    %v4803 = vadd.f32 %v4764, %v4802
    %v4804 = vld [vmem:[%s5 + $0x1] sm:$0x1]
    %v4805 = vmul.f32 %v4786, %v4804
    %v4806 = vsel %vm4789, %v4805, 0.0
    %4807 = vadd.xlane.f32.xlu0 %v4806
    %v4808 = vpop.xlane.xlu0 %4807
    %v4810 = vlaneseq
    %v4811 = vshrl.u32 %v4810, 7
    %v4812 = vsub.s32 0, %v4811
    %v4813 = vrot.slane %v4793, %v4812
    %4814 = vrot.lane.b32.xlu0 %v4813, 127
    %v4815 = vpop.permute.xlu0 %4814
    %v4817 = vadd.f32 %v4808, %v4815
    %v4818 = vmax.f32 %v4817, 0.0
    %v4819 = vld [vmem:[%s7 + $0x1] sm:$0x1]
    %4821 = vset.pattern.permute.xlu0 0
    %4822 = vperm.xlu0 %4821, %v4818
    %v4823 = vpop.permute.xlu0 %4822
    %v4825 = vmul.f32 %v4823, %v4819
    %v4826 = vadd.f32 %v4803, %v4825
    %v4827 = vsub.f32 0.0, %v4826
    %v4828 = vmul.f32 %v4827, 1.442695
    %v4829 = vpow.pop %v4828
    %v4830 = vadd.f32 %v4829, 1.0
    %v4831 = vrcp.pop %v4830
    %v4832 = vmul.f32 1.0, %v4831
    %v4834 = vlaneseq
    %v4835 = vshrl.u32 %v4834, 7
    %v4836 = vsub.s32 0, %v4835
    %v4837 = vrot.slane %v4832, %v4836
    %v4839 = vmul.f32 %v4748, %v4837
    %v4840 = vmul.f32 %v4749, %v4837
    %v4841 = vmul.f32 %v4750, %v4837
    %v4842 = vmul.f32 %v4751, %v4837
    %v4843 = vmul.f32 %v4752, %v4837
    %v4844 = vmul.f32 %v4753, %v4837
    %v4845 = vmul.f32 %v4754, %v4837
    %v4846 = vmul.f32 %v4755, %v4837
    %4847 = vst.msk [vmem:[#allocation3] sm:$0xff] %vm64, %v4839
    %4848 = vst.msk [vmem:[#allocation3 + $0x8] sm:$0xff] %vm64, %v4840
    %4849 = vst.msk [vmem:[#allocation3 + $0x10] sm:$0xff] %vm64, %v4841
    %4850 = vst.msk [vmem:[#allocation3 + $0x18] sm:$0xff] %vm64, %v4842
    %4851 = vst.msk [vmem:[#allocation3 + $0x20] sm:$0xff] %vm64, %v4843
    %4852 = vst.msk [vmem:[#allocation3 + $0x28] sm:$0xff] %vm64, %v4844
    %4853 = vst.msk [vmem:[#allocation3 + $0x30] sm:$0xff] %vm64, %v4845
    %4854 = vst.msk [vmem:[#allocation3 + $0x38] sm:$0xff] %vm64, %v4846
    %v4855 = vsel %vm64, %v4756, 0.0
    %v4856 = vsel %vm64, %v4757, 0.0
    %v4857 = vadd.f32 %v4855, %v4856
    %v4858 = vsel %vm64, %v4758, 0.0
    %v4859 = vadd.f32 %v4857, %v4858
    %v4860 = vsel %vm64, %v4759, 0.0
    %v4861 = vadd.f32 %v4859, %v4860
    %v4862 = vsel %vm64, %v4760, 0.0
    %v4863 = vadd.f32 %v4861, %v4862
    %v4864 = vsel %vm64, %v4761, 0.0
    %v4865 = vadd.f32 %v4863, %v4864
    %v4866 = vsel %vm64, %v4762, 0.0
    %v4867 = vadd.f32 %v4865, %v4866
    %v4868 = vsel %vm64, %v4763, 0.0
    %v4869 = vadd.f32 %v4867, %v4868
    %v4870 = vrot.slane %v4869, 4
    %v4871 = vadd.f32 %v4869, %v4870
    %v4872 = vrot.slane %v4871, 2
    %v4873 = vadd.f32 %v4871, %v4872
    %v4874 = vrot.slane %v4873, 1
    %v4875 = vadd.f32 %v4873, %v4874
    %v4876 = vmul.f32 %v4875, 0.015625
    %v4877 = vld [vmem:[%s5] sm:$0x1]
    %v4878 = vmul.f32 %v4876, %v4877
    %v4879 = vsel %vm4789, %v4878, 0.0
    %4880 = vadd.xlane.f32.xlu0 %v4879
    %v4881 = vpop.xlane.xlu0 %4880
    %v4882 = vld [vmem:[%s6] sm:$0x1]
    %v4883 = vadd.f32 %v4881, %v4882
    %v4884 = vmax.f32 %v4883, 0.0
    %v4885 = vld [vmem:[%s7] sm:$0x1]
    %4887 = vset.pattern.permute.xlu0 0
    %4888 = vperm.xlu0 %4887, %v4884
    %v4889 = vpop.permute.xlu0 %4888
    %v4891 = vmul.f32 %v4889, %v4885
    %v4892 = vadd.f32 %v4764, %v4891
    %v4893 = vld [vmem:[%s5 + $0x1] sm:$0x1]
    %v4894 = vmul.f32 %v4876, %v4893
    %v4895 = vsel %vm4789, %v4894, 0.0
    %4896 = vadd.xlane.f32.xlu0 %v4895
    %v4897 = vpop.xlane.xlu0 %4896
    %v4899 = vlaneseq
    %v4900 = vshrl.u32 %v4899, 7
    %v4901 = vsub.s32 0, %v4900
    %v4902 = vrot.slane %v4882, %v4901
    %4903 = vrot.lane.b32.xlu0 %v4902, 127
    %v4904 = vpop.permute.xlu0 %4903
    %v4906 = vadd.f32 %v4897, %v4904
    %v4907 = vmax.f32 %v4906, 0.0
    %v4908 = vld [vmem:[%s7 + $0x1] sm:$0x1]
    %4910 = vset.pattern.permute.xlu0 0
    %4911 = vperm.xlu0 %4910, %v4907
    %v4912 = vpop.permute.xlu0 %4911
    %v4914 = vmul.f32 %v4912, %v4908
    %v4915 = vadd.f32 %v4892, %v4914
    %v4916 = vsub.f32 0.0, %v4915
    %v4917 = vmul.f32 %v4916, 1.442695
    %v4918 = vpow.pop %v4917
    %v4919 = vadd.f32 %v4918, 1.0
    %v4920 = vrcp.pop %v4919
    %v4921 = vmul.f32 1.0, %v4920
    %v4923 = vlaneseq
    %v4924 = vshrl.u32 %v4923, 7
    %v4925 = vsub.s32 0, %v4924
    %v4926 = vrot.slane %v4921, %v4925
    %v4928 = vmul.f32 %v4756, %v4926
    %v4929 = vmul.f32 %v4757, %v4926
    %v4930 = vmul.f32 %v4758, %v4926
    %v4931 = vmul.f32 %v4759, %v4926
    %v4932 = vmul.f32 %v4760, %v4926
    %v4933 = vmul.f32 %v4761, %v4926
    %v4934 = vmul.f32 %v4762, %v4926
    %v4935 = vmul.f32 %v4763, %v4926
    %s4936 = scalar_lea.vmem [#allocation3], 64
    %4937 = vst.msk [vmem:[%s4936] sm:$0xff] %vm64, %v4928
    %4938 = vst.msk [vmem:[%s4936 + $0x8] sm:$0xff] %vm64, %v4929
    %4939 = vst.msk [vmem:[%s4936 + $0x10] sm:$0xff] %vm64, %v4930
    %4940 = vst.msk [vmem:[%s4936 + $0x18] sm:$0xff] %vm64, %v4931
    %4941 = vst.msk [vmem:[%s4936 + $0x20] sm:$0xff] %vm64, %v4932
    %4942 = vst.msk [vmem:[%s4936 + $0x28] sm:$0xff] %vm64, %v4933
    %4943 = vst.msk [vmem:[%s4936 + $0x30] sm:$0xff] %vm64, %v4934
    %4944 = vst.msk [vmem:[%s4936 + $0x38] sm:$0xff] %vm64, %v4935
    // Predicated region
    $region38: #{tpu_custom_call.1} parent=1 // pred_check
      _
    $region39: #{tpu_custom_call.1} parent=1 // pred_check_branch
      %4946 = sbr.rel (0) target = $region41
    $region40: #{tpu_custom_call.1} parent=1 // pred_region
      %s4948 = ssub.s32 2048, 2048
      %4949 = vsyncadd [#allocation4], %s4948
      %s4950 = sshll.u32 [#allocation3], 4
      %s4951 = int_to_ptr.vmem [resolvable:$true] %s4950
      %4956 = dma.vmem_to_hbm [thread:$0]  %s4951, 2048, %s9, [#allocation4], 128, 128, 8
    $region41: #{tpu_custom_call.1} parent=1 // pred_fallthru
      _
    // Predicated region
    $region42: #{tpu_custom_call.1} parent=1 // pred_check
      _
    $region43: #{tpu_custom_call.1} parent=1 // pred_check_branch
      %4958 = sbr.rel (0) target = $region45
    $region44: #{tpu_custom_call.1} parent=1 // pred_region
      %4959 = dma.done [#allocation4], 2048
    $region45: #{tpu_custom_call.1} parent=1 // pred_fallthru
      _
    %4960 = vsyncpa [#allocation4], 1

</llo_original>
